<compile_context>
chip_gen: v5e
topology: v5e:2x2
jax: 0.10.0
libtpu: 0.0.40
codegen_flags: <defaults>
</compile_context>

<pallas_src>
import functools

import jax
import jax.numpy as jnp
from jax.experimental import pallas as pl
from jax.experimental.pallas import tpu as pltpu


def _tokenizer_kernel(dist_dtype,
                      x_ref, wpre_t_ref, bpre_ref, wd_ref, eadj_ref,
                      embcat_ref, bpost_ref,
                      z_ref, zq_ref, rec_ref, tok_ref,
                      min_sc, arg_sc, zqrec_sc):
    """One (batch, pixel-tile, vocab-chunk) grid step, channel-major layout."""
    f32 = jnp.float32
    v = pl.program_id(2)
    n_v = pl.num_programs(2)

    x = x_ref[0]                                            # (C, T) pixel tile

    @pl.when(v == 0)
    def _init():
        min_sc[...] = jnp.full_like(min_sc, jnp.inf)
        arg_sc[...] = jnp.zeros_like(arg_sc)
        zqrec_sc[...] = jnp.zeros_like(zqrec_sc)

    # Distance scores for this vocab chunk (pre_quant_conv folded in):
    #   score[v, p] = ||e_v||^2 - 2<b_pre, e_v> - 2 (emb w_pre^T x)[v, p]
    # (||z||^2 dropped: argmin-equivalent in exact arithmetic.)
    wd = wd_ref[...].astype(dist_dtype)                     # (TV, C)
    xd = x.astype(dist_dtype)
    score = eadj_ref[...] + jnp.dot(wd, xd, preferred_element_type=f32)  # (TV, T)

    tv = score.shape[0]
    iota_v = jax.lax.broadcasted_iota(jnp.int32, score.shape, 0)
    chunk_min = jnp.min(score, axis=0, keepdims=True)                    # (1, T)
    chunk_arg = jnp.min(jnp.where(score == chunk_min, iota_v, tv),
                        axis=0, keepdims=True)                           # first match
    one_hot = (iota_v == chunk_arg).astype(f32)                          # (TV, T)
    # Fused gather: [emb ; emb @ w_post]^T @ one_hot  ->  [z_q ; rec - b_post]
    chunk_zqrec = jnp.dot(embcat_ref[...], one_hot,
                          preferred_element_type=f32)                    # (E+C, T)

    better = chunk_min < min_sc[...]        # strict '<': earlier chunk keeps ties
    min_sc[...] = jnp.where(better, chunk_min, min_sc[...])
    arg_sc[...] = jnp.where(better, chunk_arg + v * tv, arg_sc[...])
    zqrec_sc[...] = jnp.where(better, chunk_zqrec, zqrec_sc[...])

    @pl.when(v == n_v - 1)
    def _finalize():
        e_dim = zq_ref.shape[1]
        # z output (1x1 conv == matmul + bias), independent of the vocab axis
        z = jnp.dot(wpre_t_ref[...], x, preferred_element_type=f32) + bpre_ref[...]
        z_ref[0] = z.astype(z_ref.dtype)
        zq_ref[0] = zqrec_sc[:e_dim, :].astype(zq_ref.dtype)
        rec_ref[0] = (zqrec_sc[e_dim:, :] + bpost_ref[...]).astype(rec_ref.dtype)
        tok_ref[0] = arg_sc[...]


def _pick_tile(n, cap, quantum=128):
    """Largest divisor of n that is a multiple of `quantum` and <= cap.

    Falls back to the full extent n (always a legal block).  Bigger tiles =>
    fewer grid steps and lane-dense DMA; the batch axis usually supplies the
    >=2 parallel steps a v7x megacore wants.
    """
    best = None
    t = quantum
    limit = min(n, cap)
    while t <= limit:
        if n % t == 0:
            best = t
        t += quantum
    return best if best is not None else n


def tokenizer_forward(x_nchw, params, *, tile_hw=None, tile_v=None,
                      dist_dtype=jnp.float32):
    """Tokenizer.forward.  Returns (z, z_quantized, reconstructions, tokens)."""
    f32 = jnp.float32
    hp = jax.lax.Precision.HIGHEST

    w_pre = params["w_pre"].astype(f32)     # (C, E)
    b_pre = params["b_pre"].astype(f32)     # (1, E)
    emb = params["emb"].astype(f32)         # (V, E)
    w_post = params["w_post"].astype(f32)   # (E, C)
    b_post = params["b_post"].astype(f32)   # (1, C)

    B, C, H, W = x_nchw.shape
    E = w_pre.shape[1]
    V = emb.shape[0]
    HW = H * W

    if tile_hw is None:
        tile_hw = _pick_tile(HW, cap=512)
    if tile_v is None:
        tile_v = _pick_tile(V, cap=1024)
    assert HW % tile_hw == 0 and V % tile_v == 0
    n_t = HW // tile_hw
    n_v = V // tile_v

    # ---- one-time precompute, hoisted out of the kernel --------------------
    w_pre_t = w_pre.T                                              # (E, C)
    b_pre_c = b_pre.reshape(E, 1)                                  # (E, 1)
    wd_vc = -2.0 * jnp.dot(emb, w_pre.T, precision=hp)             # (V, C)
    e_adj = (jnp.sum(emb * emb, axis=1)
             - 2.0 * jnp.dot(emb, b_pre.reshape(E), precision=hp)
             ).reshape(V, 1)                                       # (V, 1)
    emb_cat_t = jnp.concatenate(
        [emb, jnp.dot(emb, w_post, precision=hp)], axis=1).T       # (E+C, V)
    b_post_c = b_post.reshape(C, 1)                                # (C, 1)

    x_cm = x_nchw.reshape(B, C, HW).astype(f32)                    # free reshape

    # Rough per-step VMEM footprint: streamed operands (x2 buffers),
    # single-buffered constants, outputs (x2), scratch, score/one-hot temps.
    vmem_est = 4 * (2 * C * tile_hw
                    + (E * C + E + C)
                    + 2 * tile_v * (C + 1 + E + C)
                    + 2 * tile_hw * (2 * E + C + 1)
                    + tile_hw * (2 + E + C)
                    + 3 * tile_v * tile_hw)
    vmem_limit = int(min(96 * 2 ** 20, max(32 * 2 ** 20, 1.5 * vmem_est)))

    out_shape = (
        jax.ShapeDtypeStruct((B, E, HW), f32),         # z
        jax.ShapeDtypeStruct((B, E, HW), f32),         # z_quantized
        jax.ShapeDtypeStruct((B, C, HW), f32),         # reconstructions
        jax.ShapeDtypeStruct((B, 1, HW), jnp.int32),   # tokens
    )
    out_specs = [
        pl.BlockSpec((1, E, tile_hw), lambda b, t, v: (b, 0, t)),
        pl.BlockSpec((1, E, tile_hw), lambda b, t, v: (b, 0, t)),
        pl.BlockSpec((1, C, tile_hw), lambda b, t, v: (b, 0, t)),
        pl.BlockSpec((1, 1, tile_hw), lambda b, t, v: (b, 0, t)),
    ]
    scratch = [
        pltpu.VMEM((1, tile_hw), f32),             # running min distance
        pltpu.VMEM((1, tile_hw), jnp.int32),       # running argmin (token)
        pltpu.VMEM((E + C, tile_hw), f32),         # running [z_q ; rec - b_post]
    ]

    def build(single_buffer_consts):
        def const_spec(shape):
            zeros = (0,) * len(shape)
            idx = lambda b, t, v: zeros
            if single_buffer_consts:
                # constant block index -> one VMEM buffer is enough
                return pl.BlockSpec(shape, idx, pipeline_mode=pl.Buffered(1))
            return pl.BlockSpec(shape, idx)

        in_specs = [
            pl.BlockSpec((1, C, tile_hw), lambda b, t, v: (b, 0, t)),  # x tile
            const_spec((E, C)),                                        # w_pre^T
            const_spec((E, 1)),                                        # b_pre
            pl.BlockSpec((tile_v, C), lambda b, t, v: (v, 0)),         # -2 emb w_pre^T
            pl.BlockSpec((tile_v, 1), lambda b, t, v: (v, 0)),         # ||e||^2 - 2<b_pre,e>
            pl.BlockSpec((E + C, tile_v), lambda b, t, v: (0, v)),     # [emb ; emb w_post]^T
            const_spec((C, 1)),                                        # b_post
        ]
        return pl.pallas_call(
            functools.partial(_tokenizer_kernel, dist_dtype),
            out_shape=out_shape,
            grid_spec=pltpu.PrefetchScalarGridSpec(
                num_scalar_prefetch=0,
                grid=(B, n_t, n_v),
                in_specs=in_specs,
                out_specs=out_specs,
                scratch_shapes=scratch,
            ),
            compiler_params=pltpu.CompilerParams(
                dimension_semantics=("parallel", "parallel", "arbitrary"),
                vmem_limit_bytes=vmem_limit,
            ),
        )

    args = (x_cm, w_pre_t, b_pre_c, wd_vc, e_adj, emb_cat_t, b_post_c)
    try:
        z_cm, zq_cm, rec_cm, tok_cm = build(True)(*args)
    except Exception:  # fallback if this jax build rejects Buffered(1) specs
        z_cm, zq_cm, rec_cm, tok_cm = build(False)(*args)

    # channel-major -> NCHW is a pure reshape: no transpose, no extra HBM pass
    z = z_cm.reshape(B, E, H, W)
    z_q = zq_cm.reshape(B, E, H, W)
    rec = rec_cm.reshape(B, C, H, W)
    tokens = tok_cm.reshape(B, HW)
    return z, z_q, rec, tokens


def tokenizer_forward_ref(x_nchw, params):
    """Pure-JAX reference mirroring the PyTorch forward (full distance)."""
    f32 = jnp.float32
    hp = jax.lax.Precision.HIGHEST
    w_pre, b_pre = params["w_pre"].astype(f32), params["b_pre"].astype(f32)
    emb = params["emb"].astype(f32)
    w_post, b_post = params["w_post"].astype(f32), params["b_post"].astype(f32)
    B, C, H, W = x_nchw.shape
    E = w_pre.shape[1]
    x_flat = jnp.transpose(x_nchw, (0, 2, 3, 1)).reshape(-1, C).astype(f32)
    z = jnp.dot(x_flat, w_pre, precision=hp) + b_pre
    dist = (jnp.sum(z ** 2, axis=1, keepdims=True)
            + jnp.sum(emb ** 2, axis=1)[None, :]
            - 2.0 * jnp.dot(z, emb.T, precision=hp))
    tokens = jnp.argmin(dist, axis=-1).astype(jnp.int32)
    z_q = emb[tokens]
    rec = jnp.dot(z_q, w_post, precision=hp) + b_post
    z_o = jnp.transpose(z.reshape(B, H, W, E), (0, 3, 1, 2))
    zq_o = jnp.transpose(z_q.reshape(B, H, W, E), (0, 3, 1, 2))
    rec_o = jnp.transpose(rec.reshape(B, H, W, C), (0, 3, 1, 2))
    return z_o, zq_o, rec_o, tokens.reshape(B, H * W), dist


def init_params(key, *, z_channels, embed_dim, vocab_size):
    k1, k2, k3, k4, k5 = jax.random.split(key, 5)
    w_pre = jax.random.normal(k1, (z_channels, embed_dim), jnp.float32) * 0.1
    b_pre = jax.random.normal(k2, (1, embed_dim), jnp.float32) * 0.01
    # nn.Embedding(vocab, embed).weight.uniform_(-1/vocab, 1/vocab)
    emb = jax.random.uniform(k3, (vocab_size, embed_dim), jnp.float32,
                             minval=-1.0 / vocab_size, maxval=1.0 / vocab_size)
    w_post = jax.random.normal(k4, (embed_dim, z_channels), jnp.float32) * 0.1
    b_post = jax.random.normal(k5, (1, z_channels), jnp.float32) * 0.01
    return {"w_pre": w_pre, "b_pre": b_pre, "emb": emb,
            "w_post": w_post, "b_post": b_post}


if __name__ == "__main__":
    B, C, H, W = 2, 4, 16, 16     # z_channels = 4 (Encoder/Decoder modeled as identity)
    embed_dim, vocab_size = 32, 256

    key = jax.random.PRNGKey(0)
    kx, kp = jax.random.split(key)
    x = jax.random.uniform(kx, (B, C, H, W), jnp.float32)      # inputs in [0, 1]
    params = init_params(kp, z_channels=C, embed_dim=embed_dim, vocab_size=vocab_size)

    # tile_hw=128 / tile_v=128 exercises pixel tiling AND the vocab-chunked
    # running-argmin path (grid = (2, 2, 2)); defaults pick the largest tiles.
    z, z_q, rec, tokens = jax.block_until_ready(
        tokenizer_forward(x, params, tile_hw=128, tile_v=128))

    # ---- correctness checks against a pure-JAX reference -------------------
    z_r, zq_r, rec_r, tok_r, dist_r = tokenizer_forward_ref(x, params)
    assert z.shape == (B, embed_dim, H, W) and z_q.shape == (B, embed_dim, H, W)
    assert rec.shape == (B, C, H, W) and tokens.shape == (B, H * W)
    assert tokens.dtype == jnp.int32
    # tolerance covers the MXU's f32 pass decomposition of the tiny C-dim matmul
    assert jnp.allclose(z, z_r, atol=2e-3, rtol=1e-3)

    # Tokens: exact match, or the mismatch is a floating-point near-tie in the
    # full reference distance (dropping ||z||^2 / folding the conv is
    # argmin-equivalent in exact arithmetic).
    tok_k = tokens.reshape(-1)
    tok_rf = tok_r.reshape(-1)
    mismatch = tok_k != tok_rf
    if bool(jnp.any(mismatch)):
        d_k = jnp.take_along_axis(dist_r, tok_k[:, None], axis=1)[:, 0]
        d_r = jnp.take_along_axis(dist_r, tok_rf[:, None], axis=1)[:, 0]
        ok = jnp.where(mismatch, jnp.abs(d_k - d_r) <= 1e-5, True)
        assert bool(jnp.all(ok)), "token mismatch beyond numerical tie tolerance"

    # z_q / reconstructions checked against an exact lookup for the kernel's tokens
    hp = jax.lax.Precision.HIGHEST
    zq_from_tok = params["emb"][tok_k]
    rec_from_tok = jnp.dot(zq_from_tok, params["w_post"], precision=hp) + params["b_post"]
    zq_chk = jnp.transpose(zq_from_tok.reshape(B, H, W, embed_dim), (0, 3, 1, 2))
    rec_chk = jnp.transpose(rec_from_tok.reshape(B, H, W, C), (0, 3, 1, 2))
    assert jnp.allclose(z_q, zq_chk, atol=1e-4)
    assert jnp.allclose(rec, rec_chk, atol=1e-4)

    print("KERNEL_OK")
</pallas_src>

<mosaic_0001>
module attributes {stable_mosaic.version = 11 : i64} {
  func.func @_tokenizer_kernel(%arg0: i32, %arg1: i32, %arg2: i32, %arg3: memref<1x4x128xf32, #tpu.memory_space<vmem>>, %arg4: memref<32x4xf32, #tpu.memory_space<vmem>>, %arg5: memref<32x1xf32, #tpu.memory_space<vmem>>, %arg6: memref<128x4xf32, #tpu.memory_space<vmem>>, %arg7: memref<128x1xf32, #tpu.memory_space<vmem>>, %arg8: memref<36x128xf32, #tpu.memory_space<vmem>>, %arg9: memref<4x1xf32, #tpu.memory_space<vmem>>, %arg10: memref<1x32x128xf32, #tpu.memory_space<vmem>>, %arg11: memref<1x32x128xf32, #tpu.memory_space<vmem>>, %arg12: memref<1x4x128xf32, #tpu.memory_space<vmem>>, %arg13: memref<1x1x128xi32, #tpu.memory_space<vmem>>, %arg14: memref<1x128xf32, #tpu.memory_space<vmem>>, %arg15: memref<1x128xi32, #tpu.memory_space<vmem>>, %arg16: memref<36x128xf32, #tpu.memory_space<vmem>>) attributes {dimension_semantics = [#tpu.dimension_semantics<parallel>, #tpu.dimension_semantics<parallel>, #tpu.dimension_semantics<arbitrary>], iteration_bounds = array<i64: 2, 2, 2>, scalar_prefetch = 0 : i64, scratch_operands = 3 : i64, tpu.core_type = #tpu.core_type<tc>, window_params = [{transform_indices = @transform_0, window_bounds = array<i64: 1, 4, 128>}, {pipeline_mode = #tpu.pipeline_mode<synchronous>, transform_indices = @transform_1, window_bounds = array<i64: 32, 4>}, {pipeline_mode = #tpu.pipeline_mode<synchronous>, transform_indices = @transform_2, window_bounds = array<i64: 32, 1>}, {transform_indices = @transform_3, window_bounds = array<i64: 128, 4>}, {transform_indices = @transform_4, window_bounds = array<i64: 128, 1>}, {transform_indices = @transform_5, window_bounds = array<i64: 36, 128>}, {pipeline_mode = #tpu.pipeline_mode<synchronous>, transform_indices = @transform_6, window_bounds = array<i64: 4, 1>}, {transform_indices = @transform_7, window_bounds = array<i64: 1, 32, 128>}, {transform_indices = @transform_8, window_bounds = array<i64: 1, 32, 128>}, {transform_indices = @transform_9, window_bounds = array<i64: 1, 4, 128>}, {transform_indices = @transform_10, window_bounds = array<i64: 1, 1, 128>}]} {
    %c0 = arith.constant 0 : index
    %c0_0 = arith.constant 0 : index
    %c0_1 = arith.constant 0 : index
    %0 = vector.load %arg3[%c0, %c0_0, %c0_1] : memref<1x4x128xf32, #tpu.memory_space<vmem>>, vector<1x4x128xf32>
    %1 = vector.shape_cast %0 : vector<1x4x128xf32> to vector<4x128xf32>
    %c0_i32 = arith.constant 0 : i32
    %2 = arith.cmpi eq, %arg2, %c0_i32 : i32
    %3 = arith.extui %2 : i1 to i32
    %c0_i32_2 = arith.constant 0 : i32
    %4 = arith.cmpi ne, %3, %c0_i32_2 : i32
    scf.if %4 {
      %cst_28 = arith.constant 0x7F800000 : f32
      %44 = vector.broadcast %cst_28 : f32 to vector<1x128xf32>
      %c0_29 = arith.constant 0 : index
      %c0_30 = arith.constant 0 : index
      %45 = vector.load %arg14[%c0_29, %c0_30] : memref<1x128xf32, #tpu.memory_space<vmem>>, vector<1x128xf32>
      tpu.vector_store %arg14[%c0_29, %c0_30], %44 {strides = array<i32>} : memref<1x128xf32, #tpu.memory_space<vmem>>, vector<1x128xf32>,
      %c0_i32_31 = arith.constant 0 : i32
      %46 = vector.broadcast %c0_i32_31 : i32 to vector<1x128xi32>
      %c0_32 = arith.constant 0 : index
      %c0_33 = arith.constant 0 : index
      %47 = vector.load %arg15[%c0_32, %c0_33] : memref<1x128xi32, #tpu.memory_space<vmem>>, vector<1x128xi32>
      tpu.vector_store %arg15[%c0_32, %c0_33], %46 {strides = array<i32>} : memref<1x128xi32, #tpu.memory_space<vmem>>, vector<1x128xi32>,
      %cst_34 = arith.constant 0.000000e+00 : f32
      %48 = vector.broadcast %cst_34 : f32 to vector<36x128xf32>
      %c0_35 = arith.constant 0 : index
      %c0_36 = arith.constant 0 : index
      %49 = vector.load %arg16[%c0_35, %c0_36] : memref<36x128xf32, #tpu.memory_space<vmem>>, vector<36x128xf32>
      tpu.vector_store %arg16[%c0_35, %c0_36], %48 {strides = array<i32>} : memref<36x128xf32, #tpu.memory_space<vmem>>, vector<36x128xf32>,
    } else {
    }
    %c0_3 = arith.constant 0 : index
    %c0_4 = arith.constant 0 : index
    %5 = vector.load %arg6[%c0_3, %c0_4] : memref<128x4xf32, #tpu.memory_space<vmem>>, vector<128x4xf32>
    %c0_5 = arith.constant 0 : index
    %c0_6 = arith.constant 0 : index
    %6 = vector.load %arg7[%c0_5, %c0_6] : memref<128x1xf32, #tpu.memory_space<vmem>>, vector<128x1xf32>
    %cst = arith.constant dense<0.000000e+00> : vector<128x128xf32>
    %7 = tpu.matmul %5, %1, %cst {dimension_numbers = #tpu.dot_dimension_numbers<[1], [0], [0], [1], [0, 0, 1, 1], [], []>} : vector<128x4xf32>, vector<4x128xf32>, vector<128x128xf32> -> vector<128x128xf32>
    %8 = vector.broadcast %6 : vector<128x1xf32> to vector<128x128xf32>
    %9 = arith.addf %8, %7 : vector<128x128xf32>
    %10 = tpu.iota {dimensions = array<i32: 0>} : vector<128x128xi32>
    %cst_7 = arith.constant dense<0x7F800000> : vector<128xf32>
    %11 = vector.multi_reduction <minimumf>, %9, %cst_7 [0] : vector<128x128xf32> to vector<128xf32>
    %12 = vector.shape_cast %11 : vector<128xf32> to vector<1x128xf32>
    %13 = vector.broadcast %12 : vector<1x128xf32> to vector<128x128xf32>
    %14 = arith.cmpf oeq, %9, %13 : vector<128x128xf32>
    %c128_i32 = arith.constant 128 : i32
    %15 = vector.broadcast %c128_i32 : i32 to vector<128x128xi32>
    %16 = arith.select %14, %10, %15 : vector<128x128xi1>, vector<128x128xi32>
    %cst_8 = arith.constant dense<2147483647> : vector<128xi32>
    %17 = vector.multi_reduction <minsi>, %16, %cst_8 [0] : vector<128x128xi32> to vector<128xi32>
    %18 = vector.shape_cast %17 : vector<128xi32> to vector<1x128xi32>
    %19 = vector.broadcast %18 : vector<1x128xi32> to vector<128x128xi32>
    %20 = arith.cmpi eq, %10, %19 : vector<128x128xi32>
    %21 = arith.extui %20 : vector<128x128xi1> to vector<128x128xi32>
    %22 = arith.sitofp %21 : vector<128x128xi32> to vector<128x128xf32>
    %c0_9 = arith.constant 0 : index
    %c0_10 = arith.constant 0 : index
    %23 = vector.load %arg8[%c0_9, %c0_10] : memref<36x128xf32, #tpu.memory_space<vmem>>, vector<36x128xf32>
    %cst_11 = arith.constant dense<0.000000e+00> : vector<36x128xf32>
    %24 = tpu.matmul %23, %22, %cst_11 {dimension_numbers = #tpu.dot_dimension_numbers<[1], [0], [0], [1], [0, 0, 1, 1], [], []>} : vector<36x128xf32>, vector<128x128xf32>, vector<36x128xf32> -> vector<36x128xf32>
    %c0_12 = arith.constant 0 : index
    %c0_13 = arith.constant 0 : index
    %25 = vector.load %arg14[%c0_12, %c0_13] : memref<1x128xf32, #tpu.memory_space<vmem>>, vector<1x128xf32>
    %26 = arith.cmpf olt, %12, %25 : vector<1x128xf32>
    %c0_14 = arith.constant 0 : index
    %c0_15 = arith.constant 0 : index
    %27 = vector.load %arg14[%c0_14, %c0_15] : memref<1x128xf32, #tpu.memory_space<vmem>>, vector<1x128xf32>
    %28 = arith.select %26, %12, %27 : vector<1x128xi1>, vector<1x128xf32>
    %c0_16 = arith.constant 0 : index
    %c0_17 = arith.constant 0 : index
    %29 = vector.load %arg14[%c0_16, %c0_17] : memref<1x128xf32, #tpu.memory_space<vmem>>, vector<1x128xf32>
    tpu.vector_store %arg14[%c0_16, %c0_17], %28 {strides = array<i32>} : memref<1x128xf32, #tpu.memory_space<vmem>>, vector<1x128xf32>,
    %c128_i32_18 = arith.constant 128 : i32
    %30 = arith.muli %arg2, %c128_i32_18 : i32
    %31 = vector.broadcast %30 : i32 to vector<1x128xi32>
    %32 = arith.addi %18, %31 : vector<1x128xi32>
    %c0_19 = arith.constant 0 : index
    %c0_20 = arith.constant 0 : index
    %33 = vector.load %arg15[%c0_19, %c0_20] : memref<1x128xi32, #tpu.memory_space<vmem>>, vector<1x128xi32>
    %34 = arith.select %26, %32, %33 : vector<1x128xi1>, vector<1x128xi32>
    %c0_21 = arith.constant 0 : index
    %c0_22 = arith.constant 0 : index
    %35 = vector.load %arg15[%c0_21, %c0_22] : memref<1x128xi32, #tpu.memory_space<vmem>>, vector<1x128xi32>
    tpu.vector_store %arg15[%c0_21, %c0_22], %34 {strides = array<i32>} : memref<1x128xi32, #tpu.memory_space<vmem>>, vector<1x128xi32>,
    %c0_23 = arith.constant 0 : index
    %c0_24 = arith.constant 0 : index
    %36 = vector.load %arg16[%c0_23, %c0_24] : memref<36x128xf32, #tpu.memory_space<vmem>>, vector<36x128xf32>
    %37 = vector.shape_cast %26 : vector<1x128xi1> to vector<1x128xi1>
    %38 = vector.broadcast %37 : vector<1x128xi1> to vector<36x128xi1>
    %39 = arith.select %38, %24, %36 : vector<36x128xi1>, vector<36x128xf32>
    %c0_25 = arith.constant 0 : index
    %c0_26 = arith.constant 0 : index
    %40 = vector.load %arg16[%c0_25, %c0_26] : memref<36x128xf32, #tpu.memory_space<vmem>>, vector<36x128xf32>
    tpu.vector_store %arg16[%c0_25, %c0_26], %39 {strides = array<i32>} : memref<36x128xf32, #tpu.memory_space<vmem>>, vector<36x128xf32>,
    %c1_i32 = arith.constant 1 : i32
    %41 = arith.cmpi eq, %arg2, %c1_i32 : i32
    %42 = arith.extui %41 : i1 to i32
    %c0_i32_27 = arith.constant 0 : i32
    %43 = arith.cmpi ne, %42, %c0_i32_27 : i32
    scf.if %43 {
      %c0_28 = arith.constant 0 : index
      %c0_29 = arith.constant 0 : index
      %44 = vector.load %arg4[%c0_28, %c0_29] : memref<32x4xf32, #tpu.memory_space<vmem>>, vector<32x4xf32>
      %cst_30 = arith.constant dense<0.000000e+00> : vector<32x128xf32>
      %45 = tpu.matmul %44, %1, %cst_30 {dimension_numbers = #tpu.dot_dimension_numbers<[1], [0], [0], [1], [0, 0, 1, 1], [], []>} : vector<32x4xf32>, vector<4x128xf32>, vector<32x128xf32> -> vector<32x128xf32>
      %c0_31 = arith.constant 0 : index
      %c0_32 = arith.constant 0 : index
      %46 = vector.load %arg5[%c0_31, %c0_32] : memref<32x1xf32, #tpu.memory_space<vmem>>, vector<32x1xf32>
      %47 = vector.broadcast %46 : vector<32x1xf32> to vector<32x128xf32>
      %48 = arith.addf %45, %47 : vector<32x128xf32>
      %c0_33 = arith.constant 0 : index
      %c0_34 = arith.constant 0 : index
      %c0_35 = arith.constant 0 : index
      %49 = vector.load %arg10[%c0_33, %c0_34, %c0_35] : memref<1x32x128xf32, #tpu.memory_space<vmem>>, vector<1x32x128xf32>
      %50 = vector.shape_cast %49 : vector<1x32x128xf32> to vector<32x128xf32>
      %51 = vector.shape_cast %48 : vector<32x128xf32> to vector<1x32x128xf32>
      tpu.vector_store %arg10[%c0_33, %c0_34, %c0_35], %51 {strides = array<i32>} : memref<1x32x128xf32, #tpu.memory_space<vmem>>, vector<1x32x128xf32>,
      %c0_36 = arith.constant 0 : index
      %c0_37 = arith.constant 0 : index
      %52 = vector.load %arg16[%c0_36, %c0_37] : memref<36x128xf32, #tpu.memory_space<vmem>>, vector<32x128xf32>
      %c0_38 = arith.constant 0 : index
      %c0_39 = arith.constant 0 : index
      %c0_40 = arith.constant 0 : index
      %53 = vector.load %arg11[%c0_38, %c0_39, %c0_40] : memref<1x32x128xf32, #tpu.memory_space<vmem>>, vector<1x32x128xf32>
      %54 = vector.shape_cast %53 : vector<1x32x128xf32> to vector<32x128xf32>
      %55 = vector.shape_cast %52 : vector<32x128xf32> to vector<1x32x128xf32>
      tpu.vector_store %arg11[%c0_38, %c0_39, %c0_40], %55 {strides = array<i32>} : memref<1x32x128xf32, #tpu.memory_space<vmem>>, vector<1x32x128xf32>,
      %c32 = arith.constant 32 : index
      %c0_41 = arith.constant 0 : index
      %56 = vector.load %arg16[%c32, %c0_41] : memref<36x128xf32, #tpu.memory_space<vmem>>, vector<4x128xf32>
      %c0_42 = arith.constant 0 : index
      %c0_43 = arith.constant 0 : index
      %57 = vector.load %arg9[%c0_42, %c0_43] : memref<4x1xf32, #tpu.memory_space<vmem>>, vector<4x1xf32>
      %58 = vector.broadcast %57 : vector<4x1xf32> to vector<4x128xf32>
      %59 = arith.addf %56, %58 : vector<4x128xf32>
      %c0_44 = arith.constant 0 : index
      %c0_45 = arith.constant 0 : index
      %c0_46 = arith.constant 0 : index
      %60 = vector.load %arg12[%c0_44, %c0_45, %c0_46] : memref<1x4x128xf32, #tpu.memory_space<vmem>>, vector<1x4x128xf32>
      %61 = vector.shape_cast %60 : vector<1x4x128xf32> to vector<4x128xf32>
      %62 = vector.shape_cast %59 : vector<4x128xf32> to vector<1x4x128xf32>
      tpu.vector_store %arg12[%c0_44, %c0_45, %c0_46], %62 {strides = array<i32>} : memref<1x4x128xf32, #tpu.memory_space<vmem>>, vector<1x4x128xf32>,
      %c0_47 = arith.constant 0 : index
      %c0_48 = arith.constant 0 : index
      %63 = vector.load %arg15[%c0_47, %c0_48] : memref<1x128xi32, #tpu.memory_space<vmem>>, vector<1x128xi32>
      %c0_49 = arith.constant 0 : index
      %c0_50 = arith.constant 0 : index
      %c0_51 = arith.constant 0 : index
      %64 = vector.load %arg13[%c0_49, %c0_50, %c0_51] : memref<1x1x128xi32, #tpu.memory_space<vmem>>, vector<1x1x128xi32>
      %65 = vector.shape_cast %64 : vector<1x1x128xi32> to vector<1x128xi32>
      %66 = vector.shape_cast %63 : vector<1x128xi32> to vector<1x1x128xi32>
      tpu.vector_store %arg13[%c0_49, %c0_50, %c0_51], %66 {strides = array<i32>} : memref<1x1x128xi32, #tpu.memory_space<vmem>>, vector<1x1x128xi32>,
    } else {
    }
    return
  }
  func.func @transform_0(%arg0: i32, %arg1: i32, %arg2: i32) -> (i32, i32, i32) {
    %c0_i32 = arith.constant 0 : i32
    %c0_i32_0 = arith.constant 0 : i32
    return %arg0, %c0_i32, %arg1 : i32, i32, i32
  }
  func.func @transform_1(%arg0: i32, %arg1: i32, %arg2: i32) -> (i32, i32) {
    %c0_i32 = arith.constant 0 : i32
    %c0_i32_0 = arith.constant 0 : i32
    %c0_i32_1 = arith.constant 0 : i32
    return %c0_i32, %c0_i32_0 : i32, i32
  }
  func.func @transform_2(%arg0: i32, %arg1: i32, %arg2: i32) -> (i32, i32) {
    %c0_i32 = arith.constant 0 : i32
    %c0_i32_0 = arith.constant 0 : i32
    %c0_i32_1 = arith.constant 0 : i32
    return %c0_i32, %c0_i32_0 : i32, i32
  }
  func.func @transform_3(%arg0: i32, %arg1: i32, %arg2: i32) -> (i32, i32) {
    %c0_i32 = arith.constant 0 : i32
    %c0_i32_0 = arith.constant 0 : i32
    return %arg2, %c0_i32 : i32, i32
  }
  func.func @transform_4(%arg0: i32, %arg1: i32, %arg2: i32) -> (i32, i32) {
    %c0_i32 = arith.constant 0 : i32
    %c0_i32_0 = arith.constant 0 : i32
    return %arg2, %c0_i32 : i32, i32
  }
  func.func @transform_5(%arg0: i32, %arg1: i32, %arg2: i32) -> (i32, i32) {
    %c0_i32 = arith.constant 0 : i32
    %c0_i32_0 = arith.constant 0 : i32
    return %c0_i32, %arg2 : i32, i32
  }
  func.func @transform_6(%arg0: i32, %arg1: i32, %arg2: i32) -> (i32, i32) {
    %c0_i32 = arith.constant 0 : i32
    %c0_i32_0 = arith.constant 0 : i32
    %c0_i32_1 = arith.constant 0 : i32
    return %c0_i32, %c0_i32_0 : i32, i32
  }
  func.func @transform_7(%arg0: i32, %arg1: i32, %arg2: i32) -> (i32, i32, i32) {
    %c0_i32 = arith.constant 0 : i32
    %c0_i32_0 = arith.constant 0 : i32
    return %arg0, %c0_i32, %arg1 : i32, i32, i32
  }
  func.func @transform_8(%arg0: i32, %arg1: i32, %arg2: i32) -> (i32, i32, i32) {
    %c0_i32 = arith.constant 0 : i32
    %c0_i32_0 = arith.constant 0 : i32
    return %arg0, %c0_i32, %arg1 : i32, i32, i32
  }
  func.func @transform_9(%arg0: i32, %arg1: i32, %arg2: i32) -> (i32, i32, i32) {
    %c0_i32 = arith.constant 0 : i32
    %c0_i32_0 = arith.constant 0 : i32
    return %arg0, %c0_i32, %arg1 : i32, i32, i32
  }
  func.func @transform_10(%arg0: i32, %arg1: i32, %arg2: i32) -> (i32, i32, i32) {
    %c0_i32 = arith.constant 0 : i32
    %c0_i32_0 = arith.constant 0 : i32
    return %arg0, %c0_i32, %arg1 : i32, i32, i32
  }
}

module attributes {stable_mosaic.version = 11 : i64} {
  func.func @_tokenizer_kernel(%arg0: i32, %arg1: i32, %arg2: i32, %arg3: memref<1x4x128xf32, #tpu.memory_space<vmem>>, %arg4: memref<32x4xf32, #tpu.memory_space<vmem>>, %arg5: memref<32x1xf32, #tpu.memory_space<vmem>>, %arg6: memref<128x4xf32, #tpu.memory_space<vmem>>, %arg7: memref<128x1xf32, #tpu.memory_space<vmem>>, %arg8: memref<36x128xf32, #tpu.memory_space<vmem>>, %arg9: memref<4x1xf32, #tpu.memory_space<vmem>>, %arg10: memref<1x32x128xf32, #tpu.memory_space<vmem>>, %arg11: memref<1x32x128xf32, #tpu.memory_space<vmem>>, %arg12: memref<1x4x128xf32, #tpu.memory_space<vmem>>, %arg13: memref<1x1x128xi32, #tpu.memory_space<vmem>>, %arg14: memref<1x128xf32, #tpu.memory_space<vmem>>, %arg15: memref<1x128xi32, #tpu.memory_space<vmem>>, %arg16: memref<36x128xf32, #tpu.memory_space<vmem>>) attributes {dimension_semantics = [#tpu.dimension_semantics<parallel>, #tpu.dimension_semantics<parallel>, #tpu.dimension_semantics<arbitrary>], iteration_bounds = array<i64: 2, 2, 2>, scalar_prefetch = 0 : i64, scratch_operands = 3 : i64, tpu.core_type = #tpu.core_type<tc>, window_params = [{transform_indices = @transform_0, window_bounds = array<i64: 1, 4, 128>}, {pipeline_mode = #tpu.pipeline_mode<synchronous>, transform_indices = @transform_1, window_bounds = array<i64: 32, 4>}, {pipeline_mode = #tpu.pipeline_mode<synchronous>, transform_indices = @transform_2, window_bounds = array<i64: 32, 1>}, {transform_indices = @transform_3, window_bounds = array<i64: 128, 4>}, {transform_indices = @transform_4, window_bounds = array<i64: 128, 1>}, {transform_indices = @transform_5, window_bounds = array<i64: 36, 128>}, {pipeline_mode = #tpu.pipeline_mode<synchronous>, transform_indices = @transform_6, window_bounds = array<i64: 4, 1>}, {transform_indices = @transform_7, window_bounds = array<i64: 1, 32, 128>}, {transform_indices = @transform_8, window_bounds = array<i64: 1, 32, 128>}, {transform_indices = @transform_9, window_bounds = array<i64: 1, 4, 128>}, {transform_indices = @transform_10, window_bounds = array<i64: 1, 1, 128>}]} {
    %c0 = arith.constant 0 : index
    %c0_0 = arith.constant 0 : index
    %c0_1 = arith.constant 0 : index
    %0 = vector.load %arg3[%c0, %c0_0, %c0_1] : memref<1x4x128xf32, #tpu.memory_space<vmem>>, vector<1x4x128xf32>
    %1 = vector.shape_cast %0 : vector<1x4x128xf32> to vector<4x128xf32>
    %c0_i32 = arith.constant 0 : i32
    %2 = arith.cmpi eq, %arg2, %c0_i32 : i32
    %3 = arith.extui %2 : i1 to i32
    %c0_i32_2 = arith.constant 0 : i32
    %4 = arith.cmpi ne, %3, %c0_i32_2 : i32
    scf.if %4 {
      %cst_28 = arith.constant 0x7F800000 : f32
      %44 = vector.broadcast %cst_28 : f32 to vector<1x128xf32>
      %c0_29 = arith.constant 0 : index
      %c0_30 = arith.constant 0 : index
      %45 = vector.load %arg14[%c0_29, %c0_30] : memref<1x128xf32, #tpu.memory_space<vmem>>, vector<1x128xf32>
      tpu.vector_store %arg14[%c0_29, %c0_30], %44 {strides = array<i32>} : memref<1x128xf32, #tpu.memory_space<vmem>>, vector<1x128xf32>,
      %c0_i32_31 = arith.constant 0 : i32
      %46 = vector.broadcast %c0_i32_31 : i32 to vector<1x128xi32>
      %c0_32 = arith.constant 0 : index
      %c0_33 = arith.constant 0 : index
      %47 = vector.load %arg15[%c0_32, %c0_33] : memref<1x128xi32, #tpu.memory_space<vmem>>, vector<1x128xi32>
      tpu.vector_store %arg15[%c0_32, %c0_33], %46 {strides = array<i32>} : memref<1x128xi32, #tpu.memory_space<vmem>>, vector<1x128xi32>,
      %cst_34 = arith.constant 0.000000e+00 : f32
      %48 = vector.broadcast %cst_34 : f32 to vector<36x128xf32>
      %c0_35 = arith.constant 0 : index
      %c0_36 = arith.constant 0 : index
      %49 = vector.load %arg16[%c0_35, %c0_36] : memref<36x128xf32, #tpu.memory_space<vmem>>, vector<36x128xf32>
      tpu.vector_store %arg16[%c0_35, %c0_36], %48 {strides = array<i32>} : memref<36x128xf32, #tpu.memory_space<vmem>>, vector<36x128xf32>,
    } else {
    }
    %c0_3 = arith.constant 0 : index
    %c0_4 = arith.constant 0 : index
    %5 = vector.load %arg6[%c0_3, %c0_4] : memref<128x4xf32, #tpu.memory_space<vmem>>, vector<128x4xf32>
    %c0_5 = arith.constant 0 : index
    %c0_6 = arith.constant 0 : index
    %6 = vector.load %arg7[%c0_5, %c0_6] : memref<128x1xf32, #tpu.memory_space<vmem>>, vector<128x1xf32>
    %cst = arith.constant dense<0.000000e+00> : vector<128x128xf32>
    %7 = tpu.matmul %5, %1, %cst {dimension_numbers = #tpu.dot_dimension_numbers<[1], [0], [0], [1], [0, 0, 1, 1], [], []>} : vector<128x4xf32>, vector<4x128xf32>, vector<128x128xf32> -> vector<128x128xf32>
    %8 = vector.broadcast %6 : vector<128x1xf32> to vector<128x128xf32>
    %9 = arith.addf %8, %7 : vector<128x128xf32>
    %10 = tpu.iota {dimensions = array<i32: 0>} : vector<128x128xi32>
    %cst_7 = arith.constant dense<0x7F800000> : vector<128xf32>
    %11 = vector.multi_reduction <minimumf>, %9, %cst_7 [0] : vector<128x128xf32> to vector<128xf32>
    %12 = vector.shape_cast %11 : vector<128xf32> to vector<1x128xf32>
    %13 = vector.broadcast %12 : vector<1x128xf32> to vector<128x128xf32>
    %14 = arith.cmpf oeq, %9, %13 : vector<128x128xf32>
    %c128_i32 = arith.constant 128 : i32
    %15 = vector.broadcast %c128_i32 : i32 to vector<128x128xi32>
    %16 = arith.select %14, %10, %15 : vector<128x128xi1>, vector<128x128xi32>
    %cst_8 = arith.constant dense<2147483647> : vector<128xi32>
    %17 = vector.multi_reduction <minsi>, %16, %cst_8 [0] : vector<128x128xi32> to vector<128xi32>
    %18 = vector.shape_cast %17 : vector<128xi32> to vector<1x128xi32>
    %19 = vector.broadcast %18 : vector<1x128xi32> to vector<128x128xi32>
    %20 = arith.cmpi eq, %10, %19 : vector<128x128xi32>
    %21 = arith.extui %20 : vector<128x128xi1> to vector<128x128xi32>
    %22 = arith.sitofp %21 : vector<128x128xi32> to vector<128x128xf32>
    %c0_9 = arith.constant 0 : index
    %c0_10 = arith.constant 0 : index
    %23 = vector.load %arg8[%c0_9, %c0_10] : memref<36x128xf32, #tpu.memory_space<vmem>>, vector<36x128xf32>
    %cst_11 = arith.constant dense<0.000000e+00> : vector<36x128xf32>
    %24 = tpu.matmul %23, %22, %cst_11 {dimension_numbers = #tpu.dot_dimension_numbers<[1], [0], [0], [1], [0, 0, 1, 1], [], []>} : vector<36x128xf32>, vector<128x128xf32>, vector<36x128xf32> -> vector<36x128xf32>
    %c0_12 = arith.constant 0 : index
    %c0_13 = arith.constant 0 : index
    %25 = vector.load %arg14[%c0_12, %c0_13] : memref<1x128xf32, #tpu.memory_space<vmem>>, vector<1x128xf32>
    %26 = arith.cmpf olt, %12, %25 : vector<1x128xf32>
    %c0_14 = arith.constant 0 : index
    %c0_15 = arith.constant 0 : index
    %27 = vector.load %arg14[%c0_14, %c0_15] : memref<1x128xf32, #tpu.memory_space<vmem>>, vector<1x128xf32>
    %28 = arith.select %26, %12, %27 : vector<1x128xi1>, vector<1x128xf32>
    %c0_16 = arith.constant 0 : index
    %c0_17 = arith.constant 0 : index
    %29 = vector.load %arg14[%c0_16, %c0_17] : memref<1x128xf32, #tpu.memory_space<vmem>>, vector<1x128xf32>
    tpu.vector_store %arg14[%c0_16, %c0_17], %28 {strides = array<i32>} : memref<1x128xf32, #tpu.memory_space<vmem>>, vector<1x128xf32>,
    %c128_i32_18 = arith.constant 128 : i32
    %30 = arith.muli %arg2, %c128_i32_18 : i32
    %31 = vector.broadcast %30 : i32 to vector<1x128xi32>
    %32 = arith.addi %18, %31 : vector<1x128xi32>
    %c0_19 = arith.constant 0 : index
    %c0_20 = arith.constant 0 : index
    %33 = vector.load %arg15[%c0_19, %c0_20] : memref<1x128xi32, #tpu.memory_space<vmem>>, vector<1x128xi32>
    %34 = arith.select %26, %32, %33 : vector<1x128xi1>, vector<1x128xi32>
    %c0_21 = arith.constant 0 : index
    %c0_22 = arith.constant 0 : index
    %35 = vector.load %arg15[%c0_21, %c0_22] : memref<1x128xi32, #tpu.memory_space<vmem>>, vector<1x128xi32>
    tpu.vector_store %arg15[%c0_21, %c0_22], %34 {strides = array<i32>} : memref<1x128xi32, #tpu.memory_space<vmem>>, vector<1x128xi32>,
    %c0_23 = arith.constant 0 : index
    %c0_24 = arith.constant 0 : index
    %36 = vector.load %arg16[%c0_23, %c0_24] : memref<36x128xf32, #tpu.memory_space<vmem>>, vector<36x128xf32>
    %37 = vector.shape_cast %26 : vector<1x128xi1> to vector<1x128xi1>
    %38 = vector.broadcast %37 : vector<1x128xi1> to vector<36x128xi1>
    %39 = arith.select %38, %24, %36 : vector<36x128xi1>, vector<36x128xf32>
    %c0_25 = arith.constant 0 : index
    %c0_26 = arith.constant 0 : index
    %40 = vector.load %arg16[%c0_25, %c0_26] : memref<36x128xf32, #tpu.memory_space<vmem>>, vector<36x128xf32>
    tpu.vector_store %arg16[%c0_25, %c0_26], %39 {strides = array<i32>} : memref<36x128xf32, #tpu.memory_space<vmem>>, vector<36x128xf32>,
    %c1_i32 = arith.constant 1 : i32
    %41 = arith.cmpi eq, %arg2, %c1_i32 : i32
    %42 = arith.extui %41 : i1 to i32
    %c0_i32_27 = arith.constant 0 : i32
    %43 = arith.cmpi ne, %42, %c0_i32_27 : i32
    scf.if %43 {
      %c0_28 = arith.constant 0 : index
      %c0_29 = arith.constant 0 : index
      %44 = vector.load %arg4[%c0_28, %c0_29] : memref<32x4xf32, #tpu.memory_space<vmem>>, vector<32x4xf32>
      %cst_30 = arith.constant dense<0.000000e+00> : vector<32x128xf32>
      %45 = tpu.matmul %44, %1, %cst_30 {dimension_numbers = #tpu.dot_dimension_numbers<[1], [0], [0], [1], [0, 0, 1, 1], [], []>} : vector<32x4xf32>, vector<4x128xf32>, vector<32x128xf32> -> vector<32x128xf32>
      %c0_31 = arith.constant 0 : index
      %c0_32 = arith.constant 0 : index
      %46 = vector.load %arg5[%c0_31, %c0_32] : memref<32x1xf32, #tpu.memory_space<vmem>>, vector<32x1xf32>
      %47 = vector.broadcast %46 : vector<32x1xf32> to vector<32x128xf32>
      %48 = arith.addf %45, %47 : vector<32x128xf32>
      %c0_33 = arith.constant 0 : index
      %c0_34 = arith.constant 0 : index
      %c0_35 = arith.constant 0 : index
      %49 = vector.load %arg10[%c0_33, %c0_34, %c0_35] : memref<1x32x128xf32, #tpu.memory_space<vmem>>, vector<1x32x128xf32>
      %50 = vector.shape_cast %49 : vector<1x32x128xf32> to vector<32x128xf32>
      %51 = vector.shape_cast %48 : vector<32x128xf32> to vector<1x32x128xf32>
      tpu.vector_store %arg10[%c0_33, %c0_34, %c0_35], %51 {strides = array<i32>} : memref<1x32x128xf32, #tpu.memory_space<vmem>>, vector<1x32x128xf32>,
      %c0_36 = arith.constant 0 : index
      %c0_37 = arith.constant 0 : index
      %52 = vector.load %arg16[%c0_36, %c0_37] : memref<36x128xf32, #tpu.memory_space<vmem>>, vector<32x128xf32>
      %c0_38 = arith.constant 0 : index
      %c0_39 = arith.constant 0 : index
      %c0_40 = arith.constant 0 : index
      %53 = vector.load %arg11[%c0_38, %c0_39, %c0_40] : memref<1x32x128xf32, #tpu.memory_space<vmem>>, vector<1x32x128xf32>
      %54 = vector.shape_cast %53 : vector<1x32x128xf32> to vector<32x128xf32>
      %55 = vector.shape_cast %52 : vector<32x128xf32> to vector<1x32x128xf32>
      tpu.vector_store %arg11[%c0_38, %c0_39, %c0_40], %55 {strides = array<i32>} : memref<1x32x128xf32, #tpu.memory_space<vmem>>, vector<1x32x128xf32>,
      %c32 = arith.constant 32 : index
      %c0_41 = arith.constant 0 : index
      %56 = vector.load %arg16[%c32, %c0_41] : memref<36x128xf32, #tpu.memory_space<vmem>>, vector<4x128xf32>
      %c0_42 = arith.constant 0 : index
      %c0_43 = arith.constant 0 : index
      %57 = vector.load %arg9[%c0_42, %c0_43] : memref<4x1xf32, #tpu.memory_space<vmem>>, vector<4x1xf32>
      %58 = vector.broadcast %57 : vector<4x1xf32> to vector<4x128xf32>
      %59 = arith.addf %56, %58 : vector<4x128xf32>
      %c0_44 = arith.constant 0 : index
      %c0_45 = arith.constant 0 : index
      %c0_46 = arith.constant 0 : index
      %60 = vector.load %arg12[%c0_44, %c0_45, %c0_46] : memref<1x4x128xf32, #tpu.memory_space<vmem>>, vector<1x4x128xf32>
      %61 = vector.shape_cast %60 : vector<1x4x128xf32> to vector<4x128xf32>
      %62 = vector.shape_cast %59 : vector<4x128xf32> to vector<1x4x128xf32>
      tpu.vector_store %arg12[%c0_44, %c0_45, %c0_46], %62 {strides = array<i32>} : memref<1x4x128xf32, #tpu.memory_space<vmem>>, vector<1x4x128xf32>,
      %c0_47 = arith.constant 0 : index
      %c0_48 = arith.constant 0 : index
      %63 = vector.load %arg15[%c0_47, %c0_48] : memref<1x128xi32, #tpu.memory_space<vmem>>, vector<1x128xi32>
      %c0_49 = arith.constant 0 : index
      %c0_50 = arith.constant 0 : index
      %c0_51 = arith.constant 0 : index
      %64 = vector.load %arg13[%c0_49, %c0_50, %c0_51] : memref<1x1x128xi32, #tpu.memory_space<vmem>>, vector<1x1x128xi32>
      %65 = vector.shape_cast %64 : vector<1x1x128xi32> to vector<1x128xi32>
      %66 = vector.shape_cast %63 : vector<1x128xi32> to vector<1x1x128xi32>
      tpu.vector_store %arg13[%c0_49, %c0_50, %c0_51], %66 {strides = array<i32>} : memref<1x1x128xi32, #tpu.memory_space<vmem>>, vector<1x1x128xi32>,
    } else {
    }
    return
  }
  func.func @transform_0(%arg0: i32, %arg1: i32, %arg2: i32) -> (i32, i32, i32) {
    %c0_i32 = arith.constant 0 : i32
    %c0_i32_0 = arith.constant 0 : i32
    return %arg0, %c0_i32, %arg1 : i32, i32, i32
  }
  func.func @transform_1(%arg0: i32, %arg1: i32, %arg2: i32) -> (i32, i32) {
    %c0_i32 = arith.constant 0 : i32
    %c0_i32_0 = arith.constant 0 : i32
    %c0_i32_1 = arith.constant 0 : i32
    return %c0_i32, %c0_i32_0 : i32, i32
  }
  func.func @transform_2(%arg0: i32, %arg1: i32, %arg2: i32) -> (i32, i32) {
    %c0_i32 = arith.constant 0 : i32
    %c0_i32_0 = arith.constant 0 : i32
    %c0_i32_1 = arith.constant 0 : i32
    return %c0_i32, %c0_i32_0 : i32, i32
  }
  func.func @transform_3(%arg0: i32, %arg1: i32, %arg2: i32) -> (i32, i32) {
    %c0_i32 = arith.constant 0 : i32
    %c0_i32_0 = arith.constant 0 : i32
    return %arg2, %c0_i32 : i32, i32
  }
  func.func @transform_4(%arg0: i32, %arg1: i32, %arg2: i32) -> (i32, i32) {
    %c0_i32 = arith.constant 0 : i32
    %c0_i32_0 = arith.constant 0 : i32
    return %arg2, %c0_i32 : i32, i32
  }
  func.func @transform_5(%arg0: i32, %arg1: i32, %arg2: i32) -> (i32, i32) {
    %c0_i32 = arith.constant 0 : i32
    %c0_i32_0 = arith.constant 0 : i32
    return %c0_i32, %arg2 : i32, i32
  }
  func.func @transform_6(%arg0: i32, %arg1: i32, %arg2: i32) -> (i32, i32) {
    %c0_i32 = arith.constant 0 : i32
    %c0_i32_0 = arith.constant 0 : i32
    %c0_i32_1 = arith.constant 0 : i32
    return %c0_i32, %c0_i32_0 : i32, i32
  }
  func.func @transform_7(%arg0: i32, %arg1: i32, %arg2: i32) -> (i32, i32, i32) {
    %c0_i32 = arith.constant 0 : i32
    %c0_i32_0 = arith.constant 0 : i32
    return %arg0, %c0_i32, %arg1 : i32, i32, i32
  }
  func.func @transform_8(%arg0: i32, %arg1: i32, %arg2: i32) -> (i32, i32, i32) {
    %c0_i32 = arith.constant 0 : i32
    %c0_i32_0 = arith.constant 0 : i32
    return %arg0, %c0_i32, %arg1 : i32, i32, i32
  }
  func.func @transform_9(%arg0: i32, %arg1: i32, %arg2: i32) -> (i32, i32, i32) {
    %c0_i32 = arith.constant 0 : i32
    %c0_i32_0 = arith.constant 0 : i32
    return %arg0, %c0_i32, %arg1 : i32, i32, i32
  }
  func.func @transform_10(%arg0: i32, %arg1: i32, %arg2: i32) -> (i32, i32, i32) {
    %c0_i32 = arith.constant 0 : i32
    %c0_i32_0 = arith.constant 0 : i32
    return %arg0, %c0_i32, %arg1 : i32, i32, i32
  }
}

</mosaic_0001>

<llo_original>
// kernel: tpu_custom_call.1
$region0: #{tpu_custom_call.1}
  #allocation0 [shape = 'u32[]', space=smem, size = 0x4, offset = 0x4, fixed_abs, tag = 'smem constant byte address 0x4 - core index']
  #allocation1 [shape = 'u32[72,128]{1,0:T(1,128)}', space=vmem, size = 0x9000, scoped, tag = 'internal scratch']
  #allocation2 [shape = 'f32[1,128]{1,0:T(1,128)}', space=vmem, size = 0x200, scoped, tag = 'scratch operand']
  #allocation3 [shape = 's32[1,128]{1,0:T(1,128)}', space=vmem, size = 0x200, scoped, tag = 'scratch operand']
  #allocation4 [shape = 'f32[36,128]{1,0:T(8,128)}', space=vmem, size = 0x5000, scoped, tag = 'scratch operand']
  %s0 = inlined_call_operand.vmem [shape: f32[2,4,256], index: 0, kind: input, shape index: {}]
  %s1 = inlined_call_operand.vmem [shape: f32[32,4], index: 1, kind: input, shape index: {}]
  %s2 = inlined_call_operand.vmem [shape: f32[32,1], index: 2, kind: input, shape index: {}]
  %s3 = inlined_call_operand.vmem [shape: f32[256,4], index: 3, kind: input, shape index: {}]
  %s4 = inlined_call_operand.vmem [shape: f32[256,1], index: 4, kind: input, shape index: {}]
  %s5 = inlined_call_operand.vmem [shape: f32[36,256], index: 5, kind: input, shape index: {}]
  %s6 = inlined_call_operand.vmem [shape: f32[4,1], index: 6, kind: input, shape index: {}]
  %s7 = inlined_call_operand.hbm [shape: f32[2,32,256], index: 7, kind: output, shape index: {0}]
  %s8 = inlined_call_operand.hbm [shape: f32[2,32,256], index: 8, kind: output, shape index: {1}]
  %s9 = inlined_call_operand.hbm [shape: f32[2,4,256], index: 9, kind: output, shape index: {2}]
  %s10 = inlined_call_operand.hbm [shape: s32[2,1,256], index: 10, kind: output, shape index: {3}]
  %11 = xla_tuple %s7, %s8, %s9, %s10
  %s12 = sld [smem:[#allocation0]]
  $region131: #{tpu_custom_call.1} parent=0
    _
  %s14 = ssub.s32 1, %s12
  %s15 = scalar_select 0, %s14, %s12
  $region1: #{tpu_custom_call.1} parent=0
    #allocation5 [shape = 'u8[40960]{0}', space=vmem, size = 0xa000, scoped, tag = 'input window, operand 5']
    #allocation6 [shape = 'u8[32768]{0}', space=vmem, size = 0x8000, scoped, tag = 'output window, operand 0']
    #allocation7 [shape = 's32[2]{0}', space=sflag, size = 0x8, scoped, tag = 'scoped memory for tpu_custom_call.1']
    #allocation8 [shape = 'u8[32768]{0}', space=vmem, size = 0x8000, scoped, tag = 'output window, operand 1']
    #allocation9 [shape = 's32[2]{0}', space=sflag, size = 0x8, scoped, tag = 'scoped memory for tpu_custom_call.1']
    #allocation10 [shape = 'u8[4096]{0}', space=vmem, size = 0x1000, scoped, tag = 'output window, operand 2']
    #allocation11 [shape = 'u8[1024]{0}', space=vmem, size = 0x400, scoped, tag = 'output window, operand 3']
    #allocation12 [shape = 's32[2]{0}', space=sflag, size = 0x8, scoped, tag = 'scoped memory for tpu_custom_call.1']
    %16 = vsyncpa [#allocation7], 0
    %s17 = scalar_lea.sflag [#allocation7], 1
    %18 = vsyncpa %s17, 0
    %19 = vsyncpa [#allocation9], 0
    %s20 = scalar_lea.sflag [#allocation9], 1
    %21 = vsyncpa %s20, 0
    %22 = vsyncpa [#allocation12], 0
    %s23 = scalar_lea.sflag [#allocation12], 1
    %24 = vsyncpa %s23, 0
    loop: start=0, step=1, limit=10
    $region2: #{tpu_custom_call.1} parent=1 // loop_pre_header
      _
    $region3: #{tpu_custom_call.1} parent=1 // loop_header
      %s26 = sphi 0, %s30
      %p27 = scmp.ge.s32.totalorder %s26, 10
      %s33 = sphi 0, %s52
      %s34 = sphi 0, %s48
      %s35 = sphi 0, %s44
      %s36 = sphi 0, %s33
      %s37 = sphi 0, %s34
      %s38 = sphi 0, %s35
      %s39 = sphi 0, %s36
      %s40 = sphi 0, %s37
      %s41 = sphi 0, %s38
      %s57 = sphi 0, %s59
      %s60 = sphi 0, %s57
      %s61 = sphi 0, %s60
      %s77 = sphi 0, %s61
      %s81 = sphi 0, %s81
      %s83 = sphi 0, %s81
      %s84 = sphi 0, %s83
      %s98 = sphi 0, %s84
      %s102 = sphi 0, %s102
      %s104 = sphi 0, %s102
      %s105 = sphi 0, %s104
      %s119 = sphi 0, %s105
      %s125 = sphi 0, %s127
      %s128 = sphi 0, %s125
      %s129 = sphi 0, %s128
      %s145 = sphi 0, %s129
      %s151 = sphi 0, %s153
      %s154 = sphi 0, %s151
      %s155 = sphi 0, %s154
      %s171 = sphi 0, %s155
      %s177 = sphi 0, %s179
      %s180 = sphi 0, %s177
      %s181 = sphi 0, %s180
      %s197 = sphi 0, %s181
      %s201 = sphi 0, %s201
      %s203 = sphi 0, %s201
      %s204 = sphi 0, %s203
      %s218 = sphi 0, %s204
      %s226 = sphi 0, %s228
      %s229 = sphi 0, %s226
      %s230 = sphi 0, %s229
      %s246 = sphi 0, %s230
      %s254 = sphi 0, %s256
      %s257 = sphi 0, %s254
      %s258 = sphi 0, %s257
      %s274 = sphi 0, %s258
      %s282 = sphi 0, %s284
      %s285 = sphi 0, %s282
      %s286 = sphi 0, %s285
      %s302 = sphi 0, %s286
      %s310 = sphi 0, %s312
      %s313 = sphi 0, %s310
      %s314 = sphi 0, %s313
      %s330 = sphi 0, %s314
    $region4: #{tpu_custom_call.1} parent=1 // loop_header_branch
      %29 = sbr.rel (%p27) target = $region8
    $region5: #{tpu_custom_call.1} parent=1 // loop_body
      %s31 = ssub.s32 %s26, 1
      %s32 = ssub.s32 %s26, 2
      %s42 = sadd.s32 1, %s35
      %p43 = scmp.ge.s32.totalorder %s42, 2
      %s44 = scalar_select %p43, 0, %s42
      %s45 = sadd.s32 1, %s34
      %s46 = scalar_select %p43, %s45, %s34
      %p47 = scmp.ge.s32.totalorder %s46, 2
      %s48 = scalar_select %p47, 0, %s46
      %s49 = sadd.s32 1, %s33
      %s50 = scalar_select %p47, %s49, %s33
      %p51 = scmp.ge.s32.totalorder %s50, 2
      %s52 = scalar_select %p51, 0, %s50
      %s53 = ssub.s32 %s33, %s52
      %s54 = ssub.s32 %s34, %s48
      %s55 = sor.u32 %s53, %s54
      %p56 = scmp.eq.s32.totalorder %s55, 0
      %s58 = sadd.s32 %s57, 1
      %s59 = scalar_select %p56, %s57, %s58
      %p62 = pneg %p56
      %p63 = scmp.eq.s32.totalorder %s26, 7
      %p64 = por %p62, %p63
      %p65 = scmp.ne.s32.totalorder %s57, %s60
      %p66 = scmp.eq.s32.totalorder %s26, 0
      %p67 = por %p65, %p66
      %p68 = scmp.ne.s32.totalorder %s57, %s60
      %p69 = scmp.eq.s32.totalorder %s31, 7
      %p70 = por %p68, %p69
      %p71 = scmp.ne.s32.totalorder %s60, %s61
      %p72 = scmp.eq.s32.totalorder %s31, 0
      %p73 = por %p71, %p72
      %p74 = scmp.ne.s32.totalorder %s60, %s61
      %p75 = scmp.eq.s32.totalorder %s32, 7
      %p76 = por %p74, %p75
      %p78 = scmp.ne.s32.totalorder %s61, %s77
      %p79 = scmp.eq.s32.totalorder %s32, 0
      %p80 = por %p78, %p79
      %s82 = sadd.s32 %s81, 1
      %p85 = scmp.eq.s32.totalorder %s26, 7
      %p86 = scmp.ne.s32.totalorder %s81, %s83
      %p87 = scmp.eq.s32.totalorder %s26, 0
      %p88 = por %p86, %p87
      %p89 = scmp.ne.s32.totalorder %s81, %s83
      %p90 = scmp.eq.s32.totalorder %s31, 7
      %p91 = por %p89, %p90
      %p92 = scmp.ne.s32.totalorder %s83, %s84
      %p93 = scmp.eq.s32.totalorder %s31, 0
      %p94 = por %p92, %p93
      %p95 = scmp.ne.s32.totalorder %s83, %s84
      %p96 = scmp.eq.s32.totalorder %s32, 7
      %p97 = por %p95, %p96
      %p99 = scmp.ne.s32.totalorder %s84, %s98
      %p100 = scmp.eq.s32.totalorder %s32, 0
      %p101 = por %p99, %p100
      %s103 = sadd.s32 %s102, 1
      %p106 = scmp.eq.s32.totalorder %s26, 7
      %p107 = scmp.ne.s32.totalorder %s102, %s104
      %p108 = scmp.eq.s32.totalorder %s26, 0
      %p109 = por %p107, %p108
      %p110 = scmp.ne.s32.totalorder %s102, %s104
      %p111 = scmp.eq.s32.totalorder %s31, 7
      %p112 = por %p110, %p111
      %p113 = scmp.ne.s32.totalorder %s104, %s105
      %p114 = scmp.eq.s32.totalorder %s31, 0
      %p115 = por %p113, %p114
      %p116 = scmp.ne.s32.totalorder %s104, %s105
      %p117 = scmp.eq.s32.totalorder %s32, 7
      %p118 = por %p116, %p117
      %p120 = scmp.ne.s32.totalorder %s105, %s119
      %p121 = scmp.eq.s32.totalorder %s32, 0
      %p122 = por %p120, %p121
      %s123 = ssub.s32 %s35, %s44
      %p124 = scmp.eq.s32.totalorder %s123, 0
      %s126 = sadd.s32 %s125, 1
      %s127 = scalar_select %p124, %s125, %s126
      %p130 = pneg %p124
      %p131 = scmp.eq.s32.totalorder %s26, 7
      %p132 = por %p130, %p131
      %p133 = scmp.ne.s32.totalorder %s125, %s128
      %p134 = scmp.eq.s32.totalorder %s26, 0
      %p135 = por %p133, %p134
      %p136 = scmp.ne.s32.totalorder %s125, %s128
      %p137 = scmp.eq.s32.totalorder %s31, 7
      %p138 = por %p136, %p137
      %p139 = scmp.ne.s32.totalorder %s128, %s129
      %p140 = scmp.eq.s32.totalorder %s31, 0
      %p141 = por %p139, %p140
      %p142 = scmp.ne.s32.totalorder %s128, %s129
      %p143 = scmp.eq.s32.totalorder %s32, 7
      %p144 = por %p142, %p143
      %p146 = scmp.ne.s32.totalorder %s129, %s145
      %p147 = scmp.eq.s32.totalorder %s32, 0
      %p148 = por %p146, %p147
      %s149 = ssub.s32 %s35, %s44
      %p150 = scmp.eq.s32.totalorder %s149, 0
      %s152 = sadd.s32 %s151, 1
      %s153 = scalar_select %p150, %s151, %s152
      %p156 = pneg %p150
      %p157 = scmp.eq.s32.totalorder %s26, 7
      %p158 = por %p156, %p157
      %p159 = scmp.ne.s32.totalorder %s151, %s154
      %p160 = scmp.eq.s32.totalorder %s26, 0
      %p161 = por %p159, %p160
      %p162 = scmp.ne.s32.totalorder %s151, %s154
      %p163 = scmp.eq.s32.totalorder %s31, 7
      %p164 = por %p162, %p163
      %p165 = scmp.ne.s32.totalorder %s154, %s155
      %p166 = scmp.eq.s32.totalorder %s31, 0
      %p167 = por %p165, %p166
      %p168 = scmp.ne.s32.totalorder %s154, %s155
      %p169 = scmp.eq.s32.totalorder %s32, 7
      %p170 = por %p168, %p169
      %p172 = scmp.ne.s32.totalorder %s155, %s171
      %p173 = scmp.eq.s32.totalorder %s32, 0
      %p174 = por %p172, %p173
      %s175 = ssub.s32 %s35, %s44
      %p176 = scmp.eq.s32.totalorder %s175, 0
      %s178 = sadd.s32 %s177, 1
      %s179 = scalar_select %p176, %s177, %s178
      %p182 = pneg %p176
      %p183 = scmp.eq.s32.totalorder %s26, 7
      %p184 = por %p182, %p183
      %p185 = scmp.ne.s32.totalorder %s177, %s180
      %p186 = scmp.eq.s32.totalorder %s26, 0
      %p187 = por %p185, %p186
      %p188 = scmp.ne.s32.totalorder %s177, %s180
      %p189 = scmp.eq.s32.totalorder %s31, 7
      %p190 = por %p188, %p189
      %p191 = scmp.ne.s32.totalorder %s180, %s181
      %p192 = scmp.eq.s32.totalorder %s31, 0
      %p193 = por %p191, %p192
      %p194 = scmp.ne.s32.totalorder %s180, %s181
      %p195 = scmp.eq.s32.totalorder %s32, 7
      %p196 = por %p194, %p195
      %p198 = scmp.ne.s32.totalorder %s181, %s197
      %p199 = scmp.eq.s32.totalorder %s32, 0
      %p200 = por %p198, %p199
      %s202 = sadd.s32 %s201, 1
      %p205 = scmp.eq.s32.totalorder %s26, 7
      %p206 = scmp.ne.s32.totalorder %s201, %s203
      %p207 = scmp.eq.s32.totalorder %s26, 0
      %p208 = por %p206, %p207
      %p209 = scmp.ne.s32.totalorder %s201, %s203
      %p210 = scmp.eq.s32.totalorder %s31, 7
      %p211 = por %p209, %p210
      %p212 = scmp.ne.s32.totalorder %s203, %s204
      %p213 = scmp.eq.s32.totalorder %s31, 0
      %p214 = por %p212, %p213
      %p215 = scmp.ne.s32.totalorder %s203, %s204
      %p216 = scmp.eq.s32.totalorder %s32, 7
      %p217 = por %p215, %p216
      %p219 = scmp.ne.s32.totalorder %s204, %s218
      %p220 = scmp.eq.s32.totalorder %s32, 0
      %p221 = por %p219, %p220
      %s222 = ssub.s32 %s33, %s52
      %s223 = ssub.s32 %s34, %s48
      %s224 = sor.u32 %s222, %s223
      %p225 = scmp.eq.s32.totalorder %s224, 0
      %s227 = sadd.s32 %s226, 1
      %s228 = scalar_select %p225, %s226, %s227
      %p231 = pneg %p225
      %p232 = scmp.eq.s32.totalorder %s26, 7
      %p233 = por %p231, %p232
      %p234 = scmp.ne.s32.totalorder %s226, %s229
      %p235 = scmp.eq.s32.totalorder %s26, 0
      %p236 = por %p234, %p235
      %p237 = scmp.ne.s32.totalorder %s226, %s229
      %p238 = scmp.eq.s32.totalorder %s31, 7
      %p239 = por %p237, %p238
      %p240 = scmp.ne.s32.totalorder %s229, %s230
      %p241 = scmp.eq.s32.totalorder %s31, 0
      %p242 = por %p240, %p241
      %p243 = scmp.ne.s32.totalorder %s229, %s230
      %p244 = scmp.eq.s32.totalorder %s32, 7
      %p245 = por %p243, %p244
      %p247 = scmp.ne.s32.totalorder %s230, %s246
      %p248 = scmp.eq.s32.totalorder %s32, 0
      %p249 = por %p247, %p248
      %s250 = ssub.s32 %s33, %s52
      %s251 = ssub.s32 %s34, %s48
      %s252 = sor.u32 %s250, %s251
      %p253 = scmp.eq.s32.totalorder %s252, 0
      %s255 = sadd.s32 %s254, 1
      %s256 = scalar_select %p253, %s254, %s255
      %p259 = pneg %p253
      %p260 = scmp.eq.s32.totalorder %s26, 7
      %p261 = por %p259, %p260
      %p262 = scmp.ne.s32.totalorder %s254, %s257
      %p263 = scmp.eq.s32.totalorder %s26, 0
      %p264 = por %p262, %p263
      %p265 = scmp.ne.s32.totalorder %s254, %s257
      %p266 = scmp.eq.s32.totalorder %s31, 7
      %p267 = por %p265, %p266
      %p268 = scmp.ne.s32.totalorder %s257, %s258
      %p269 = scmp.eq.s32.totalorder %s31, 0
      %p270 = por %p268, %p269
      %p271 = scmp.ne.s32.totalorder %s257, %s258
      %p272 = scmp.eq.s32.totalorder %s32, 7
      %p273 = por %p271, %p272
      %p275 = scmp.ne.s32.totalorder %s258, %s274
      %p276 = scmp.eq.s32.totalorder %s32, 0
      %p277 = por %p275, %p276
      %s278 = ssub.s32 %s33, %s52
      %s279 = ssub.s32 %s34, %s48
      %s280 = sor.u32 %s278, %s279
      %p281 = scmp.eq.s32.totalorder %s280, 0
      %s283 = sadd.s32 %s282, 1
      %s284 = scalar_select %p281, %s282, %s283
      %p287 = pneg %p281
      %p288 = scmp.eq.s32.totalorder %s26, 7
      %p289 = por %p287, %p288
      %p290 = scmp.ne.s32.totalorder %s282, %s285
      %p291 = scmp.eq.s32.totalorder %s26, 0
      %p292 = por %p290, %p291
      %p293 = scmp.ne.s32.totalorder %s282, %s285
      %p294 = scmp.eq.s32.totalorder %s31, 7
      %p295 = por %p293, %p294
      %p296 = scmp.ne.s32.totalorder %s285, %s286
      %p297 = scmp.eq.s32.totalorder %s31, 0
      %p298 = por %p296, %p297
      %p299 = scmp.ne.s32.totalorder %s285, %s286
      %p300 = scmp.eq.s32.totalorder %s32, 7
      %p301 = por %p299, %p300
      %p303 = scmp.ne.s32.totalorder %s286, %s302
      %p304 = scmp.eq.s32.totalorder %s32, 0
      %p305 = por %p303, %p304
      %s306 = ssub.s32 %s33, %s52
      %s307 = ssub.s32 %s34, %s48
      %s308 = sor.u32 %s306, %s307
      %p309 = scmp.eq.s32.totalorder %s308, 0
      %s311 = sadd.s32 %s310, 1
      %s312 = scalar_select %p309, %s310, %s311
      %p315 = pneg %p309
      %p316 = scmp.eq.s32.totalorder %s26, 7
      %p317 = por %p315, %p316
      %p318 = scmp.ne.s32.totalorder %s310, %s313
      %p319 = scmp.eq.s32.totalorder %s26, 0
      %p320 = por %p318, %p319
      %p321 = scmp.ne.s32.totalorder %s310, %s313
      %p322 = scmp.eq.s32.totalorder %s31, 7
      %p323 = por %p321, %p322
      %p324 = scmp.ne.s32.totalorder %s313, %s314
      %p325 = scmp.eq.s32.totalorder %s31, 0
      %p326 = por %p324, %p325
      %p327 = scmp.ne.s32.totalorder %s313, %s314
      %p328 = scmp.eq.s32.totalorder %s32, 7
      %p329 = por %p327, %p328
      %p331 = scmp.ne.s32.totalorder %s314, %s330
      %p332 = scmp.eq.s32.totalorder %s32, 0
      %p333 = por %p331, %p332
      %p334 = scmp.le.s32.totalorder 1, %s26
      %p335 = scmp.lt.s32.totalorder %s26, 9
      %p336 = pnand %p334, %p335
      %p337 = pneg %p336
      // Predicated region
      $region9: #{tpu_custom_call.1} parent=5 // pred_check
        _
      $region10: #{tpu_custom_call.1} parent=5 // pred_check_branch
        %339 = sbr.rel (%p336) target = $region12
      $region11: #{tpu_custom_call.1} parent=5 // pred_region
        %s340 = ssub.s32 %s26, 1
        // Predicated region
        $region13: #{tpu_custom_call.1} parent=11 // pred_check
          %p341 = pneg %p94
        $region14: #{tpu_custom_call.1} parent=11 // pred_check_branch
          %343 = sbr.rel (%p341) target = $region16
        $region15: #{tpu_custom_call.1} parent=11 // pred_region
          _
        $region16: #{tpu_custom_call.1} parent=11 // pred_fallthru
          _
        // Predicated region
        $region17: #{tpu_custom_call.1} parent=11 // pred_check
          %p344 = pneg %p115
        $region18: #{tpu_custom_call.1} parent=11 // pred_check_branch
          %346 = sbr.rel (%p344) target = $region20
        $region19: #{tpu_custom_call.1} parent=11 // pred_region
          _
        $region20: #{tpu_custom_call.1} parent=11 // pred_fallthru
          _
        // Predicated region
        $region21: #{tpu_custom_call.1} parent=11 // pred_check
          %p347 = pneg %p214
        $region22: #{tpu_custom_call.1} parent=11 // pred_check_branch
          %349 = sbr.rel (%p347) target = $region24
        $region23: #{tpu_custom_call.1} parent=11 // pred_region
          _
        $region24: #{tpu_custom_call.1} parent=11 // pred_fallthru
          _
      $region12: #{tpu_custom_call.1} parent=5 // pred_fallthru
        _
      %p350 = scmp.lt.s32.totalorder %s26, 8
      // Predicated region
      $region25: #{tpu_custom_call.1} parent=5 // pred_check
        %p351 = pneg %p350
      $region26: #{tpu_custom_call.1} parent=5 // pred_check_branch
        %353 = sbr.rel (%p351) target = $region28
      $region27: #{tpu_custom_call.1} parent=5 // pred_region
        // Predicated region
        $region29: #{tpu_custom_call.1} parent=27 // pred_check
          %p354 = pneg %p67
        $region30: #{tpu_custom_call.1} parent=27 // pred_check_branch
          %356 = sbr.rel (%p354) target = $region32
        $region31: #{tpu_custom_call.1} parent=27 // pred_region
          %p357 = scmp.lt.s32.totalorder %s33, 1
          %s358 = scalar_select %p357, %s33, 1
          %p359 = scmp.lt.s32.totalorder %s34, 1
          %s360 = scalar_select %p359, %s34, 1
          %s361 = smul.addr %s358, 2
          %s362 = sadd.s32 %s360, %s361
          %s363 = smul.addr %s362, 4
          %s364 = scalar_lea.vmem %s0, %s363
        $region32: #{tpu_custom_call.1} parent=27 // pred_fallthru
          _
        // Predicated region
        $region33: #{tpu_custom_call.1} parent=27 // pred_check
          %p365 = pneg %p135
        $region34: #{tpu_custom_call.1} parent=27 // pred_check_branch
          %367 = sbr.rel (%p365) target = $region36
        $region35: #{tpu_custom_call.1} parent=27 // pred_region
          %s368 = smul.u32 16, %s35
          %p369 = scmp.lt.s32.totalorder %s368, 31
          %s370 = scalar_select %p369, %s368, 31
          %s371 = smul.addr %s370, 8
          %s372 = scalar_lea.vmem %s3, %s371
          %s373 = smul.u32 16, %s35
        $region36: #{tpu_custom_call.1} parent=27 // pred_fallthru
          _
        // Predicated region
        $region37: #{tpu_custom_call.1} parent=27 // pred_check
          %p374 = pneg %p161
        $region38: #{tpu_custom_call.1} parent=27 // pred_check_branch
          %376 = sbr.rel (%p374) target = $region40
        $region39: #{tpu_custom_call.1} parent=27 // pred_region
          %s377 = smul.u32 16, %s35
          %p378 = scmp.lt.s32.totalorder %s377, 31
          %s379 = scalar_select %p378, %s377, 31
          %s380 = smul.addr %s379, 8
          %s381 = scalar_lea.vmem %s4, %s380
          %s382 = smul.u32 16, %s35
        $region40: #{tpu_custom_call.1} parent=27 // pred_fallthru
          _
        // Predicated region
        $region41: #{tpu_custom_call.1} parent=27 // pred_check
          %p383 = pneg %p187
        $region42: #{tpu_custom_call.1} parent=27 // pred_check_branch
          %385 = sbr.rel (%p383) target = $region44
        $region43: #{tpu_custom_call.1} parent=27 // pred_region
          %s386 = sand.u32 %s177, 1
          %s387 = sand.u32 %s177, 1
          %s388 = smul.addr %s387, 40
          %s389 = scalar_lea.vmem [#allocation5], %s388
          %s390 = smul.addr %s35, 8
          %s391 = scalar_lea.vmem %s5, %s390
          // Predicated region
          $region45: #{tpu_custom_call.1} parent=43 // pred_check
            _
          $region46: #{tpu_custom_call.1} parent=43 // pred_check_branch
            %393 = sbr.rel (0) target = $region48
          $region47: #{tpu_custom_call.1} parent=43 // pred_region
            // Predicated region
            $region49: #{tpu_custom_call.1} parent=47 // pred_check
              _
            $region50: #{tpu_custom_call.1} parent=47 // pred_check_branch
              %395 = sbr.rel (0) target = $region52
            $region51: #{tpu_custom_call.1} parent=47 // pred_region
              // Predicated region
              $region64: #{tpu_custom_call.1} parent=51 // pred_check
                _
              $region65: #{tpu_custom_call.1} parent=51 // pred_check_branch
                %419 = sbr.rel (0) target = $region67
              $region66: #{tpu_custom_call.1} parent=51 // pred_region
                loop: start=0, step=1, limit=1
                $region68: #{tpu_custom_call.1} parent=66 // loop_pre_header
                  _
                $region69: #{tpu_custom_call.1} parent=66 // loop_header
                  %s421 = sphi 0, %s425
                  %p422 = scmp.ge.s32.totalorder %s421, 1
                  %s426 = sphi %s391, %s391
                  %s427 = sphi %s389, %s389
                $region70: #{tpu_custom_call.1} parent=66 // loop_header_branch
                  %424 = sbr.rel (%p422) target = $region74
                $region71: #{tpu_custom_call.1} parent=66 // loop_body
                  %v428 = vld [vmem:[%s426] sm:$0xff]
                  %429 = vst [vmem:[%s427] sm:$0xff] %v428
                  %v430 = vld [vmem:[%s426 + $0x10] sm:$0xff]
                  %431 = vst [vmem:[%s427 + $0x8] sm:$0xff] %v430
                  %v432 = vld [vmem:[%s426 + $0x20] sm:$0xff]
                  %433 = vst [vmem:[%s427 + $0x10] sm:$0xff] %v432
                  %v434 = vld [vmem:[%s426 + $0x30] sm:$0xff]
                  %435 = vst [vmem:[%s427 + $0x18] sm:$0xff] %v434
                  %v436 = vld [vmem:[%s426 + $0x40] sm:$0xff]
                  %437 = vst [vmem:[%s427 + $0x20] sm:$0xff] %v436
                $region72: #{tpu_custom_call.1} parent=66 // loop_footer
                  %s425 = sadd.s32 1, %s421
                $region73: #{tpu_custom_call.1} parent=66 // loop_footer_branch
                  %420 = sbr.rel target = $region69
                $region74: #{tpu_custom_call.1} parent=66 // loop_exit
                  _
              $region67: #{tpu_custom_call.1} parent=51 // pred_fallthru
                _
              // Predicated region
              $region75: #{tpu_custom_call.1} parent=51 // pred_check
                _
              $region76: #{tpu_custom_call.1} parent=51 // pred_check_branch
                %439 = sbr.rel target = $region78
              $region77: #{tpu_custom_call.1} parent=51 // pred_region
                _
              $region78: #{tpu_custom_call.1} parent=51 // pred_fallthru
                _
            $region52: #{tpu_custom_call.1} parent=47 // pred_fallthru
              _
            // Predicated region
            $region53: #{tpu_custom_call.1} parent=47 // pred_check
              _
            $region54: #{tpu_custom_call.1} parent=47 // pred_check_branch
              %397 = sbr.rel target = $region56
            $region55: #{tpu_custom_call.1} parent=47 // pred_region
              %s399 = ssub.s32 256, 1
              loop: start=0, step=1, limit=1
              $region57: #{tpu_custom_call.1} parent=55 // loop_pre_header
                _
              $region58: #{tpu_custom_call.1} parent=55 // loop_header
                %s401 = sphi 0, %s405
                %p402 = scmp.ge.s32.totalorder %s401, 1
                %s406 = sphi %s391, %s391
                %s407 = sphi %s389, %s389
              $region59: #{tpu_custom_call.1} parent=55 // loop_header_branch
                %404 = sbr.rel (%p402) target = $region63
              $region60: #{tpu_custom_call.1} parent=55 // loop_body
                %v408 = vld [vmem:[%s406] sm:%s399]
                %409 = vst [vmem:[%s407] sm:%s399] %v408
                %v410 = vld [vmem:[%s406 + $0x10] sm:%s399]
                %411 = vst [vmem:[%s407 + $0x8] sm:%s399] %v410
                %v412 = vld [vmem:[%s406 + $0x20] sm:%s399]
                %413 = vst [vmem:[%s407 + $0x10] sm:%s399] %v412
                %v414 = vld [vmem:[%s406 + $0x30] sm:%s399]
                %415 = vst [vmem:[%s407 + $0x18] sm:%s399] %v414
                %v416 = vld [vmem:[%s406 + $0x40] sm:%s399]
                %417 = vst [vmem:[%s407 + $0x20] sm:%s399] %v416
              $region61: #{tpu_custom_call.1} parent=55 // loop_footer
                %s405 = sadd.s32 1, %s401
              $region62: #{tpu_custom_call.1} parent=55 // loop_footer_branch
                %400 = sbr.rel target = $region58
              $region63: #{tpu_custom_call.1} parent=55 // loop_exit
                _
            $region56: #{tpu_custom_call.1} parent=47 // pred_fallthru
              _
          $region48: #{tpu_custom_call.1} parent=43 // pred_fallthru
            _
          %440 = vnop
        $region44: #{tpu_custom_call.1} parent=27 // pred_fallthru
          _
      $region28: #{tpu_custom_call.1} parent=5 // pred_fallthru
        _
      %p441 = scmp.le.s32.totalorder 1, %s26
      %p442 = scmp.lt.s32.totalorder %s26, 9
      %p443 = pnand %p441, %p442
      %p444 = pneg %p443
      // Predicated region
      $region79: #{tpu_custom_call.1} parent=5 // pred_check
        _
      $region80: #{tpu_custom_call.1} parent=5 // pred_check_branch
        %446 = sbr.rel (%p443) target = $region82
      $region81: #{tpu_custom_call.1} parent=5 // pred_region
        %s447 = ssub.s32 %s26, 1
        %s448 = sand.u32 %s180, 1
        %s449 = sand.u32 %s180, 1
        %s450 = smul.addr %s449, 40
        %s451 = scalar_lea.vmem [#allocation5], %s450
        // Predicated region
        $region83: #{tpu_custom_call.1} parent=81 // pred_check
          %p452 = pneg %p193
        $region84: #{tpu_custom_call.1} parent=81 // pred_check_branch
          %454 = sbr.rel (%p452) target = $region86
        $region85: #{tpu_custom_call.1} parent=81 // pred_region
          _
        $region86: #{tpu_custom_call.1} parent=81 // pred_fallthru
          _
        %p455 = scmp.lt.s32.totalorder %s36, 1
        %s456 = scalar_select %p455, %s36, 1
        %p457 = scmp.lt.s32.totalorder %s37, 1
        %s458 = scalar_select %p457, %s37, 1
        %s459 = smul.addr %s456, 2
        %s460 = sadd.s32 %s458, %s459
        %s461 = smul.addr %s460, 4
        %s462 = scalar_lea.vmem %s0, %s461
        %p463 = pneg %p73
        %p464 = pneg %p70
        %p465 = pneg %p94
        %p466 = pneg %p91
        %p467 = pneg %p115
        %p468 = pneg %p112
        %s469 = smul.u32 16, %s38
        %p470 = scmp.lt.s32.totalorder %s469, 31
        %s471 = scalar_select %p470, %s469, 31
        %s472 = smul.addr %s471, 8
        %s473 = scalar_lea.vmem %s3, %s472
        %p474 = pneg %p141
        %p475 = pneg %p138
        %s476 = smul.u32 16, %s38
        %p477 = scmp.lt.s32.totalorder %s476, 31
        %s478 = scalar_select %p477, %s476, 31
        %s479 = smul.addr %s478, 8
        %s480 = scalar_lea.vmem %s4, %s479
        %p481 = pneg %p167
        %p482 = pneg %p164
        %s483 = sand.u32 %s180, 1
        %s484 = sand.u32 %s180, 1
        %s485 = smul.addr %s484, 40
        %s486 = scalar_lea.vmem [#allocation5], %s485
        %p487 = pneg %p193
        %p488 = pneg %p190
        %p489 = pneg %p214
        %p490 = pneg %p211
        %p491 = pneg %p242
        %p492 = pneg %p239
        %s493 = sand.u32 %s229, 1
        %s494 = scalar_lea.sflag [#allocation7], %s493
        %s495 = sand.u32 %s229, 1
        %s496 = smul.addr %s495, 32
        %s497 = scalar_lea.vmem [#allocation6], %s496
        %p498 = pneg %p270
        %p499 = pneg %p267
        %s500 = sand.u32 %s31, 1
        %s501 = scalar_lea.sflag [#allocation9], %s500
        %s502 = sand.u32 %s257, 1
        %s503 = smul.addr %s502, 32
        %s504 = scalar_lea.vmem [#allocation8], %s503
        %p505 = pneg %p298
        %p506 = pneg %p295
        %s507 = sand.u32 %s31, 1
        %s508 = scalar_lea.sflag [#allocation9], %s507
        %s509 = sand.u32 %s285, 1
        %s510 = smul.addr %s509, 4
        %s511 = scalar_lea.vmem [#allocation10], %s510
        %p512 = pneg %p326
        %p513 = pneg %p323
        %s514 = sand.u32 %s313, 1
        %s515 = scalar_lea.sflag [#allocation12], %s514
        %s516 = sand.u32 %s313, 1
        %s517 = scalar_lea.vmem [#allocation11], %s516
        %p518 = scmp.lt.s32.totalorder %s36, 1
        %s519 = scalar_select %p518, %s36, 1
        %p520 = scmp.lt.s32.totalorder %s37, 1
        %s521 = scalar_select %p520, %s37, 1
        %s522 = smul.addr %s519, 2
        %s523 = sadd.s32 %s521, %s522
        %s524 = smul.addr %s523, 4
        %s525 = scalar_lea.vmem %s0, %s524
        %s526 = smul.u32 16, %s38
        %p527 = scmp.lt.s32.totalorder %s526, 31
        %s528 = scalar_select %p527, %s526, 31
        %s529 = smul.addr %s528, 8
        %s530 = scalar_lea.vmem %s3, %s529
        %s531 = smul.u32 16, %s38
        %s532 = smul.u32 16, %s38
        %p533 = scmp.lt.s32.totalorder %s532, 31
        %s534 = scalar_select %p533, %s532, 31
        %s535 = smul.addr %s534, 8
        %s536 = scalar_lea.vmem %s4, %s535
        %s537 = smul.u32 16, %s38
        %v538 = vld [vmem:[%s525] sm:$0xf]
        %p539 = scmp.eq.s32.totalorder %s38, 0
        // Predicated region
        $region87: #{tpu_custom_call.1} parent=81 // pred_check
          %p540 = pneg %p539
        $region88: #{tpu_custom_call.1} parent=81 // pred_check_branch
          %542 = sbr.rel (%p540) target = $region90
        $region89: #{tpu_custom_call.1} parent=81 // pred_region
          %543 = vst [vmem:[#allocation2] sm:$0x1] inf
          %544 = vst [vmem:[#allocation3] sm:$0x1] 0
          %545 = vst [vmem:[#allocation4] sm:$0xff] 0.0
          %546 = vst [vmem:[#allocation4 + $0x8] sm:$0xff] 0.0
          %547 = vst [vmem:[#allocation4 + $0x10] sm:$0xff] 0.0
          %548 = vst [vmem:[#allocation4 + $0x18] sm:$0xff] 0.0
          %549 = vst [vmem:[#allocation4 + $0x20] sm:$0xf] 0.0
        $region90: #{tpu_custom_call.1} parent=81 // pred_fallthru
          _
        %v550 = vld [vmem:[%s530] sm:$0xff]
        %v551 = vld [vmem:[%s530 + $0x8] sm:$0xff]
        %v552 = vld [vmem:[%s530 + $0x10] sm:$0xff]
        %v553 = vld [vmem:[%s530 + $0x18] sm:$0xff]
        %v554 = vld [vmem:[%s530 + $0x20] sm:$0xff]
        %v555 = vld [vmem:[%s530 + $0x28] sm:$0xff]
        %v556 = vld [vmem:[%s530 + $0x30] sm:$0xff]
        %v557 = vld [vmem:[%s530 + $0x38] sm:$0xff]
        %v558 = vld [vmem:[%s530 + $0x40] sm:$0xff]
        %v559 = vld [vmem:[%s530 + $0x48] sm:$0xff]
        %v560 = vld [vmem:[%s530 + $0x50] sm:$0xff]
        %v561 = vld [vmem:[%s530 + $0x58] sm:$0xff]
        %v562 = vld [vmem:[%s530 + $0x60] sm:$0xff]
        %v563 = vld [vmem:[%s530 + $0x68] sm:$0xff]
        %v564 = vld [vmem:[%s530 + $0x70] sm:$0xff]
        %v565 = vld [vmem:[%s530 + $0x78] sm:$0xff]
        %v566 = vld [vmem:[%s536] sm:$0xff]
        %v567 = vld [vmem:[%s536 + $0x8] sm:$0xff]
        %v568 = vld [vmem:[%s536 + $0x10] sm:$0xff]
        %v569 = vld [vmem:[%s536 + $0x18] sm:$0xff]
        %v570 = vld [vmem:[%s536 + $0x20] sm:$0xff]
        %v571 = vld [vmem:[%s536 + $0x28] sm:$0xff]
        %v572 = vld [vmem:[%s536 + $0x30] sm:$0xff]
        %v573 = vld [vmem:[%s536 + $0x38] sm:$0xff]
        %v574 = vld [vmem:[%s536 + $0x40] sm:$0xff]
        %v575 = vld [vmem:[%s536 + $0x48] sm:$0xff]
        %v576 = vld [vmem:[%s536 + $0x50] sm:$0xff]
        %v577 = vld [vmem:[%s536 + $0x58] sm:$0xff]
        %v578 = vld [vmem:[%s536 + $0x60] sm:$0xff]
        %v579 = vld [vmem:[%s536 + $0x68] sm:$0xff]
        %v580 = vld [vmem:[%s536 + $0x70] sm:$0xff]
        %v581 = vld [vmem:[%s536 + $0x78] sm:$0xff]
        %vm582 = vcmask 31744
        %v584 = vsel %vm582, %v550, 0
        %v587 = vsel %vm582, %v551, 0
        %v590 = vsel %vm582, %v552, 0
        %v593 = vsel %vm582, %v553, 0
        %v596 = vsel %vm582, %v554, 0
        %v599 = vsel %vm582, %v555, 0
        %v602 = vsel %vm582, %v556, 0
        %v605 = vsel %vm582, %v557, 0
        %v608 = vsel %vm582, %v558, 0
        %v611 = vsel %vm582, %v559, 0
        %v614 = vsel %vm582, %v560, 0
        %v617 = vsel %vm582, %v561, 0
        %v620 = vsel %vm582, %v562, 0
        %v623 = vsel %vm582, %v563, 0
        %v626 = vsel %vm582, %v564, 0
        %v629 = vsel %vm582, %v565, 0
        %vm631 = vcmask 1043456
        %v633 = vsel %vm631, %v538, 0
        %635 = vmatpush.msra.mxu0 0.0
        %636 = vmatpush.msra.mxu0 0.0
        %637 = vmatpush.msra.mxu0 0.0
        %638 = vmatpush.msra.mxu0 0.0
        %639 = vmatpush.msra.mxu0 0.0
        %640 = vmatpush.msra.mxu0 0.0
        %641 = vmatpush.msra.mxu0 0.0
        %642 = vmatpush.msra.mxu0 0.0
        %643 = vmatpush.msra.mxu0 0.0
        %644 = vmatpush.msra.mxu0 0.0
        %645 = vmatpush.msra.mxu0 0.0
        %646 = vmatpush.msra.mxu0 0.0
        %647 = vmatpush.msra.mxu0 0.0
        %648 = vmatpush.msra.mxu0 0.0
        %649 = vmatpush.msra.mxu0 0.0
        %650 = vmatpush.msra.mxu0 %v633
        %651 = vmatmul.f32.gmra.mxu0 %v584
        %v652 = vpop.f32.mrf.mxu0
        %v653 = vadd.f32 0.0, %v652
        %654 = vmatmul.f32.gmra.mxu0 %v587
        %v655 = vpop.f32.mrf.mxu0
        %v656 = vadd.f32 0.0, %v655
        %657 = vmatmul.f32.gmra.mxu0 %v590
        %v658 = vpop.f32.mrf.mxu0
        %v659 = vadd.f32 0.0, %v658
        %660 = vmatmul.f32.gmra.mxu0 %v593
        %v661 = vpop.f32.mrf.mxu0
        %v662 = vadd.f32 0.0, %v661
        %663 = vmatmul.f32.gmra.mxu0 %v596
        %v664 = vpop.f32.mrf.mxu0
        %v665 = vadd.f32 0.0, %v664
        %666 = vmatmul.f32.gmra.mxu0 %v599
        %v667 = vpop.f32.mrf.mxu0
        %v668 = vadd.f32 0.0, %v667
        %669 = vmatmul.f32.gmra.mxu0 %v602
        %v670 = vpop.f32.mrf.mxu0
        %v671 = vadd.f32 0.0, %v670
        %672 = vmatmul.f32.gmra.mxu0 %v605
        %v673 = vpop.f32.mrf.mxu0
        %v674 = vadd.f32 0.0, %v673
        %675 = vmatmul.f32.gmra.mxu0 %v608
        %v676 = vpop.f32.mrf.mxu0
        %v677 = vadd.f32 0.0, %v676
        %678 = vmatmul.f32.gmra.mxu0 %v611
        %v679 = vpop.f32.mrf.mxu0
        %v680 = vadd.f32 0.0, %v679
        %681 = vmatmul.f32.gmra.mxu0 %v614
        %v682 = vpop.f32.mrf.mxu0
        %v683 = vadd.f32 0.0, %v682
        %684 = vmatmul.f32.gmra.mxu0 %v617
        %v685 = vpop.f32.mrf.mxu0
        %v686 = vadd.f32 0.0, %v685
        %687 = vmatmul.f32.gmra.mxu0 %v620
        %v688 = vpop.f32.mrf.mxu0
        %v689 = vadd.f32 0.0, %v688
        %690 = vmatmul.f32.gmra.mxu0 %v623
        %v691 = vpop.f32.mrf.mxu0
        %v692 = vadd.f32 0.0, %v691
        %693 = vmatmul.f32.gmra.mxu0 %v626
        %v694 = vpop.f32.mrf.mxu0
        %v695 = vadd.f32 0.0, %v694
        %696 = vmatmul.f32.gmra.mxu0 %v629
        %v697 = vpop.f32.mrf.mxu0
        %v698 = vadd.f32 0.0, %v697
        %699 = vdwg.mxu0
        %701 = vset.pattern.permute.xlu0 0
        %702 = vperm.xlu0 %701, %v566
        %v703 = vpop.permute.xlu0 %702
        %706 = vset.pattern.permute.xlu0 0
        %707 = vperm.xlu0 %706, %v567
        %v708 = vpop.permute.xlu0 %707
        %711 = vset.pattern.permute.xlu0 0
        %712 = vperm.xlu0 %711, %v568
        %v713 = vpop.permute.xlu0 %712
        %716 = vset.pattern.permute.xlu0 0
        %717 = vperm.xlu0 %716, %v569
        %v718 = vpop.permute.xlu0 %717
        %721 = vset.pattern.permute.xlu0 0
        %722 = vperm.xlu0 %721, %v570
        %v723 = vpop.permute.xlu0 %722
        %726 = vset.pattern.permute.xlu0 0
        %727 = vperm.xlu0 %726, %v571
        %v728 = vpop.permute.xlu0 %727
        %731 = vset.pattern.permute.xlu0 0
        %732 = vperm.xlu0 %731, %v572
        %v733 = vpop.permute.xlu0 %732
        %736 = vset.pattern.permute.xlu0 0
        %737 = vperm.xlu0 %736, %v573
        %v738 = vpop.permute.xlu0 %737
        %741 = vset.pattern.permute.xlu0 0
        %742 = vperm.xlu0 %741, %v574
        %v743 = vpop.permute.xlu0 %742
        %746 = vset.pattern.permute.xlu0 0
        %747 = vperm.xlu0 %746, %v575
        %v748 = vpop.permute.xlu0 %747
        %751 = vset.pattern.permute.xlu0 0
        %752 = vperm.xlu0 %751, %v576
        %v753 = vpop.permute.xlu0 %752
        %756 = vset.pattern.permute.xlu0 0
        %757 = vperm.xlu0 %756, %v577
        %v758 = vpop.permute.xlu0 %757
        %761 = vset.pattern.permute.xlu0 0
        %762 = vperm.xlu0 %761, %v578
        %v763 = vpop.permute.xlu0 %762
        %766 = vset.pattern.permute.xlu0 0
        %767 = vperm.xlu0 %766, %v579
        %v768 = vpop.permute.xlu0 %767
        %771 = vset.pattern.permute.xlu0 0
        %772 = vperm.xlu0 %771, %v580
        %v773 = vpop.permute.xlu0 %772
        %776 = vset.pattern.permute.xlu0 0
        %777 = vperm.xlu0 %776, %v581
        %v778 = vpop.permute.xlu0 %777
        %v780 = vadd.f32 %v703, %v653
        %v781 = vadd.f32 %v708, %v656
        %v782 = vadd.f32 %v713, %v659
        %v783 = vadd.f32 %v718, %v662
        %v784 = vadd.f32 %v723, %v665
        %v785 = vadd.f32 %v728, %v668
        %v786 = vadd.f32 %v733, %v671
        %v787 = vadd.f32 %v738, %v674
        %v788 = vadd.f32 %v743, %v677
        %v789 = vadd.f32 %v748, %v680
        %v790 = vadd.f32 %v753, %v683
        %v791 = vadd.f32 %v758, %v686
        %v792 = vadd.f32 %v763, %v689
        %v793 = vadd.f32 %v768, %v692
        %v794 = vadd.f32 %v773, %v695
        %v795 = vadd.f32 %v778, %v698
        %v796 = vlaneseq
        %v797 = vshrl.u32 %v796, 7
        %v798 = vadd.s32 %v797, 8
        %v799 = vadd.s32 %v797, 16
        %v800 = vadd.s32 %v797, 24
        %v801 = vadd.s32 %v797, 32
        %v802 = vadd.s32 %v797, 40
        %v803 = vadd.s32 %v797, 48
        %v804 = vadd.s32 %v797, 56
        %v805 = vadd.s32 %v797, 64
        %v806 = vadd.s32 %v797, 72
        %v807 = vadd.s32 %v797, 80
        %v808 = vadd.s32 %v797, 88
        %v809 = vadd.s32 %v797, 96
        %v810 = vadd.s32 %v797, 104
        %v811 = vadd.s32 %v797, 112
        %v812 = vadd.s32 %v797, 120
        %v813 = vmin.f32 %v780, %v784
        %v814 = vmin.f32 %v781, %v785
        %v815 = vmin.f32 %v782, %v786
        %v816 = vmin.f32 %v783, %v787
        %v817 = vmin.f32 %v813, %v788
        %v818 = vmin.f32 %v814, %v789
        %v819 = vmin.f32 %v815, %v790
        %v820 = vmin.f32 %v816, %v791
        %v821 = vmin.f32 %v817, %v792
        %v822 = vmin.f32 %v818, %v793
        %v823 = vmin.f32 %v819, %v794
        %v824 = vmin.f32 %v820, %v795
        %v825 = vmin.f32 %v821, %v822
        %v826 = vmin.f32 %v823, %v824
        %v827 = vmin.f32 %v825, %v826
        %v828 = vrot.slane %v827, 4
        %v829 = vmin.f32 %v827, %v828
        %v830 = vrot.slane %v829, 2
        %v831 = vmin.f32 %v829, %v830
        %v832 = vrot.slane %v831, 1
        %v833 = vmin.f32 %v831, %v832
        %vm834 = vcmp.eq.f32.partialorder %v780, %v833
        %vm835 = vcmp.eq.f32.partialorder %v781, %v833
        %vm836 = vcmp.eq.f32.partialorder %v782, %v833
        %vm837 = vcmp.eq.f32.partialorder %v783, %v833
        %vm838 = vcmp.eq.f32.partialorder %v784, %v833
        %vm839 = vcmp.eq.f32.partialorder %v785, %v833
        %vm840 = vcmp.eq.f32.partialorder %v786, %v833
        %vm841 = vcmp.eq.f32.partialorder %v787, %v833
        %vm842 = vcmp.eq.f32.partialorder %v788, %v833
        %vm843 = vcmp.eq.f32.partialorder %v789, %v833
        %vm844 = vcmp.eq.f32.partialorder %v790, %v833
        %vm845 = vcmp.eq.f32.partialorder %v791, %v833
        %vm846 = vcmp.eq.f32.partialorder %v792, %v833
        %vm847 = vcmp.eq.f32.partialorder %v793, %v833
        %vm848 = vcmp.eq.f32.partialorder %v794, %v833
        %vm849 = vcmp.eq.f32.partialorder %v795, %v833
        %v850 = vsel %vm834, %v797, 128
        %v851 = vsel %vm835, %v798, 128
        %v852 = vsel %vm836, %v799, 128
        %v853 = vsel %vm837, %v800, 128
        %v854 = vsel %vm838, %v801, 128
        %v855 = vsel %vm839, %v802, 128
        %v856 = vsel %vm840, %v803, 128
        %v857 = vsel %vm841, %v804, 128
        %v858 = vsel %vm842, %v805, 128
        %v859 = vsel %vm843, %v806, 128
        %v860 = vsel %vm844, %v807, 128
        %v861 = vsel %vm845, %v808, 128
        %v862 = vsel %vm846, %v809, 128
        %v863 = vsel %vm847, %v810, 128
        %v864 = vsel %vm848, %v811, 128
        %v865 = vsel %vm849, %v812, 128
        %vm866 = vcmp.lt.s32.totalorder %v850, %v854
        %v867 = vsel %vm866, %v850, %v854
        %vm868 = vcmp.lt.s32.totalorder %v851, %v855
        %v869 = vsel %vm868, %v851, %v855
        %vm870 = vcmp.lt.s32.totalorder %v852, %v856
        %v871 = vsel %vm870, %v852, %v856
        %vm872 = vcmp.lt.s32.totalorder %v853, %v857
        %v873 = vsel %vm872, %v853, %v857
        %vm874 = vcmp.lt.s32.totalorder %v867, %v858
        %v875 = vsel %vm874, %v867, %v858
        %vm876 = vcmp.lt.s32.totalorder %v869, %v859
        %v877 = vsel %vm876, %v869, %v859
        %vm878 = vcmp.lt.s32.totalorder %v871, %v860
        %v879 = vsel %vm878, %v871, %v860
        %vm880 = vcmp.lt.s32.totalorder %v873, %v861
        %v881 = vsel %vm880, %v873, %v861
        %vm882 = vcmp.lt.s32.totalorder %v875, %v862
        %v883 = vsel %vm882, %v875, %v862
        %vm884 = vcmp.lt.s32.totalorder %v877, %v863
        %v885 = vsel %vm884, %v877, %v863
        %vm886 = vcmp.lt.s32.totalorder %v879, %v864
        %v887 = vsel %vm886, %v879, %v864
        %vm888 = vcmp.lt.s32.totalorder %v881, %v865
        %v889 = vsel %vm888, %v881, %v865
        %vm890 = vcmp.lt.s32.totalorder %v883, %v885
        %v891 = vsel %vm890, %v883, %v885
        %vm892 = vcmp.lt.s32.totalorder %v887, %v889
        %v893 = vsel %vm892, %v887, %v889
        %vm894 = vcmp.lt.s32.totalorder %v891, %v893
        %v895 = vsel %vm894, %v891, %v893
        %v896 = vrot.slane %v895, 4
        %vm897 = vcmp.lt.s32.totalorder %v895, %v896
        %v898 = vsel %vm897, %v895, %v896
        %v899 = vrot.slane %v898, 2
        %vm900 = vcmp.lt.s32.totalorder %v898, %v899
        %v901 = vsel %vm900, %v898, %v899
        %v902 = vrot.slane %v901, 1
        %vm903 = vcmp.lt.s32.totalorder %v901, %v902
        %v904 = vsel %vm903, %v901, %v902
        %vm905 = vcmp.eq.s32.totalorder %v797, %v904
        %vm906 = vcmp.eq.s32.totalorder %v798, %v904
        %vm907 = vcmp.eq.s32.totalorder %v799, %v904
        %vm908 = vcmp.eq.s32.totalorder %v800, %v904
        %vm909 = vcmp.eq.s32.totalorder %v801, %v904
        %vm910 = vcmp.eq.s32.totalorder %v802, %v904
        %vm911 = vcmp.eq.s32.totalorder %v803, %v904
        %vm912 = vcmp.eq.s32.totalorder %v804, %v904
        %vm913 = vcmp.eq.s32.totalorder %v805, %v904
        %vm914 = vcmp.eq.s32.totalorder %v806, %v904
        %vm915 = vcmp.eq.s32.totalorder %v807, %v904
        %vm916 = vcmp.eq.s32.totalorder %v808, %v904
        %vm917 = vcmp.eq.s32.totalorder %v809, %v904
        %vm918 = vcmp.eq.s32.totalorder %v810, %v904
        %vm919 = vcmp.eq.s32.totalorder %v811, %v904
        %vm920 = vcmp.eq.s32.totalorder %v812, %v904
        %v921 = vsel %vm905, 1, 0
        %v922 = vsel %vm906, 1, 0
        %v923 = vsel %vm907, 1, 0
        %v924 = vsel %vm908, 1, 0
        %v925 = vsel %vm909, 1, 0
        %v926 = vsel %vm910, 1, 0
        %v927 = vsel %vm911, 1, 0
        %v928 = vsel %vm912, 1, 0
        %v929 = vsel %vm913, 1, 0
        %v930 = vsel %vm914, 1, 0
        %v931 = vsel %vm915, 1, 0
        %v932 = vsel %vm916, 1, 0
        %v933 = vsel %vm917, 1, 0
        %v934 = vsel %vm918, 1, 0
        %v935 = vsel %vm919, 1, 0
        %v936 = vsel %vm920, 1, 0
        %v937 = vcvt.s32.f32 %v921
        %v938 = vcvt.s32.f32 %v922
        %v939 = vcvt.s32.f32 %v923
        %v940 = vcvt.s32.f32 %v924
        %v941 = vcvt.s32.f32 %v925
        %v942 = vcvt.s32.f32 %v926
        %v943 = vcvt.s32.f32 %v927
        %v944 = vcvt.s32.f32 %v928
        %v945 = vcvt.s32.f32 %v929
        %v946 = vcvt.s32.f32 %v930
        %v947 = vcvt.s32.f32 %v931
        %v948 = vcvt.s32.f32 %v932
        %v949 = vcvt.s32.f32 %v933
        %v950 = vcvt.s32.f32 %v934
        %v951 = vcvt.s32.f32 %v935
        %v952 = vcvt.s32.f32 %v936
        %v953 = vld [vmem:[%s451] sm:$0xff]
        %v954 = vld [vmem:[%s451 + $0x8] sm:$0xff]
        %v955 = vld [vmem:[%s451 + $0x10] sm:$0xff]
        %v956 = vld [vmem:[%s451 + $0x18] sm:$0xff]
        %v957 = vld [vmem:[%s451 + $0x20] sm:$0xf]
        %958 = vmatpush.msra.mxu0 %v952
        %959 = vmatpush.msra.mxu0 %v951
        %960 = vmatpush.msra.mxu0 %v950
        %961 = vmatpush.msra.mxu0 %v949
        %962 = vmatpush.msra.mxu0 %v948
        %963 = vmatpush.msra.mxu0 %v947
        %964 = vmatpush.msra.mxu0 %v946
        %965 = vmatpush.msra.mxu0 %v945
        %966 = vmatpush.msra.mxu0 %v944
        %967 = vmatpush.msra.mxu0 %v943
        %968 = vmatpush.msra.mxu0 %v942
        %969 = vmatpush.msra.mxu0 %v941
        %970 = vmatpush.msra.mxu0 %v940
        %971 = vmatpush.msra.mxu0 %v939
        %972 = vmatpush.msra.mxu0 %v938
        %973 = vmatpush.msra.mxu0 %v937
        %974 = vmatmul.f32.gmra.mxu0 %v953
        %v975 = vpop.f32.mrf.mxu0
        %v976 = vadd.f32 0.0, %v975
        %977 = vmatmul.f32.gmra.mxu0 %v954
        %v978 = vpop.f32.mrf.mxu0
        %v979 = vadd.f32 0.0, %v978
        %980 = vmatmul.f32.gmra.mxu0 %v955
        %v981 = vpop.f32.mrf.mxu0
        %v982 = vadd.f32 0.0, %v981
        %983 = vmatmul.f32.gmra.mxu0 %v956
        %v984 = vpop.f32.mrf.mxu0
        %v985 = vadd.f32 0.0, %v984
        %986 = vmatmul.f32.gmra.mxu0 %v957
        %v987 = vpop.f32.mrf.mxu0
        %v988 = vadd.f32 0.0, %v987
        %989 = vdwg.mxu0
        %v990 = vld [vmem:[#allocation2] sm:$0x1]
        %vm991 = vcmp.lt.f32.partialorder %v833, %v990
        %v992 = vsel %vm991, %v833, %v990
        %993 = vst [vmem:[#allocation2] sm:$0x1] %v992
        %s994 = smul.u32 %s38, 128
        %v995 = vstv %s994
        %v996 = vadd.s32 %v904, %v995
        %v997 = vld [vmem:[#allocation3] sm:$0x1]
        %v998 = vsel %vm991, %v996, %v997
        %999 = vst [vmem:[#allocation3] sm:$0x1] %v998
        %v1000 = vld [vmem:[#allocation4] sm:$0xff]
        %v1001 = vld [vmem:[#allocation4 + $0x8] sm:$0xff]
        %v1002 = vld [vmem:[#allocation4 + $0x10] sm:$0xff]
        %v1003 = vld [vmem:[#allocation4 + $0x18] sm:$0xff]
        %v1004 = vld [vmem:[#allocation4 + $0x20] sm:$0xf]
        %v1005 = vsel %vm991, 1, 0
        %v1006 = vperm.slane %v1005, 0
        %vm1007 = vcmp.eq.s32.totalorder %v1006, 1
        %v1008 = vsel %vm1007, %v976, %v1000
        %v1009 = vsel %vm1007, %v979, %v1001
        %v1010 = vsel %vm1007, %v982, %v1002
        %v1011 = vsel %vm1007, %v985, %v1003
        %v1012 = vsel %vm1007, %v988, %v1004
        %1013 = vst [vmem:[#allocation4] sm:$0xff] %v1008
        %1014 = vst [vmem:[#allocation4 + $0x8] sm:$0xff] %v1009
        %1015 = vst [vmem:[#allocation4 + $0x10] sm:$0xff] %v1010
        %1016 = vst [vmem:[#allocation4 + $0x18] sm:$0xff] %v1011
        %1017 = vst [vmem:[#allocation4 + $0x20] sm:$0xf] %v1012
        %p1018 = scmp.eq.s32.totalorder %s38, 1
        // Predicated region
        $region91: #{tpu_custom_call.1} parent=81 // pred_check
          %p1019 = pneg %p1018
        $region92: #{tpu_custom_call.1} parent=81 // pred_check_branch
          %1021 = sbr.rel (%p1019) target = $region94
        $region93: #{tpu_custom_call.1} parent=81 // pred_region
          %v1022 = vld [vmem:[%s1] sm:$0xff]
          %v1023 = vld [vmem:[%s1 + $0x8] sm:$0xff]
          %v1024 = vld [vmem:[%s1 + $0x10] sm:$0xff]
          %v1025 = vld [vmem:[%s1 + $0x18] sm:$0xff]
          %v1026 = vld [vmem:[%s2] sm:$0xff]
          %v1027 = vld [vmem:[%s2 + $0x8] sm:$0xff]
          %v1028 = vld [vmem:[%s2 + $0x10] sm:$0xff]
          %v1029 = vld [vmem:[%s2 + $0x18] sm:$0xff]
          %1031 = vset.pattern.permute.xlu0 0
          %1032 = vperm.xlu0 %1031, %v1026
          %v1033 = vpop.permute.xlu0 %1032
          %1036 = vset.pattern.permute.xlu0 0
          %1037 = vperm.xlu0 %1036, %v1027
          %v1038 = vpop.permute.xlu0 %1037
          %1041 = vset.pattern.permute.xlu0 0
          %1042 = vperm.xlu0 %1041, %v1028
          %v1043 = vpop.permute.xlu0 %1042
          %1046 = vset.pattern.permute.xlu0 0
          %1047 = vperm.xlu0 %1046, %v1029
          %v1048 = vpop.permute.xlu0 %1047
          %v1051 = vsel %vm582, %v1022, 0
          %v1054 = vsel %vm582, %v1023, 0
          %v1057 = vsel %vm582, %v1024, 0
          %v1060 = vsel %vm582, %v1025, 0
          %1062 = vmatpush.msra.mxu0 0.0
          %1063 = vmatpush.msra.mxu0 0.0
          %1064 = vmatpush.msra.mxu0 0.0
          %1065 = vmatpush.msra.mxu0 0.0
          %1066 = vmatpush.msra.mxu0 0.0
          %1067 = vmatpush.msra.mxu0 0.0
          %1068 = vmatpush.msra.mxu0 0.0
          %1069 = vmatpush.msra.mxu0 0.0
          %1070 = vmatpush.msra.mxu0 0.0
          %1071 = vmatpush.msra.mxu0 0.0
          %1072 = vmatpush.msra.mxu0 0.0
          %1073 = vmatpush.msra.mxu0 0.0
          %1074 = vmatpush.msra.mxu0 0.0
          %1075 = vmatpush.msra.mxu0 0.0
          %1076 = vmatpush.msra.mxu0 0.0
          %1077 = vmatpush.msra.mxu0 %v633
          %1078 = vmatmul.f32.gmra.mxu0 %v1051
          %v1079 = vpop.f32.mrf.mxu0
          %v1080 = vadd.f32 %v1033, %v1079
          %1081 = vmatmul.f32.gmra.mxu0 %v1054
          %v1082 = vpop.f32.mrf.mxu0
          %v1083 = vadd.f32 %v1038, %v1082
          %1084 = vmatmul.f32.gmra.mxu0 %v1057
          %v1085 = vpop.f32.mrf.mxu0
          %v1086 = vadd.f32 %v1043, %v1085
          %1087 = vmatmul.f32.gmra.mxu0 %v1060
          %v1088 = vpop.f32.mrf.mxu0
          %v1089 = vadd.f32 %v1048, %v1088
          %1090 = vdwg.mxu0
          %1091 = vst [vmem:[%s497] sm:$0xff] %v1080
          %1092 = vst [vmem:[%s497 + $0x8] sm:$0xff] %v1083
          %1093 = vst [vmem:[%s497 + $0x10] sm:$0xff] %v1086
          %1094 = vst [vmem:[%s497 + $0x18] sm:$0xff] %v1089
          %v1095 = vld [vmem:[#allocation4] sm:$0xff]
          %v1096 = vld [vmem:[#allocation4 + $0x8] sm:$0xff]
          %v1097 = vld [vmem:[#allocation4 + $0x10] sm:$0xff]
          %v1098 = vld [vmem:[#allocation4 + $0x18] sm:$0xff]
          %1099 = vst [vmem:[%s504] sm:$0xff] %v1095
          %1100 = vst [vmem:[%s504 + $0x8] sm:$0xff] %v1096
          %1101 = vst [vmem:[%s504 + $0x10] sm:$0xff] %v1097
          %1102 = vst [vmem:[%s504 + $0x18] sm:$0xff] %v1098
          %v1103 = vld [vmem:[#allocation4 + $0x20] sm:$0xf]
          %v1104 = vld [vmem:[%s6] sm:$0xf]
          %1106 = vset.pattern.permute.xlu0 0
          %1107 = vperm.xlu0 %1106, %v1104
          %v1108 = vpop.permute.xlu0 %1107
          %v1110 = vadd.f32 %v1103, %v1108
          %1111 = vst [vmem:[%s511] sm:$0xf] %v1110
          %v1112 = vld [vmem:[#allocation3] sm:$0x1]
          %1113 = vst [vmem:[%s517] sm:$0x1] %v1112
        $region94: #{tpu_custom_call.1} parent=81 // pred_fallthru
          _
        %s1114 = sand.u32 %s229, 1
        %s1115 = scalar_lea.sflag [#allocation7], %s1114
        %s1116 = sand.u32 %s229, 1
        %s1117 = smul.addr %s1116, 32
        %s1118 = scalar_lea.vmem [#allocation6], %s1117
        %s1119 = sand.u32 %s31, 1
        %s1120 = scalar_lea.sflag [#allocation9], %s1119
        %s1121 = sand.u32 %s257, 1
        %s1122 = smul.addr %s1121, 32
        %s1123 = scalar_lea.vmem [#allocation8], %s1122
        %s1124 = sand.u32 %s31, 1
        %s1125 = scalar_lea.sflag [#allocation9], %s1124
        %s1126 = sand.u32 %s285, 1
        %s1127 = smul.addr %s1126, 4
        %s1128 = scalar_lea.vmem [#allocation10], %s1127
        %s1129 = sand.u32 %s313, 1
        %s1130 = scalar_lea.sflag [#allocation12], %s1129
        %s1131 = sand.u32 %s313, 1
        %s1132 = scalar_lea.vmem [#allocation11], %s1131
        // Predicated region
        $region95: #{tpu_custom_call.1} parent=81 // pred_check
          %p1133 = pneg %p239
        $region96: #{tpu_custom_call.1} parent=81 // pred_check_branch
          %1135 = sbr.rel (%p1133) target = $region98
        $region97: #{tpu_custom_call.1} parent=81 // pred_region
          %1137 = vsyncadd %s1115, 0
          %s1138 = smul.addr %s36, 8
          %s1139 = sadd.s32 %s37, %s1138
          %s1140 = smul.addr %s1139, 8
          %s1141 = scalar_lea.hbm %s7, %s1140
          %s1142 = sshll.u32 %s1118, 4
          %s1143 = int_to_ptr.vmem [resolvable:$true] %s1142
          %s1144 = sshll.u32 %s1141, 4
          %s1145 = int_to_ptr.hbm [resolvable:$true] %s1144
          %1150 = dma.vmem_to_hbm [thread:$0]  %s1143, 512, %s1145, %s1115, 128, 256, 8
        $region98: #{tpu_custom_call.1} parent=81 // pred_fallthru
          _
        // Predicated region
        $region99: #{tpu_custom_call.1} parent=81 // pred_check
          %p1151 = pneg %p267
        $region100: #{tpu_custom_call.1} parent=81 // pred_check_branch
          %1153 = sbr.rel (%p1151) target = $region102
        $region101: #{tpu_custom_call.1} parent=81 // pred_region
          %1155 = vsyncadd %s1120, 0
          %s1156 = smul.addr %s36, 8
          %s1157 = sadd.s32 %s37, %s1156
          %s1158 = smul.addr %s1157, 8
          %s1159 = scalar_lea.hbm %s8, %s1158
          %s1160 = sshll.u32 %s1123, 4
          %s1161 = int_to_ptr.vmem [resolvable:$true] %s1160
          %s1162 = sshll.u32 %s1159, 4
          %s1163 = int_to_ptr.hbm [resolvable:$true] %s1162
          %1168 = dma.vmem_to_hbm [thread:$0]  %s1161, 512, %s1163, %s1120, 128, 256, 8
        $region102: #{tpu_custom_call.1} parent=81 // pred_fallthru
          _
        // Predicated region
        $region103: #{tpu_custom_call.1} parent=81 // pred_check
          %p1169 = pneg %p295
        $region104: #{tpu_custom_call.1} parent=81 // pred_check_branch
          %1171 = sbr.rel (%p1169) target = $region106
        $region105: #{tpu_custom_call.1} parent=81 // pred_region
          %1173 = vsyncadd %s1125, 0
          %s1174 = smul.addr %s36, 2
          %s1175 = sadd.s32 %s37, %s1174
          %s1176 = smul.addr %s1175, 4
          %s1177 = scalar_lea.hbm %s9, %s1176
          %s1179 = sshll.u32 %s1128, 4
          %s1180 = int_to_ptr.vmem [resolvable:$true] %s1179
          %s1181 = sshll.u32 %s1177, 4
          %s1182 = int_to_ptr.hbm [resolvable:$true] %s1181
          %1184 = dma.vmem_to_hbm [thread:$0]  %s1180, 64, %s1182, %s1125
        $region106: #{tpu_custom_call.1} parent=81 // pred_fallthru
          _
        // Predicated region
        $region107: #{tpu_custom_call.1} parent=81 // pred_check
          %p1185 = pneg %p323
        $region108: #{tpu_custom_call.1} parent=81 // pred_check_branch
          %1187 = sbr.rel (%p1185) target = $region110
        $region109: #{tpu_custom_call.1} parent=81 // pred_region
          %1189 = vsyncadd %s1130, 0
          %s1190 = smul.addr %s36, 2
          %s1191 = sadd.s32 %s37, %s1190
          %s1192 = scalar_lea.hbm %s10, %s1191
          %s1194 = sshll.u32 %s1132, 4
          %s1195 = int_to_ptr.vmem [resolvable:$true] %s1194
          %s1196 = sshll.u32 %s1192, 4
          %s1197 = int_to_ptr.hbm [resolvable:$true] %s1196
          %1199 = dma.vmem_to_hbm [thread:$0]  %s1195, 16, %s1197, %s1130
        $region110: #{tpu_custom_call.1} parent=81 // pred_fallthru
          _
      $region82: #{tpu_custom_call.1} parent=5 // pred_fallthru
        _
      %p1200 = scmp.le.s32.totalorder 2, %s26
      // Predicated region
      $region111: #{tpu_custom_call.1} parent=5 // pred_check
        %p1201 = pneg %p1200
      $region112: #{tpu_custom_call.1} parent=5 // pred_check_branch
        %1203 = sbr.rel (%p1201) target = $region114
      $region113: #{tpu_custom_call.1} parent=5 // pred_region
        %s1204 = ssub.s32 %s26, 2
        // Predicated region
        $region115: #{tpu_custom_call.1} parent=113 // pred_check
          %p1205 = pneg %p245
        $region116: #{tpu_custom_call.1} parent=113 // pred_check_branch
          %1207 = sbr.rel (%p1205) target = $region118
        $region117: #{tpu_custom_call.1} parent=113 // pred_region
          %s1208 = sand.u32 %s230, 1
          %s1209 = scalar_lea.sflag [#allocation7], %s1208
          %s1210 = sand.u32 %s230, 1
          %s1211 = smul.addr %s1210, 32
          %s1212 = scalar_lea.vmem [#allocation6], %s1211
          %1214 = dma.done %s1209, 512
        $region118: #{tpu_custom_call.1} parent=113 // pred_fallthru
          _
        // Predicated region
        $region119: #{tpu_custom_call.1} parent=113 // pred_check
          %p1215 = pneg %p273
        $region120: #{tpu_custom_call.1} parent=113 // pred_check_branch
          %1217 = sbr.rel (%p1215) target = $region122
        $region121: #{tpu_custom_call.1} parent=113 // pred_region
          %s1218 = sand.u32 %s32, 1
          %s1219 = scalar_lea.sflag [#allocation9], %s1218
          %s1220 = sand.u32 %s258, 1
          %s1221 = smul.addr %s1220, 32
          %s1222 = scalar_lea.vmem [#allocation8], %s1221
          %1224 = dma.done %s1219, 512
        $region122: #{tpu_custom_call.1} parent=113 // pred_fallthru
          _
        // Predicated region
        $region123: #{tpu_custom_call.1} parent=113 // pred_check
          %p1225 = pneg %p301
        $region124: #{tpu_custom_call.1} parent=113 // pred_check_branch
          %1227 = sbr.rel (%p1225) target = $region126
        $region125: #{tpu_custom_call.1} parent=113 // pred_region
          %s1228 = sand.u32 %s32, 1
          %s1229 = scalar_lea.sflag [#allocation9], %s1228
          %s1230 = sand.u32 %s286, 1
          %s1231 = smul.addr %s1230, 4
          %s1232 = scalar_lea.vmem [#allocation10], %s1231
          %1234 = dma.done %s1229, 64
        $region126: #{tpu_custom_call.1} parent=113 // pred_fallthru
          _
        // Predicated region
        $region127: #{tpu_custom_call.1} parent=113 // pred_check
          %p1235 = pneg %p329
        $region128: #{tpu_custom_call.1} parent=113 // pred_check_branch
          %1237 = sbr.rel (%p1235) target = $region130
        $region129: #{tpu_custom_call.1} parent=113 // pred_region
          %s1238 = sand.u32 %s314, 1
          %s1239 = scalar_lea.sflag [#allocation12], %s1238
          %s1240 = sand.u32 %s314, 1
          %s1241 = scalar_lea.vmem [#allocation11], %s1240
          %1243 = dma.done %s1239, 16
        $region130: #{tpu_custom_call.1} parent=113 // pred_fallthru
          _
      $region114: #{tpu_custom_call.1} parent=5 // pred_fallthru
        _
    $region6: #{tpu_custom_call.1} parent=1 // loop_footer
      %s30 = sadd.s32 1, %s26
    $region7: #{tpu_custom_call.1} parent=1 // loop_footer_branch
      %25 = sbr.rel target = $region3
    $region8: #{tpu_custom_call.1} parent=1 // loop_exit
      _
    %1244 = vsyncpa [#allocation7], 1
    %s1245 = scalar_lea.sflag [#allocation7], 1
    %1246 = vsyncpa %s1245, 1
    %1247 = vsyncpa [#allocation9], 1
    %s1248 = scalar_lea.sflag [#allocation9], 1
    %1249 = vsyncpa %s1248, 1
    %1250 = vsyncpa [#allocation12], 1
    %s1251 = scalar_lea.sflag [#allocation12], 1
    %1252 = vsyncpa %s1251, 1

// kernel: tpu_custom_call.1
$region0: #{tpu_custom_call.1}
  #allocation0 [shape = 'u32[]', space=smem, size = 0x4, offset = 0x4, fixed_abs, tag = 'smem constant byte address 0x4 - core index']
  #allocation1 [shape = 'u32[72,128]{1,0:T(1,128)}', space=vmem, size = 0x9000, scoped, tag = 'internal scratch']
  #allocation2 [shape = 'f32[1,128]{1,0:T(1,128)}', space=vmem, size = 0x200, scoped, tag = 'scratch operand']
  #allocation3 [shape = 's32[1,128]{1,0:T(1,128)}', space=vmem, size = 0x200, scoped, tag = 'scratch operand']
  #allocation4 [shape = 'f32[36,128]{1,0:T(8,128)}', space=vmem, size = 0x5000, scoped, tag = 'scratch operand']
  %s0 = inlined_call_operand.vmem [shape: f32[2,4,256], index: 0, kind: input, shape index: {}]
  %s1 = inlined_call_operand.vmem [shape: f32[32,4], index: 1, kind: input, shape index: {}]
  %s2 = inlined_call_operand.vmem [shape: f32[32,1], index: 2, kind: input, shape index: {}]
  %s3 = inlined_call_operand.vmem [shape: f32[256,4], index: 3, kind: input, shape index: {}]
  %s4 = inlined_call_operand.vmem [shape: f32[256,1], index: 4, kind: input, shape index: {}]
  %s5 = inlined_call_operand.vmem [shape: f32[36,256], index: 5, kind: input, shape index: {}]
  %s6 = inlined_call_operand.vmem [shape: f32[4,1], index: 6, kind: input, shape index: {}]
  %s7 = inlined_call_operand.hbm [shape: f32[2,32,256], index: 7, kind: output, shape index: {0}]
  %s8 = inlined_call_operand.hbm [shape: f32[2,32,256], index: 8, kind: output, shape index: {1}]
  %s9 = inlined_call_operand.hbm [shape: f32[2,4,256], index: 9, kind: output, shape index: {2}]
  %s10 = inlined_call_operand.hbm [shape: s32[2,1,256], index: 10, kind: output, shape index: {3}]
  %11 = xla_tuple %s7, %s8, %s9, %s10
  %s12 = sld [smem:[#allocation0]]
  $region131: #{tpu_custom_call.1} parent=0
    _
  %s14 = ssub.s32 1, %s12
  %s15 = scalar_select 0, %s14, %s12
  $region1: #{tpu_custom_call.1} parent=0
    #allocation5 [shape = 'u8[40960]{0}', space=vmem, size = 0xa000, scoped, tag = 'input window, operand 5']
    #allocation6 [shape = 'u8[32768]{0}', space=vmem, size = 0x8000, scoped, tag = 'output window, operand 0']
    #allocation7 [shape = 's32[2]{0}', space=sflag, size = 0x8, scoped, tag = 'scoped memory for tpu_custom_call.1']
    #allocation8 [shape = 'u8[32768]{0}', space=vmem, size = 0x8000, scoped, tag = 'output window, operand 1']
    #allocation9 [shape = 's32[2]{0}', space=sflag, size = 0x8, scoped, tag = 'scoped memory for tpu_custom_call.1']
    #allocation10 [shape = 'u8[4096]{0}', space=vmem, size = 0x1000, scoped, tag = 'output window, operand 2']
    #allocation11 [shape = 'u8[1024]{0}', space=vmem, size = 0x400, scoped, tag = 'output window, operand 3']
    #allocation12 [shape = 's32[2]{0}', space=sflag, size = 0x8, scoped, tag = 'scoped memory for tpu_custom_call.1']
    %16 = vsyncpa [#allocation7], 0
    %s17 = scalar_lea.sflag [#allocation7], 1
    %18 = vsyncpa %s17, 0
    %19 = vsyncpa [#allocation9], 0
    %s20 = scalar_lea.sflag [#allocation9], 1
    %21 = vsyncpa %s20, 0
    %22 = vsyncpa [#allocation12], 0
    %s23 = scalar_lea.sflag [#allocation12], 1
    %24 = vsyncpa %s23, 0
    loop: start=0, step=1, limit=10
    $region2: #{tpu_custom_call.1} parent=1 // loop_pre_header
      _
    $region3: #{tpu_custom_call.1} parent=1 // loop_header
      %s26 = sphi 0, %s30
      %p27 = scmp.ge.s32.totalorder %s26, 10
      %s33 = sphi 0, %s52
      %s34 = sphi 0, %s48
      %s35 = sphi 0, %s44
      %s36 = sphi 0, %s33
      %s37 = sphi 0, %s34
      %s38 = sphi 0, %s35
      %s39 = sphi 0, %s36
      %s40 = sphi 0, %s37
      %s41 = sphi 0, %s38
      %s57 = sphi 0, %s59
      %s60 = sphi 0, %s57
      %s61 = sphi 0, %s60
      %s77 = sphi 0, %s61
      %s81 = sphi 0, %s81
      %s83 = sphi 0, %s81
      %s84 = sphi 0, %s83
      %s98 = sphi 0, %s84
      %s102 = sphi 0, %s102
      %s104 = sphi 0, %s102
      %s105 = sphi 0, %s104
      %s119 = sphi 0, %s105
      %s125 = sphi 0, %s127
      %s128 = sphi 0, %s125
      %s129 = sphi 0, %s128
      %s145 = sphi 0, %s129
      %s151 = sphi 0, %s153
      %s154 = sphi 0, %s151
      %s155 = sphi 0, %s154
      %s171 = sphi 0, %s155
      %s177 = sphi 0, %s179
      %s180 = sphi 0, %s177
      %s181 = sphi 0, %s180
      %s197 = sphi 0, %s181
      %s201 = sphi 0, %s201
      %s203 = sphi 0, %s201
      %s204 = sphi 0, %s203
      %s218 = sphi 0, %s204
      %s226 = sphi 0, %s228
      %s229 = sphi 0, %s226
      %s230 = sphi 0, %s229
      %s246 = sphi 0, %s230
      %s254 = sphi 0, %s256
      %s257 = sphi 0, %s254
      %s258 = sphi 0, %s257
      %s274 = sphi 0, %s258
      %s282 = sphi 0, %s284
      %s285 = sphi 0, %s282
      %s286 = sphi 0, %s285
      %s302 = sphi 0, %s286
      %s310 = sphi 0, %s312
      %s313 = sphi 0, %s310
      %s314 = sphi 0, %s313
      %s330 = sphi 0, %s314
    $region4: #{tpu_custom_call.1} parent=1 // loop_header_branch
      %29 = sbr.rel (%p27) target = $region8
    $region5: #{tpu_custom_call.1} parent=1 // loop_body
      %s31 = ssub.s32 %s26, 1
      %s32 = ssub.s32 %s26, 2
      %s42 = sadd.s32 1, %s35
      %p43 = scmp.ge.s32.totalorder %s42, 2
      %s44 = scalar_select %p43, 0, %s42
      %s45 = sadd.s32 1, %s34
      %s46 = scalar_select %p43, %s45, %s34
      %p47 = scmp.ge.s32.totalorder %s46, 2
      %s48 = scalar_select %p47, 0, %s46
      %s49 = sadd.s32 1, %s33
      %s50 = scalar_select %p47, %s49, %s33
      %p51 = scmp.ge.s32.totalorder %s50, 2
      %s52 = scalar_select %p51, 0, %s50
      %s53 = ssub.s32 %s33, %s52
      %s54 = ssub.s32 %s34, %s48
      %s55 = sor.u32 %s53, %s54
      %p56 = scmp.eq.s32.totalorder %s55, 0
      %s58 = sadd.s32 %s57, 1
      %s59 = scalar_select %p56, %s57, %s58
      %p62 = pneg %p56
      %p63 = scmp.eq.s32.totalorder %s26, 7
      %p64 = por %p62, %p63
      %p65 = scmp.ne.s32.totalorder %s57, %s60
      %p66 = scmp.eq.s32.totalorder %s26, 0
      %p67 = por %p65, %p66
      %p68 = scmp.ne.s32.totalorder %s57, %s60
      %p69 = scmp.eq.s32.totalorder %s31, 7
      %p70 = por %p68, %p69
      %p71 = scmp.ne.s32.totalorder %s60, %s61
      %p72 = scmp.eq.s32.totalorder %s31, 0
      %p73 = por %p71, %p72
      %p74 = scmp.ne.s32.totalorder %s60, %s61
      %p75 = scmp.eq.s32.totalorder %s32, 7
      %p76 = por %p74, %p75
      %p78 = scmp.ne.s32.totalorder %s61, %s77
      %p79 = scmp.eq.s32.totalorder %s32, 0
      %p80 = por %p78, %p79
      %s82 = sadd.s32 %s81, 1
      %p85 = scmp.eq.s32.totalorder %s26, 7
      %p86 = scmp.ne.s32.totalorder %s81, %s83
      %p87 = scmp.eq.s32.totalorder %s26, 0
      %p88 = por %p86, %p87
      %p89 = scmp.ne.s32.totalorder %s81, %s83
      %p90 = scmp.eq.s32.totalorder %s31, 7
      %p91 = por %p89, %p90
      %p92 = scmp.ne.s32.totalorder %s83, %s84
      %p93 = scmp.eq.s32.totalorder %s31, 0
      %p94 = por %p92, %p93
      %p95 = scmp.ne.s32.totalorder %s83, %s84
      %p96 = scmp.eq.s32.totalorder %s32, 7
      %p97 = por %p95, %p96
      %p99 = scmp.ne.s32.totalorder %s84, %s98
      %p100 = scmp.eq.s32.totalorder %s32, 0
      %p101 = por %p99, %p100
      %s103 = sadd.s32 %s102, 1
      %p106 = scmp.eq.s32.totalorder %s26, 7
      %p107 = scmp.ne.s32.totalorder %s102, %s104
      %p108 = scmp.eq.s32.totalorder %s26, 0
      %p109 = por %p107, %p108
      %p110 = scmp.ne.s32.totalorder %s102, %s104
      %p111 = scmp.eq.s32.totalorder %s31, 7
      %p112 = por %p110, %p111
      %p113 = scmp.ne.s32.totalorder %s104, %s105
      %p114 = scmp.eq.s32.totalorder %s31, 0
      %p115 = por %p113, %p114
      %p116 = scmp.ne.s32.totalorder %s104, %s105
      %p117 = scmp.eq.s32.totalorder %s32, 7
      %p118 = por %p116, %p117
      %p120 = scmp.ne.s32.totalorder %s105, %s119
      %p121 = scmp.eq.s32.totalorder %s32, 0
      %p122 = por %p120, %p121
      %s123 = ssub.s32 %s35, %s44
      %p124 = scmp.eq.s32.totalorder %s123, 0
      %s126 = sadd.s32 %s125, 1
      %s127 = scalar_select %p124, %s125, %s126
      %p130 = pneg %p124
      %p131 = scmp.eq.s32.totalorder %s26, 7
      %p132 = por %p130, %p131
      %p133 = scmp.ne.s32.totalorder %s125, %s128
      %p134 = scmp.eq.s32.totalorder %s26, 0
      %p135 = por %p133, %p134
      %p136 = scmp.ne.s32.totalorder %s125, %s128
      %p137 = scmp.eq.s32.totalorder %s31, 7
      %p138 = por %p136, %p137
      %p139 = scmp.ne.s32.totalorder %s128, %s129
      %p140 = scmp.eq.s32.totalorder %s31, 0
      %p141 = por %p139, %p140
      %p142 = scmp.ne.s32.totalorder %s128, %s129
      %p143 = scmp.eq.s32.totalorder %s32, 7
      %p144 = por %p142, %p143
      %p146 = scmp.ne.s32.totalorder %s129, %s145
      %p147 = scmp.eq.s32.totalorder %s32, 0
      %p148 = por %p146, %p147
      %s149 = ssub.s32 %s35, %s44
      %p150 = scmp.eq.s32.totalorder %s149, 0
      %s152 = sadd.s32 %s151, 1
      %s153 = scalar_select %p150, %s151, %s152
      %p156 = pneg %p150
      %p157 = scmp.eq.s32.totalorder %s26, 7
      %p158 = por %p156, %p157
      %p159 = scmp.ne.s32.totalorder %s151, %s154
      %p160 = scmp.eq.s32.totalorder %s26, 0
      %p161 = por %p159, %p160
      %p162 = scmp.ne.s32.totalorder %s151, %s154
      %p163 = scmp.eq.s32.totalorder %s31, 7
      %p164 = por %p162, %p163
      %p165 = scmp.ne.s32.totalorder %s154, %s155
      %p166 = scmp.eq.s32.totalorder %s31, 0
      %p167 = por %p165, %p166
      %p168 = scmp.ne.s32.totalorder %s154, %s155
      %p169 = scmp.eq.s32.totalorder %s32, 7
      %p170 = por %p168, %p169
      %p172 = scmp.ne.s32.totalorder %s155, %s171
      %p173 = scmp.eq.s32.totalorder %s32, 0
      %p174 = por %p172, %p173
      %s175 = ssub.s32 %s35, %s44
      %p176 = scmp.eq.s32.totalorder %s175, 0
      %s178 = sadd.s32 %s177, 1
      %s179 = scalar_select %p176, %s177, %s178
      %p182 = pneg %p176
      %p183 = scmp.eq.s32.totalorder %s26, 7
      %p184 = por %p182, %p183
      %p185 = scmp.ne.s32.totalorder %s177, %s180
      %p186 = scmp.eq.s32.totalorder %s26, 0
      %p187 = por %p185, %p186
      %p188 = scmp.ne.s32.totalorder %s177, %s180
      %p189 = scmp.eq.s32.totalorder %s31, 7
      %p190 = por %p188, %p189
      %p191 = scmp.ne.s32.totalorder %s180, %s181
      %p192 = scmp.eq.s32.totalorder %s31, 0
      %p193 = por %p191, %p192
      %p194 = scmp.ne.s32.totalorder %s180, %s181
      %p195 = scmp.eq.s32.totalorder %s32, 7
      %p196 = por %p194, %p195
      %p198 = scmp.ne.s32.totalorder %s181, %s197
      %p199 = scmp.eq.s32.totalorder %s32, 0
      %p200 = por %p198, %p199
      %s202 = sadd.s32 %s201, 1
      %p205 = scmp.eq.s32.totalorder %s26, 7
      %p206 = scmp.ne.s32.totalorder %s201, %s203
      %p207 = scmp.eq.s32.totalorder %s26, 0
      %p208 = por %p206, %p207
      %p209 = scmp.ne.s32.totalorder %s201, %s203
      %p210 = scmp.eq.s32.totalorder %s31, 7
      %p211 = por %p209, %p210
      %p212 = scmp.ne.s32.totalorder %s203, %s204
      %p213 = scmp.eq.s32.totalorder %s31, 0
      %p214 = por %p212, %p213
      %p215 = scmp.ne.s32.totalorder %s203, %s204
      %p216 = scmp.eq.s32.totalorder %s32, 7
      %p217 = por %p215, %p216
      %p219 = scmp.ne.s32.totalorder %s204, %s218
      %p220 = scmp.eq.s32.totalorder %s32, 0
      %p221 = por %p219, %p220
      %s222 = ssub.s32 %s33, %s52
      %s223 = ssub.s32 %s34, %s48
      %s224 = sor.u32 %s222, %s223
      %p225 = scmp.eq.s32.totalorder %s224, 0
      %s227 = sadd.s32 %s226, 1
      %s228 = scalar_select %p225, %s226, %s227
      %p231 = pneg %p225
      %p232 = scmp.eq.s32.totalorder %s26, 7
      %p233 = por %p231, %p232
      %p234 = scmp.ne.s32.totalorder %s226, %s229
      %p235 = scmp.eq.s32.totalorder %s26, 0
      %p236 = por %p234, %p235
      %p237 = scmp.ne.s32.totalorder %s226, %s229
      %p238 = scmp.eq.s32.totalorder %s31, 7
      %p239 = por %p237, %p238
      %p240 = scmp.ne.s32.totalorder %s229, %s230
      %p241 = scmp.eq.s32.totalorder %s31, 0
      %p242 = por %p240, %p241
      %p243 = scmp.ne.s32.totalorder %s229, %s230
      %p244 = scmp.eq.s32.totalorder %s32, 7
      %p245 = por %p243, %p244
      %p247 = scmp.ne.s32.totalorder %s230, %s246
      %p248 = scmp.eq.s32.totalorder %s32, 0
      %p249 = por %p247, %p248
      %s250 = ssub.s32 %s33, %s52
      %s251 = ssub.s32 %s34, %s48
      %s252 = sor.u32 %s250, %s251
      %p253 = scmp.eq.s32.totalorder %s252, 0
      %s255 = sadd.s32 %s254, 1
      %s256 = scalar_select %p253, %s254, %s255
      %p259 = pneg %p253
      %p260 = scmp.eq.s32.totalorder %s26, 7
      %p261 = por %p259, %p260
      %p262 = scmp.ne.s32.totalorder %s254, %s257
      %p263 = scmp.eq.s32.totalorder %s26, 0
      %p264 = por %p262, %p263
      %p265 = scmp.ne.s32.totalorder %s254, %s257
      %p266 = scmp.eq.s32.totalorder %s31, 7
      %p267 = por %p265, %p266
      %p268 = scmp.ne.s32.totalorder %s257, %s258
      %p269 = scmp.eq.s32.totalorder %s31, 0
      %p270 = por %p268, %p269
      %p271 = scmp.ne.s32.totalorder %s257, %s258
      %p272 = scmp.eq.s32.totalorder %s32, 7
      %p273 = por %p271, %p272
      %p275 = scmp.ne.s32.totalorder %s258, %s274
      %p276 = scmp.eq.s32.totalorder %s32, 0
      %p277 = por %p275, %p276
      %s278 = ssub.s32 %s33, %s52
      %s279 = ssub.s32 %s34, %s48
      %s280 = sor.u32 %s278, %s279
      %p281 = scmp.eq.s32.totalorder %s280, 0
      %s283 = sadd.s32 %s282, 1
      %s284 = scalar_select %p281, %s282, %s283
      %p287 = pneg %p281
      %p288 = scmp.eq.s32.totalorder %s26, 7
      %p289 = por %p287, %p288
      %p290 = scmp.ne.s32.totalorder %s282, %s285
      %p291 = scmp.eq.s32.totalorder %s26, 0
      %p292 = por %p290, %p291
      %p293 = scmp.ne.s32.totalorder %s282, %s285
      %p294 = scmp.eq.s32.totalorder %s31, 7
      %p295 = por %p293, %p294
      %p296 = scmp.ne.s32.totalorder %s285, %s286
      %p297 = scmp.eq.s32.totalorder %s31, 0
      %p298 = por %p296, %p297
      %p299 = scmp.ne.s32.totalorder %s285, %s286
      %p300 = scmp.eq.s32.totalorder %s32, 7
      %p301 = por %p299, %p300
      %p303 = scmp.ne.s32.totalorder %s286, %s302
      %p304 = scmp.eq.s32.totalorder %s32, 0
      %p305 = por %p303, %p304
      %s306 = ssub.s32 %s33, %s52
      %s307 = ssub.s32 %s34, %s48
      %s308 = sor.u32 %s306, %s307
      %p309 = scmp.eq.s32.totalorder %s308, 0
      %s311 = sadd.s32 %s310, 1
      %s312 = scalar_select %p309, %s310, %s311
      %p315 = pneg %p309
      %p316 = scmp.eq.s32.totalorder %s26, 7
      %p317 = por %p315, %p316
      %p318 = scmp.ne.s32.totalorder %s310, %s313
      %p319 = scmp.eq.s32.totalorder %s26, 0
      %p320 = por %p318, %p319
      %p321 = scmp.ne.s32.totalorder %s310, %s313
      %p322 = scmp.eq.s32.totalorder %s31, 7
      %p323 = por %p321, %p322
      %p324 = scmp.ne.s32.totalorder %s313, %s314
      %p325 = scmp.eq.s32.totalorder %s31, 0
      %p326 = por %p324, %p325
      %p327 = scmp.ne.s32.totalorder %s313, %s314
      %p328 = scmp.eq.s32.totalorder %s32, 7
      %p329 = por %p327, %p328
      %p331 = scmp.ne.s32.totalorder %s314, %s330
      %p332 = scmp.eq.s32.totalorder %s32, 0
      %p333 = por %p331, %p332
      %p334 = scmp.le.s32.totalorder 1, %s26
      %p335 = scmp.lt.s32.totalorder %s26, 9
      %p336 = pnand %p334, %p335
      %p337 = pneg %p336
      // Predicated region
      $region9: #{tpu_custom_call.1} parent=5 // pred_check
        _
      $region10: #{tpu_custom_call.1} parent=5 // pred_check_branch
        %339 = sbr.rel (%p336) target = $region12
      $region11: #{tpu_custom_call.1} parent=5 // pred_region
        %s340 = ssub.s32 %s26, 1
        // Predicated region
        $region13: #{tpu_custom_call.1} parent=11 // pred_check
          %p341 = pneg %p94
        $region14: #{tpu_custom_call.1} parent=11 // pred_check_branch
          %343 = sbr.rel (%p341) target = $region16
        $region15: #{tpu_custom_call.1} parent=11 // pred_region
          _
        $region16: #{tpu_custom_call.1} parent=11 // pred_fallthru
          _
        // Predicated region
        $region17: #{tpu_custom_call.1} parent=11 // pred_check
          %p344 = pneg %p115
        $region18: #{tpu_custom_call.1} parent=11 // pred_check_branch
          %346 = sbr.rel (%p344) target = $region20
        $region19: #{tpu_custom_call.1} parent=11 // pred_region
          _
        $region20: #{tpu_custom_call.1} parent=11 // pred_fallthru
          _
        // Predicated region
        $region21: #{tpu_custom_call.1} parent=11 // pred_check
          %p347 = pneg %p214
        $region22: #{tpu_custom_call.1} parent=11 // pred_check_branch
          %349 = sbr.rel (%p347) target = $region24
        $region23: #{tpu_custom_call.1} parent=11 // pred_region
          _
        $region24: #{tpu_custom_call.1} parent=11 // pred_fallthru
          _
      $region12: #{tpu_custom_call.1} parent=5 // pred_fallthru
        _
      %p350 = scmp.lt.s32.totalorder %s26, 8
      // Predicated region
      $region25: #{tpu_custom_call.1} parent=5 // pred_check
        %p351 = pneg %p350
      $region26: #{tpu_custom_call.1} parent=5 // pred_check_branch
        %353 = sbr.rel (%p351) target = $region28
      $region27: #{tpu_custom_call.1} parent=5 // pred_region
        // Predicated region
        $region29: #{tpu_custom_call.1} parent=27 // pred_check
          %p354 = pneg %p67
        $region30: #{tpu_custom_call.1} parent=27 // pred_check_branch
          %356 = sbr.rel (%p354) target = $region32
        $region31: #{tpu_custom_call.1} parent=27 // pred_region
          %p357 = scmp.lt.s32.totalorder %s33, 1
          %s358 = scalar_select %p357, %s33, 1
          %p359 = scmp.lt.s32.totalorder %s34, 1
          %s360 = scalar_select %p359, %s34, 1
          %s361 = smul.addr %s358, 2
          %s362 = sadd.s32 %s360, %s361
          %s363 = smul.addr %s362, 4
          %s364 = scalar_lea.vmem %s0, %s363
        $region32: #{tpu_custom_call.1} parent=27 // pred_fallthru
          _
        // Predicated region
        $region33: #{tpu_custom_call.1} parent=27 // pred_check
          %p365 = pneg %p135
        $region34: #{tpu_custom_call.1} parent=27 // pred_check_branch
          %367 = sbr.rel (%p365) target = $region36
        $region35: #{tpu_custom_call.1} parent=27 // pred_region
          %s368 = smul.u32 16, %s35
          %p369 = scmp.lt.s32.totalorder %s368, 31
          %s370 = scalar_select %p369, %s368, 31
          %s371 = smul.addr %s370, 8
          %s372 = scalar_lea.vmem %s3, %s371
          %s373 = smul.u32 16, %s35
        $region36: #{tpu_custom_call.1} parent=27 // pred_fallthru
          _
        // Predicated region
        $region37: #{tpu_custom_call.1} parent=27 // pred_check
          %p374 = pneg %p161
        $region38: #{tpu_custom_call.1} parent=27 // pred_check_branch
          %376 = sbr.rel (%p374) target = $region40
        $region39: #{tpu_custom_call.1} parent=27 // pred_region
          %s377 = smul.u32 16, %s35
          %p378 = scmp.lt.s32.totalorder %s377, 31
          %s379 = scalar_select %p378, %s377, 31
          %s380 = smul.addr %s379, 8
          %s381 = scalar_lea.vmem %s4, %s380
          %s382 = smul.u32 16, %s35
        $region40: #{tpu_custom_call.1} parent=27 // pred_fallthru
          _
        // Predicated region
        $region41: #{tpu_custom_call.1} parent=27 // pred_check
          %p383 = pneg %p187
        $region42: #{tpu_custom_call.1} parent=27 // pred_check_branch
          %385 = sbr.rel (%p383) target = $region44
        $region43: #{tpu_custom_call.1} parent=27 // pred_region
          %s386 = sand.u32 %s177, 1
          %s387 = sand.u32 %s177, 1
          %s388 = smul.addr %s387, 40
          %s389 = scalar_lea.vmem [#allocation5], %s388
          %s390 = smul.addr %s35, 8
          %s391 = scalar_lea.vmem %s5, %s390
          // Predicated region
          $region45: #{tpu_custom_call.1} parent=43 // pred_check
            _
          $region46: #{tpu_custom_call.1} parent=43 // pred_check_branch
            %393 = sbr.rel (0) target = $region48
          $region47: #{tpu_custom_call.1} parent=43 // pred_region
            // Predicated region
            $region49: #{tpu_custom_call.1} parent=47 // pred_check
              _
            $region50: #{tpu_custom_call.1} parent=47 // pred_check_branch
              %395 = sbr.rel (0) target = $region52
            $region51: #{tpu_custom_call.1} parent=47 // pred_region
              // Predicated region
              $region64: #{tpu_custom_call.1} parent=51 // pred_check
                _
              $region65: #{tpu_custom_call.1} parent=51 // pred_check_branch
                %419 = sbr.rel (0) target = $region67
              $region66: #{tpu_custom_call.1} parent=51 // pred_region
                loop: start=0, step=1, limit=1
                $region68: #{tpu_custom_call.1} parent=66 // loop_pre_header
                  _
                $region69: #{tpu_custom_call.1} parent=66 // loop_header
                  %s421 = sphi 0, %s425
                  %p422 = scmp.ge.s32.totalorder %s421, 1
                  %s426 = sphi %s391, %s391
                  %s427 = sphi %s389, %s389
                $region70: #{tpu_custom_call.1} parent=66 // loop_header_branch
                  %424 = sbr.rel (%p422) target = $region74
                $region71: #{tpu_custom_call.1} parent=66 // loop_body
                  %v428 = vld [vmem:[%s426] sm:$0xff]
                  %429 = vst [vmem:[%s427] sm:$0xff] %v428
                  %v430 = vld [vmem:[%s426 + $0x10] sm:$0xff]
                  %431 = vst [vmem:[%s427 + $0x8] sm:$0xff] %v430
                  %v432 = vld [vmem:[%s426 + $0x20] sm:$0xff]
                  %433 = vst [vmem:[%s427 + $0x10] sm:$0xff] %v432
                  %v434 = vld [vmem:[%s426 + $0x30] sm:$0xff]
                  %435 = vst [vmem:[%s427 + $0x18] sm:$0xff] %v434
                  %v436 = vld [vmem:[%s426 + $0x40] sm:$0xff]
                  %437 = vst [vmem:[%s427 + $0x20] sm:$0xff] %v436
                $region72: #{tpu_custom_call.1} parent=66 // loop_footer
                  %s425 = sadd.s32 1, %s421
                $region73: #{tpu_custom_call.1} parent=66 // loop_footer_branch
                  %420 = sbr.rel target = $region69
                $region74: #{tpu_custom_call.1} parent=66 // loop_exit
                  _
              $region67: #{tpu_custom_call.1} parent=51 // pred_fallthru
                _
              // Predicated region
              $region75: #{tpu_custom_call.1} parent=51 // pred_check
                _
              $region76: #{tpu_custom_call.1} parent=51 // pred_check_branch
                %439 = sbr.rel target = $region78
              $region77: #{tpu_custom_call.1} parent=51 // pred_region
                _
              $region78: #{tpu_custom_call.1} parent=51 // pred_fallthru
                _
            $region52: #{tpu_custom_call.1} parent=47 // pred_fallthru
              _
            // Predicated region
            $region53: #{tpu_custom_call.1} parent=47 // pred_check
              _
            $region54: #{tpu_custom_call.1} parent=47 // pred_check_branch
              %397 = sbr.rel target = $region56
            $region55: #{tpu_custom_call.1} parent=47 // pred_region
              %s399 = ssub.s32 256, 1
              loop: start=0, step=1, limit=1
              $region57: #{tpu_custom_call.1} parent=55 // loop_pre_header
                _
              $region58: #{tpu_custom_call.1} parent=55 // loop_header
                %s401 = sphi 0, %s405
                %p402 = scmp.ge.s32.totalorder %s401, 1
                %s406 = sphi %s391, %s391
                %s407 = sphi %s389, %s389
              $region59: #{tpu_custom_call.1} parent=55 // loop_header_branch
                %404 = sbr.rel (%p402) target = $region63
              $region60: #{tpu_custom_call.1} parent=55 // loop_body
                %v408 = vld [vmem:[%s406] sm:%s399]
                %409 = vst [vmem:[%s407] sm:%s399] %v408
                %v410 = vld [vmem:[%s406 + $0x10] sm:%s399]
                %411 = vst [vmem:[%s407 + $0x8] sm:%s399] %v410
                %v412 = vld [vmem:[%s406 + $0x20] sm:%s399]
                %413 = vst [vmem:[%s407 + $0x10] sm:%s399] %v412
                %v414 = vld [vmem:[%s406 + $0x30] sm:%s399]
                %415 = vst [vmem:[%s407 + $0x18] sm:%s399] %v414
                %v416 = vld [vmem:[%s406 + $0x40] sm:%s399]
                %417 = vst [vmem:[%s407 + $0x20] sm:%s399] %v416
              $region61: #{tpu_custom_call.1} parent=55 // loop_footer
                %s405 = sadd.s32 1, %s401
              $region62: #{tpu_custom_call.1} parent=55 // loop_footer_branch
                %400 = sbr.rel target = $region58
              $region63: #{tpu_custom_call.1} parent=55 // loop_exit
                _
            $region56: #{tpu_custom_call.1} parent=47 // pred_fallthru
              _
          $region48: #{tpu_custom_call.1} parent=43 // pred_fallthru
            _
          %440 = vnop
        $region44: #{tpu_custom_call.1} parent=27 // pred_fallthru
          _
      $region28: #{tpu_custom_call.1} parent=5 // pred_fallthru
        _
      %p441 = scmp.le.s32.totalorder 1, %s26
      %p442 = scmp.lt.s32.totalorder %s26, 9
      %p443 = pnand %p441, %p442
      %p444 = pneg %p443
      // Predicated region
      $region79: #{tpu_custom_call.1} parent=5 // pred_check
        _
      $region80: #{tpu_custom_call.1} parent=5 // pred_check_branch
        %446 = sbr.rel (%p443) target = $region82
      $region81: #{tpu_custom_call.1} parent=5 // pred_region
        %s447 = ssub.s32 %s26, 1
        %s448 = sand.u32 %s180, 1
        %s449 = sand.u32 %s180, 1
        %s450 = smul.addr %s449, 40
        %s451 = scalar_lea.vmem [#allocation5], %s450
        // Predicated region
        $region83: #{tpu_custom_call.1} parent=81 // pred_check
          %p452 = pneg %p193
        $region84: #{tpu_custom_call.1} parent=81 // pred_check_branch
          %454 = sbr.rel (%p452) target = $region86
        $region85: #{tpu_custom_call.1} parent=81 // pred_region
          _
        $region86: #{tpu_custom_call.1} parent=81 // pred_fallthru
          _
        %p455 = scmp.lt.s32.totalorder %s36, 1
        %s456 = scalar_select %p455, %s36, 1
        %p457 = scmp.lt.s32.totalorder %s37, 1
        %s458 = scalar_select %p457, %s37, 1
        %s459 = smul.addr %s456, 2
        %s460 = sadd.s32 %s458, %s459
        %s461 = smul.addr %s460, 4
        %s462 = scalar_lea.vmem %s0, %s461
        %p463 = pneg %p73
        %p464 = pneg %p70
        %p465 = pneg %p94
        %p466 = pneg %p91
        %p467 = pneg %p115
        %p468 = pneg %p112
        %s469 = smul.u32 16, %s38
        %p470 = scmp.lt.s32.totalorder %s469, 31
        %s471 = scalar_select %p470, %s469, 31
        %s472 = smul.addr %s471, 8
        %s473 = scalar_lea.vmem %s3, %s472
        %p474 = pneg %p141
        %p475 = pneg %p138
        %s476 = smul.u32 16, %s38
        %p477 = scmp.lt.s32.totalorder %s476, 31
        %s478 = scalar_select %p477, %s476, 31
        %s479 = smul.addr %s478, 8
        %s480 = scalar_lea.vmem %s4, %s479
        %p481 = pneg %p167
        %p482 = pneg %p164
        %s483 = sand.u32 %s180, 1
        %s484 = sand.u32 %s180, 1
        %s485 = smul.addr %s484, 40
        %s486 = scalar_lea.vmem [#allocation5], %s485
        %p487 = pneg %p193
        %p488 = pneg %p190
        %p489 = pneg %p214
        %p490 = pneg %p211
        %p491 = pneg %p242
        %p492 = pneg %p239
        %s493 = sand.u32 %s229, 1
        %s494 = scalar_lea.sflag [#allocation7], %s493
        %s495 = sand.u32 %s229, 1
        %s496 = smul.addr %s495, 32
        %s497 = scalar_lea.vmem [#allocation6], %s496
        %p498 = pneg %p270
        %p499 = pneg %p267
        %s500 = sand.u32 %s31, 1
        %s501 = scalar_lea.sflag [#allocation9], %s500
        %s502 = sand.u32 %s257, 1
        %s503 = smul.addr %s502, 32
        %s504 = scalar_lea.vmem [#allocation8], %s503
        %p505 = pneg %p298
        %p506 = pneg %p295
        %s507 = sand.u32 %s31, 1
        %s508 = scalar_lea.sflag [#allocation9], %s507
        %s509 = sand.u32 %s285, 1
        %s510 = smul.addr %s509, 4
        %s511 = scalar_lea.vmem [#allocation10], %s510
        %p512 = pneg %p326
        %p513 = pneg %p323
        %s514 = sand.u32 %s313, 1
        %s515 = scalar_lea.sflag [#allocation12], %s514
        %s516 = sand.u32 %s313, 1
        %s517 = scalar_lea.vmem [#allocation11], %s516
        %p518 = scmp.lt.s32.totalorder %s36, 1
        %s519 = scalar_select %p518, %s36, 1
        %p520 = scmp.lt.s32.totalorder %s37, 1
        %s521 = scalar_select %p520, %s37, 1
        %s522 = smul.addr %s519, 2
        %s523 = sadd.s32 %s521, %s522
        %s524 = smul.addr %s523, 4
        %s525 = scalar_lea.vmem %s0, %s524
        %s526 = smul.u32 16, %s38
        %p527 = scmp.lt.s32.totalorder %s526, 31
        %s528 = scalar_select %p527, %s526, 31
        %s529 = smul.addr %s528, 8
        %s530 = scalar_lea.vmem %s3, %s529
        %s531 = smul.u32 16, %s38
        %s532 = smul.u32 16, %s38
        %p533 = scmp.lt.s32.totalorder %s532, 31
        %s534 = scalar_select %p533, %s532, 31
        %s535 = smul.addr %s534, 8
        %s536 = scalar_lea.vmem %s4, %s535
        %s537 = smul.u32 16, %s38
        %v538 = vld [vmem:[%s525] sm:$0xf]
        %p539 = scmp.eq.s32.totalorder %s38, 0
        // Predicated region
        $region87: #{tpu_custom_call.1} parent=81 // pred_check
          %p540 = pneg %p539
        $region88: #{tpu_custom_call.1} parent=81 // pred_check_branch
          %542 = sbr.rel (%p540) target = $region90
        $region89: #{tpu_custom_call.1} parent=81 // pred_region
          %543 = vst [vmem:[#allocation2] sm:$0x1] inf
          %544 = vst [vmem:[#allocation3] sm:$0x1] 0
          %545 = vst [vmem:[#allocation4] sm:$0xff] 0.0
          %546 = vst [vmem:[#allocation4 + $0x8] sm:$0xff] 0.0
          %547 = vst [vmem:[#allocation4 + $0x10] sm:$0xff] 0.0
          %548 = vst [vmem:[#allocation4 + $0x18] sm:$0xff] 0.0
          %549 = vst [vmem:[#allocation4 + $0x20] sm:$0xf] 0.0
        $region90: #{tpu_custom_call.1} parent=81 // pred_fallthru
          _
        %v550 = vld [vmem:[%s530] sm:$0xff]
        %v551 = vld [vmem:[%s530 + $0x8] sm:$0xff]
        %v552 = vld [vmem:[%s530 + $0x10] sm:$0xff]
        %v553 = vld [vmem:[%s530 + $0x18] sm:$0xff]
        %v554 = vld [vmem:[%s530 + $0x20] sm:$0xff]
        %v555 = vld [vmem:[%s530 + $0x28] sm:$0xff]
        %v556 = vld [vmem:[%s530 + $0x30] sm:$0xff]
        %v557 = vld [vmem:[%s530 + $0x38] sm:$0xff]
        %v558 = vld [vmem:[%s530 + $0x40] sm:$0xff]
        %v559 = vld [vmem:[%s530 + $0x48] sm:$0xff]
        %v560 = vld [vmem:[%s530 + $0x50] sm:$0xff]
        %v561 = vld [vmem:[%s530 + $0x58] sm:$0xff]
        %v562 = vld [vmem:[%s530 + $0x60] sm:$0xff]
        %v563 = vld [vmem:[%s530 + $0x68] sm:$0xff]
        %v564 = vld [vmem:[%s530 + $0x70] sm:$0xff]
        %v565 = vld [vmem:[%s530 + $0x78] sm:$0xff]
        %v566 = vld [vmem:[%s536] sm:$0xff]
        %v567 = vld [vmem:[%s536 + $0x8] sm:$0xff]
        %v568 = vld [vmem:[%s536 + $0x10] sm:$0xff]
        %v569 = vld [vmem:[%s536 + $0x18] sm:$0xff]
        %v570 = vld [vmem:[%s536 + $0x20] sm:$0xff]
        %v571 = vld [vmem:[%s536 + $0x28] sm:$0xff]
        %v572 = vld [vmem:[%s536 + $0x30] sm:$0xff]
        %v573 = vld [vmem:[%s536 + $0x38] sm:$0xff]
        %v574 = vld [vmem:[%s536 + $0x40] sm:$0xff]
        %v575 = vld [vmem:[%s536 + $0x48] sm:$0xff]
        %v576 = vld [vmem:[%s536 + $0x50] sm:$0xff]
        %v577 = vld [vmem:[%s536 + $0x58] sm:$0xff]
        %v578 = vld [vmem:[%s536 + $0x60] sm:$0xff]
        %v579 = vld [vmem:[%s536 + $0x68] sm:$0xff]
        %v580 = vld [vmem:[%s536 + $0x70] sm:$0xff]
        %v581 = vld [vmem:[%s536 + $0x78] sm:$0xff]
        %vm582 = vcmask 31744
        %v584 = vsel %vm582, %v550, 0
        %v587 = vsel %vm582, %v551, 0
        %v590 = vsel %vm582, %v552, 0
        %v593 = vsel %vm582, %v553, 0
        %v596 = vsel %vm582, %v554, 0
        %v599 = vsel %vm582, %v555, 0
        %v602 = vsel %vm582, %v556, 0
        %v605 = vsel %vm582, %v557, 0
        %v608 = vsel %vm582, %v558, 0
        %v611 = vsel %vm582, %v559, 0
        %v614 = vsel %vm582, %v560, 0
        %v617 = vsel %vm582, %v561, 0
        %v620 = vsel %vm582, %v562, 0
        %v623 = vsel %vm582, %v563, 0
        %v626 = vsel %vm582, %v564, 0
        %v629 = vsel %vm582, %v565, 0
        %vm631 = vcmask 1043456
        %v633 = vsel %vm631, %v538, 0
        %635 = vmatpush.msra.mxu0 0.0
        %636 = vmatpush.msra.mxu0 0.0
        %637 = vmatpush.msra.mxu0 0.0
        %638 = vmatpush.msra.mxu0 0.0
        %639 = vmatpush.msra.mxu0 0.0
        %640 = vmatpush.msra.mxu0 0.0
        %641 = vmatpush.msra.mxu0 0.0
        %642 = vmatpush.msra.mxu0 0.0
        %643 = vmatpush.msra.mxu0 0.0
        %644 = vmatpush.msra.mxu0 0.0
        %645 = vmatpush.msra.mxu0 0.0
        %646 = vmatpush.msra.mxu0 0.0
        %647 = vmatpush.msra.mxu0 0.0
        %648 = vmatpush.msra.mxu0 0.0
        %649 = vmatpush.msra.mxu0 0.0
        %650 = vmatpush.msra.mxu0 %v633
        %651 = vmatmul.f32.gmra.mxu0 %v584
        %v652 = vpop.f32.mrf.mxu0
        %v653 = vadd.f32 0.0, %v652
        %654 = vmatmul.f32.gmra.mxu0 %v587
        %v655 = vpop.f32.mrf.mxu0
        %v656 = vadd.f32 0.0, %v655
        %657 = vmatmul.f32.gmra.mxu0 %v590
        %v658 = vpop.f32.mrf.mxu0
        %v659 = vadd.f32 0.0, %v658
        %660 = vmatmul.f32.gmra.mxu0 %v593
        %v661 = vpop.f32.mrf.mxu0
        %v662 = vadd.f32 0.0, %v661
        %663 = vmatmul.f32.gmra.mxu0 %v596
        %v664 = vpop.f32.mrf.mxu0
        %v665 = vadd.f32 0.0, %v664
        %666 = vmatmul.f32.gmra.mxu0 %v599
        %v667 = vpop.f32.mrf.mxu0
        %v668 = vadd.f32 0.0, %v667
        %669 = vmatmul.f32.gmra.mxu0 %v602
        %v670 = vpop.f32.mrf.mxu0
        %v671 = vadd.f32 0.0, %v670
        %672 = vmatmul.f32.gmra.mxu0 %v605
        %v673 = vpop.f32.mrf.mxu0
        %v674 = vadd.f32 0.0, %v673
        %675 = vmatmul.f32.gmra.mxu0 %v608
        %v676 = vpop.f32.mrf.mxu0
        %v677 = vadd.f32 0.0, %v676
        %678 = vmatmul.f32.gmra.mxu0 %v611
        %v679 = vpop.f32.mrf.mxu0
        %v680 = vadd.f32 0.0, %v679
        %681 = vmatmul.f32.gmra.mxu0 %v614
        %v682 = vpop.f32.mrf.mxu0
        %v683 = vadd.f32 0.0, %v682
        %684 = vmatmul.f32.gmra.mxu0 %v617
        %v685 = vpop.f32.mrf.mxu0
        %v686 = vadd.f32 0.0, %v685
        %687 = vmatmul.f32.gmra.mxu0 %v620
        %v688 = vpop.f32.mrf.mxu0
        %v689 = vadd.f32 0.0, %v688
        %690 = vmatmul.f32.gmra.mxu0 %v623
        %v691 = vpop.f32.mrf.mxu0
        %v692 = vadd.f32 0.0, %v691
        %693 = vmatmul.f32.gmra.mxu0 %v626
        %v694 = vpop.f32.mrf.mxu0
        %v695 = vadd.f32 0.0, %v694
        %696 = vmatmul.f32.gmra.mxu0 %v629
        %v697 = vpop.f32.mrf.mxu0
        %v698 = vadd.f32 0.0, %v697
        %699 = vdwg.mxu0
        %701 = vset.pattern.permute.xlu0 0
        %702 = vperm.xlu0 %701, %v566
        %v703 = vpop.permute.xlu0 %702
        %706 = vset.pattern.permute.xlu0 0
        %707 = vperm.xlu0 %706, %v567
        %v708 = vpop.permute.xlu0 %707
        %711 = vset.pattern.permute.xlu0 0
        %712 = vperm.xlu0 %711, %v568
        %v713 = vpop.permute.xlu0 %712
        %716 = vset.pattern.permute.xlu0 0
        %717 = vperm.xlu0 %716, %v569
        %v718 = vpop.permute.xlu0 %717
        %721 = vset.pattern.permute.xlu0 0
        %722 = vperm.xlu0 %721, %v570
        %v723 = vpop.permute.xlu0 %722
        %726 = vset.pattern.permute.xlu0 0
        %727 = vperm.xlu0 %726, %v571
        %v728 = vpop.permute.xlu0 %727
        %731 = vset.pattern.permute.xlu0 0
        %732 = vperm.xlu0 %731, %v572
        %v733 = vpop.permute.xlu0 %732
        %736 = vset.pattern.permute.xlu0 0
        %737 = vperm.xlu0 %736, %v573
        %v738 = vpop.permute.xlu0 %737
        %741 = vset.pattern.permute.xlu0 0
        %742 = vperm.xlu0 %741, %v574
        %v743 = vpop.permute.xlu0 %742
        %746 = vset.pattern.permute.xlu0 0
        %747 = vperm.xlu0 %746, %v575
        %v748 = vpop.permute.xlu0 %747
        %751 = vset.pattern.permute.xlu0 0
        %752 = vperm.xlu0 %751, %v576
        %v753 = vpop.permute.xlu0 %752
        %756 = vset.pattern.permute.xlu0 0
        %757 = vperm.xlu0 %756, %v577
        %v758 = vpop.permute.xlu0 %757
        %761 = vset.pattern.permute.xlu0 0
        %762 = vperm.xlu0 %761, %v578
        %v763 = vpop.permute.xlu0 %762
        %766 = vset.pattern.permute.xlu0 0
        %767 = vperm.xlu0 %766, %v579
        %v768 = vpop.permute.xlu0 %767
        %771 = vset.pattern.permute.xlu0 0
        %772 = vperm.xlu0 %771, %v580
        %v773 = vpop.permute.xlu0 %772
        %776 = vset.pattern.permute.xlu0 0
        %777 = vperm.xlu0 %776, %v581
        %v778 = vpop.permute.xlu0 %777
        %v780 = vadd.f32 %v703, %v653
        %v781 = vadd.f32 %v708, %v656
        %v782 = vadd.f32 %v713, %v659
        %v783 = vadd.f32 %v718, %v662
        %v784 = vadd.f32 %v723, %v665
        %v785 = vadd.f32 %v728, %v668
        %v786 = vadd.f32 %v733, %v671
        %v787 = vadd.f32 %v738, %v674
        %v788 = vadd.f32 %v743, %v677
        %v789 = vadd.f32 %v748, %v680
        %v790 = vadd.f32 %v753, %v683
        %v791 = vadd.f32 %v758, %v686
        %v792 = vadd.f32 %v763, %v689
        %v793 = vadd.f32 %v768, %v692
        %v794 = vadd.f32 %v773, %v695
        %v795 = vadd.f32 %v778, %v698
        %v796 = vlaneseq
        %v797 = vshrl.u32 %v796, 7
        %v798 = vadd.s32 %v797, 8
        %v799 = vadd.s32 %v797, 16
        %v800 = vadd.s32 %v797, 24
        %v801 = vadd.s32 %v797, 32
        %v802 = vadd.s32 %v797, 40
        %v803 = vadd.s32 %v797, 48
        %v804 = vadd.s32 %v797, 56
        %v805 = vadd.s32 %v797, 64
        %v806 = vadd.s32 %v797, 72
        %v807 = vadd.s32 %v797, 80
        %v808 = vadd.s32 %v797, 88
        %v809 = vadd.s32 %v797, 96
        %v810 = vadd.s32 %v797, 104
        %v811 = vadd.s32 %v797, 112
        %v812 = vadd.s32 %v797, 120
        %v813 = vmin.f32 %v780, %v784
        %v814 = vmin.f32 %v781, %v785
        %v815 = vmin.f32 %v782, %v786
        %v816 = vmin.f32 %v783, %v787
        %v817 = vmin.f32 %v813, %v788
        %v818 = vmin.f32 %v814, %v789
        %v819 = vmin.f32 %v815, %v790
        %v820 = vmin.f32 %v816, %v791
        %v821 = vmin.f32 %v817, %v792
        %v822 = vmin.f32 %v818, %v793
        %v823 = vmin.f32 %v819, %v794
        %v824 = vmin.f32 %v820, %v795
        %v825 = vmin.f32 %v821, %v822
        %v826 = vmin.f32 %v823, %v824
        %v827 = vmin.f32 %v825, %v826
        %v828 = vrot.slane %v827, 4
        %v829 = vmin.f32 %v827, %v828
        %v830 = vrot.slane %v829, 2
        %v831 = vmin.f32 %v829, %v830
        %v832 = vrot.slane %v831, 1
        %v833 = vmin.f32 %v831, %v832
        %vm834 = vcmp.eq.f32.partialorder %v780, %v833
        %vm835 = vcmp.eq.f32.partialorder %v781, %v833
        %vm836 = vcmp.eq.f32.partialorder %v782, %v833
        %vm837 = vcmp.eq.f32.partialorder %v783, %v833
        %vm838 = vcmp.eq.f32.partialorder %v784, %v833
        %vm839 = vcmp.eq.f32.partialorder %v785, %v833
        %vm840 = vcmp.eq.f32.partialorder %v786, %v833
        %vm841 = vcmp.eq.f32.partialorder %v787, %v833
        %vm842 = vcmp.eq.f32.partialorder %v788, %v833
        %vm843 = vcmp.eq.f32.partialorder %v789, %v833
        %vm844 = vcmp.eq.f32.partialorder %v790, %v833
        %vm845 = vcmp.eq.f32.partialorder %v791, %v833
        %vm846 = vcmp.eq.f32.partialorder %v792, %v833
        %vm847 = vcmp.eq.f32.partialorder %v793, %v833
        %vm848 = vcmp.eq.f32.partialorder %v794, %v833
        %vm849 = vcmp.eq.f32.partialorder %v795, %v833
        %v850 = vsel %vm834, %v797, 128
        %v851 = vsel %vm835, %v798, 128
        %v852 = vsel %vm836, %v799, 128
        %v853 = vsel %vm837, %v800, 128
        %v854 = vsel %vm838, %v801, 128
        %v855 = vsel %vm839, %v802, 128
        %v856 = vsel %vm840, %v803, 128
        %v857 = vsel %vm841, %v804, 128
        %v858 = vsel %vm842, %v805, 128
        %v859 = vsel %vm843, %v806, 128
        %v860 = vsel %vm844, %v807, 128
        %v861 = vsel %vm845, %v808, 128
        %v862 = vsel %vm846, %v809, 128
        %v863 = vsel %vm847, %v810, 128
        %v864 = vsel %vm848, %v811, 128
        %v865 = vsel %vm849, %v812, 128
        %vm866 = vcmp.lt.s32.totalorder %v850, %v854
        %v867 = vsel %vm866, %v850, %v854
        %vm868 = vcmp.lt.s32.totalorder %v851, %v855
        %v869 = vsel %vm868, %v851, %v855
        %vm870 = vcmp.lt.s32.totalorder %v852, %v856
        %v871 = vsel %vm870, %v852, %v856
        %vm872 = vcmp.lt.s32.totalorder %v853, %v857
        %v873 = vsel %vm872, %v853, %v857
        %vm874 = vcmp.lt.s32.totalorder %v867, %v858
        %v875 = vsel %vm874, %v867, %v858
        %vm876 = vcmp.lt.s32.totalorder %v869, %v859
        %v877 = vsel %vm876, %v869, %v859
        %vm878 = vcmp.lt.s32.totalorder %v871, %v860
        %v879 = vsel %vm878, %v871, %v860
        %vm880 = vcmp.lt.s32.totalorder %v873, %v861
        %v881 = vsel %vm880, %v873, %v861
        %vm882 = vcmp.lt.s32.totalorder %v875, %v862
        %v883 = vsel %vm882, %v875, %v862
        %vm884 = vcmp.lt.s32.totalorder %v877, %v863
        %v885 = vsel %vm884, %v877, %v863
        %vm886 = vcmp.lt.s32.totalorder %v879, %v864
        %v887 = vsel %vm886, %v879, %v864
        %vm888 = vcmp.lt.s32.totalorder %v881, %v865
        %v889 = vsel %vm888, %v881, %v865
        %vm890 = vcmp.lt.s32.totalorder %v883, %v885
        %v891 = vsel %vm890, %v883, %v885
        %vm892 = vcmp.lt.s32.totalorder %v887, %v889
        %v893 = vsel %vm892, %v887, %v889
        %vm894 = vcmp.lt.s32.totalorder %v891, %v893
        %v895 = vsel %vm894, %v891, %v893
        %v896 = vrot.slane %v895, 4
        %vm897 = vcmp.lt.s32.totalorder %v895, %v896
        %v898 = vsel %vm897, %v895, %v896
        %v899 = vrot.slane %v898, 2
        %vm900 = vcmp.lt.s32.totalorder %v898, %v899
        %v901 = vsel %vm900, %v898, %v899
        %v902 = vrot.slane %v901, 1
        %vm903 = vcmp.lt.s32.totalorder %v901, %v902
        %v904 = vsel %vm903, %v901, %v902
        %vm905 = vcmp.eq.s32.totalorder %v797, %v904
        %vm906 = vcmp.eq.s32.totalorder %v798, %v904
        %vm907 = vcmp.eq.s32.totalorder %v799, %v904
        %vm908 = vcmp.eq.s32.totalorder %v800, %v904
        %vm909 = vcmp.eq.s32.totalorder %v801, %v904
        %vm910 = vcmp.eq.s32.totalorder %v802, %v904
        %vm911 = vcmp.eq.s32.totalorder %v803, %v904
        %vm912 = vcmp.eq.s32.totalorder %v804, %v904
        %vm913 = vcmp.eq.s32.totalorder %v805, %v904
        %vm914 = vcmp.eq.s32.totalorder %v806, %v904
        %vm915 = vcmp.eq.s32.totalorder %v807, %v904
        %vm916 = vcmp.eq.s32.totalorder %v808, %v904
        %vm917 = vcmp.eq.s32.totalorder %v809, %v904
        %vm918 = vcmp.eq.s32.totalorder %v810, %v904
        %vm919 = vcmp.eq.s32.totalorder %v811, %v904
        %vm920 = vcmp.eq.s32.totalorder %v812, %v904
        %v921 = vsel %vm905, 1, 0
        %v922 = vsel %vm906, 1, 0
        %v923 = vsel %vm907, 1, 0
        %v924 = vsel %vm908, 1, 0
        %v925 = vsel %vm909, 1, 0
        %v926 = vsel %vm910, 1, 0
        %v927 = vsel %vm911, 1, 0
        %v928 = vsel %vm912, 1, 0
        %v929 = vsel %vm913, 1, 0
        %v930 = vsel %vm914, 1, 0
        %v931 = vsel %vm915, 1, 0
        %v932 = vsel %vm916, 1, 0
        %v933 = vsel %vm917, 1, 0
        %v934 = vsel %vm918, 1, 0
        %v935 = vsel %vm919, 1, 0
        %v936 = vsel %vm920, 1, 0
        %v937 = vcvt.s32.f32 %v921
        %v938 = vcvt.s32.f32 %v922
        %v939 = vcvt.s32.f32 %v923
        %v940 = vcvt.s32.f32 %v924
        %v941 = vcvt.s32.f32 %v925
        %v942 = vcvt.s32.f32 %v926
        %v943 = vcvt.s32.f32 %v927
        %v944 = vcvt.s32.f32 %v928
        %v945 = vcvt.s32.f32 %v929
        %v946 = vcvt.s32.f32 %v930
        %v947 = vcvt.s32.f32 %v931
        %v948 = vcvt.s32.f32 %v932
        %v949 = vcvt.s32.f32 %v933
        %v950 = vcvt.s32.f32 %v934
        %v951 = vcvt.s32.f32 %v935
        %v952 = vcvt.s32.f32 %v936
        %v953 = vld [vmem:[%s451] sm:$0xff]
        %v954 = vld [vmem:[%s451 + $0x8] sm:$0xff]
        %v955 = vld [vmem:[%s451 + $0x10] sm:$0xff]
        %v956 = vld [vmem:[%s451 + $0x18] sm:$0xff]
        %v957 = vld [vmem:[%s451 + $0x20] sm:$0xf]
        %958 = vmatpush.msra.mxu0 %v952
        %959 = vmatpush.msra.mxu0 %v951
        %960 = vmatpush.msra.mxu0 %v950
        %961 = vmatpush.msra.mxu0 %v949
        %962 = vmatpush.msra.mxu0 %v948
        %963 = vmatpush.msra.mxu0 %v947
        %964 = vmatpush.msra.mxu0 %v946
        %965 = vmatpush.msra.mxu0 %v945
        %966 = vmatpush.msra.mxu0 %v944
        %967 = vmatpush.msra.mxu0 %v943
        %968 = vmatpush.msra.mxu0 %v942
        %969 = vmatpush.msra.mxu0 %v941
        %970 = vmatpush.msra.mxu0 %v940
        %971 = vmatpush.msra.mxu0 %v939
        %972 = vmatpush.msra.mxu0 %v938
        %973 = vmatpush.msra.mxu0 %v937
        %974 = vmatmul.f32.gmra.mxu0 %v953
        %v975 = vpop.f32.mrf.mxu0
        %v976 = vadd.f32 0.0, %v975
        %977 = vmatmul.f32.gmra.mxu0 %v954
        %v978 = vpop.f32.mrf.mxu0
        %v979 = vadd.f32 0.0, %v978
        %980 = vmatmul.f32.gmra.mxu0 %v955
        %v981 = vpop.f32.mrf.mxu0
        %v982 = vadd.f32 0.0, %v981
        %983 = vmatmul.f32.gmra.mxu0 %v956
        %v984 = vpop.f32.mrf.mxu0
        %v985 = vadd.f32 0.0, %v984
        %986 = vmatmul.f32.gmra.mxu0 %v957
        %v987 = vpop.f32.mrf.mxu0
        %v988 = vadd.f32 0.0, %v987
        %989 = vdwg.mxu0
        %v990 = vld [vmem:[#allocation2] sm:$0x1]
        %vm991 = vcmp.lt.f32.partialorder %v833, %v990
        %v992 = vsel %vm991, %v833, %v990
        %993 = vst [vmem:[#allocation2] sm:$0x1] %v992
        %s994 = smul.u32 %s38, 128
        %v995 = vstv %s994
        %v996 = vadd.s32 %v904, %v995
        %v997 = vld [vmem:[#allocation3] sm:$0x1]
        %v998 = vsel %vm991, %v996, %v997
        %999 = vst [vmem:[#allocation3] sm:$0x1] %v998
        %v1000 = vld [vmem:[#allocation4] sm:$0xff]
        %v1001 = vld [vmem:[#allocation4 + $0x8] sm:$0xff]
        %v1002 = vld [vmem:[#allocation4 + $0x10] sm:$0xff]
        %v1003 = vld [vmem:[#allocation4 + $0x18] sm:$0xff]
        %v1004 = vld [vmem:[#allocation4 + $0x20] sm:$0xf]
        %v1005 = vsel %vm991, 1, 0
        %v1006 = vperm.slane %v1005, 0
        %vm1007 = vcmp.eq.s32.totalorder %v1006, 1
        %v1008 = vsel %vm1007, %v976, %v1000
        %v1009 = vsel %vm1007, %v979, %v1001
        %v1010 = vsel %vm1007, %v982, %v1002
        %v1011 = vsel %vm1007, %v985, %v1003
        %v1012 = vsel %vm1007, %v988, %v1004
        %1013 = vst [vmem:[#allocation4] sm:$0xff] %v1008
        %1014 = vst [vmem:[#allocation4 + $0x8] sm:$0xff] %v1009
        %1015 = vst [vmem:[#allocation4 + $0x10] sm:$0xff] %v1010
        %1016 = vst [vmem:[#allocation4 + $0x18] sm:$0xff] %v1011
        %1017 = vst [vmem:[#allocation4 + $0x20] sm:$0xf] %v1012
        %p1018 = scmp.eq.s32.totalorder %s38, 1
        // Predicated region
        $region91: #{tpu_custom_call.1} parent=81 // pred_check
          %p1019 = pneg %p1018
        $region92: #{tpu_custom_call.1} parent=81 // pred_check_branch
          %1021 = sbr.rel (%p1019) target = $region94
        $region93: #{tpu_custom_call.1} parent=81 // pred_region
          %v1022 = vld [vmem:[%s1] sm:$0xff]
          %v1023 = vld [vmem:[%s1 + $0x8] sm:$0xff]
          %v1024 = vld [vmem:[%s1 + $0x10] sm:$0xff]
          %v1025 = vld [vmem:[%s1 + $0x18] sm:$0xff]
          %v1026 = vld [vmem:[%s2] sm:$0xff]
          %v1027 = vld [vmem:[%s2 + $0x8] sm:$0xff]
          %v1028 = vld [vmem:[%s2 + $0x10] sm:$0xff]
          %v1029 = vld [vmem:[%s2 + $0x18] sm:$0xff]
          %1031 = vset.pattern.permute.xlu0 0
          %1032 = vperm.xlu0 %1031, %v1026
          %v1033 = vpop.permute.xlu0 %1032
          %1036 = vset.pattern.permute.xlu0 0
          %1037 = vperm.xlu0 %1036, %v1027
          %v1038 = vpop.permute.xlu0 %1037
          %1041 = vset.pattern.permute.xlu0 0
          %1042 = vperm.xlu0 %1041, %v1028
          %v1043 = vpop.permute.xlu0 %1042
          %1046 = vset.pattern.permute.xlu0 0
          %1047 = vperm.xlu0 %1046, %v1029
          %v1048 = vpop.permute.xlu0 %1047
          %v1051 = vsel %vm582, %v1022, 0
          %v1054 = vsel %vm582, %v1023, 0
          %v1057 = vsel %vm582, %v1024, 0
          %v1060 = vsel %vm582, %v1025, 0
          %1062 = vmatpush.msra.mxu0 0.0
          %1063 = vmatpush.msra.mxu0 0.0
          %1064 = vmatpush.msra.mxu0 0.0
          %1065 = vmatpush.msra.mxu0 0.0
          %1066 = vmatpush.msra.mxu0 0.0
          %1067 = vmatpush.msra.mxu0 0.0
          %1068 = vmatpush.msra.mxu0 0.0
          %1069 = vmatpush.msra.mxu0 0.0
          %1070 = vmatpush.msra.mxu0 0.0
          %1071 = vmatpush.msra.mxu0 0.0
          %1072 = vmatpush.msra.mxu0 0.0
          %1073 = vmatpush.msra.mxu0 0.0
          %1074 = vmatpush.msra.mxu0 0.0
          %1075 = vmatpush.msra.mxu0 0.0
          %1076 = vmatpush.msra.mxu0 0.0
          %1077 = vmatpush.msra.mxu0 %v633
          %1078 = vmatmul.f32.gmra.mxu0 %v1051
          %v1079 = vpop.f32.mrf.mxu0
          %v1080 = vadd.f32 %v1033, %v1079
          %1081 = vmatmul.f32.gmra.mxu0 %v1054
          %v1082 = vpop.f32.mrf.mxu0
          %v1083 = vadd.f32 %v1038, %v1082
          %1084 = vmatmul.f32.gmra.mxu0 %v1057
          %v1085 = vpop.f32.mrf.mxu0
          %v1086 = vadd.f32 %v1043, %v1085
          %1087 = vmatmul.f32.gmra.mxu0 %v1060
          %v1088 = vpop.f32.mrf.mxu0
          %v1089 = vadd.f32 %v1048, %v1088
          %1090 = vdwg.mxu0
          %1091 = vst [vmem:[%s497] sm:$0xff] %v1080
          %1092 = vst [vmem:[%s497 + $0x8] sm:$0xff] %v1083
          %1093 = vst [vmem:[%s497 + $0x10] sm:$0xff] %v1086
          %1094 = vst [vmem:[%s497 + $0x18] sm:$0xff] %v1089
          %v1095 = vld [vmem:[#allocation4] sm:$0xff]
          %v1096 = vld [vmem:[#allocation4 + $0x8] sm:$0xff]
          %v1097 = vld [vmem:[#allocation4 + $0x10] sm:$0xff]
          %v1098 = vld [vmem:[#allocation4 + $0x18] sm:$0xff]
          %1099 = vst [vmem:[%s504] sm:$0xff] %v1095
          %1100 = vst [vmem:[%s504 + $0x8] sm:$0xff] %v1096
          %1101 = vst [vmem:[%s504 + $0x10] sm:$0xff] %v1097
          %1102 = vst [vmem:[%s504 + $0x18] sm:$0xff] %v1098
          %v1103 = vld [vmem:[#allocation4 + $0x20] sm:$0xf]
          %v1104 = vld [vmem:[%s6] sm:$0xf]
          %1106 = vset.pattern.permute.xlu0 0
          %1107 = vperm.xlu0 %1106, %v1104
          %v1108 = vpop.permute.xlu0 %1107
          %v1110 = vadd.f32 %v1103, %v1108
          %1111 = vst [vmem:[%s511] sm:$0xf] %v1110
          %v1112 = vld [vmem:[#allocation3] sm:$0x1]
          %1113 = vst [vmem:[%s517] sm:$0x1] %v1112
        $region94: #{tpu_custom_call.1} parent=81 // pred_fallthru
          _
        %s1114 = sand.u32 %s229, 1
        %s1115 = scalar_lea.sflag [#allocation7], %s1114
        %s1116 = sand.u32 %s229, 1
        %s1117 = smul.addr %s1116, 32
        %s1118 = scalar_lea.vmem [#allocation6], %s1117
        %s1119 = sand.u32 %s31, 1
        %s1120 = scalar_lea.sflag [#allocation9], %s1119
        %s1121 = sand.u32 %s257, 1
        %s1122 = smul.addr %s1121, 32
        %s1123 = scalar_lea.vmem [#allocation8], %s1122
        %s1124 = sand.u32 %s31, 1
        %s1125 = scalar_lea.sflag [#allocation9], %s1124
        %s1126 = sand.u32 %s285, 1
        %s1127 = smul.addr %s1126, 4
        %s1128 = scalar_lea.vmem [#allocation10], %s1127
        %s1129 = sand.u32 %s313, 1
        %s1130 = scalar_lea.sflag [#allocation12], %s1129
        %s1131 = sand.u32 %s313, 1
        %s1132 = scalar_lea.vmem [#allocation11], %s1131
        // Predicated region
        $region95: #{tpu_custom_call.1} parent=81 // pred_check
          %p1133 = pneg %p239
        $region96: #{tpu_custom_call.1} parent=81 // pred_check_branch
          %1135 = sbr.rel (%p1133) target = $region98
        $region97: #{tpu_custom_call.1} parent=81 // pred_region
          %1137 = vsyncadd %s1115, 0
          %s1138 = smul.addr %s36, 8
          %s1139 = sadd.s32 %s37, %s1138
          %s1140 = smul.addr %s1139, 8
          %s1141 = scalar_lea.hbm %s7, %s1140
          %s1142 = sshll.u32 %s1118, 4
          %s1143 = int_to_ptr.vmem [resolvable:$true] %s1142
          %s1144 = sshll.u32 %s1141, 4
          %s1145 = int_to_ptr.hbm [resolvable:$true] %s1144
          %1150 = dma.vmem_to_hbm [thread:$0]  %s1143, 512, %s1145, %s1115, 128, 256, 8
        $region98: #{tpu_custom_call.1} parent=81 // pred_fallthru
          _
        // Predicated region
        $region99: #{tpu_custom_call.1} parent=81 // pred_check
          %p1151 = pneg %p267
        $region100: #{tpu_custom_call.1} parent=81 // pred_check_branch
          %1153 = sbr.rel (%p1151) target = $region102
        $region101: #{tpu_custom_call.1} parent=81 // pred_region
          %1155 = vsyncadd %s1120, 0
          %s1156 = smul.addr %s36, 8
          %s1157 = sadd.s32 %s37, %s1156
          %s1158 = smul.addr %s1157, 8
          %s1159 = scalar_lea.hbm %s8, %s1158
          %s1160 = sshll.u32 %s1123, 4
          %s1161 = int_to_ptr.vmem [resolvable:$true] %s1160
          %s1162 = sshll.u32 %s1159, 4
          %s1163 = int_to_ptr.hbm [resolvable:$true] %s1162
          %1168 = dma.vmem_to_hbm [thread:$0]  %s1161, 512, %s1163, %s1120, 128, 256, 8
        $region102: #{tpu_custom_call.1} parent=81 // pred_fallthru
          _
        // Predicated region
        $region103: #{tpu_custom_call.1} parent=81 // pred_check
          %p1169 = pneg %p295
        $region104: #{tpu_custom_call.1} parent=81 // pred_check_branch
          %1171 = sbr.rel (%p1169) target = $region106
        $region105: #{tpu_custom_call.1} parent=81 // pred_region
          %1173 = vsyncadd %s1125, 0
          %s1174 = smul.addr %s36, 2
          %s1175 = sadd.s32 %s37, %s1174
          %s1176 = smul.addr %s1175, 4
          %s1177 = scalar_lea.hbm %s9, %s1176
          %s1179 = sshll.u32 %s1128, 4
          %s1180 = int_to_ptr.vmem [resolvable:$true] %s1179
          %s1181 = sshll.u32 %s1177, 4
          %s1182 = int_to_ptr.hbm [resolvable:$true] %s1181
          %1184 = dma.vmem_to_hbm [thread:$0]  %s1180, 64, %s1182, %s1125
        $region106: #{tpu_custom_call.1} parent=81 // pred_fallthru
          _
        // Predicated region
        $region107: #{tpu_custom_call.1} parent=81 // pred_check
          %p1185 = pneg %p323
        $region108: #{tpu_custom_call.1} parent=81 // pred_check_branch
          %1187 = sbr.rel (%p1185) target = $region110
        $region109: #{tpu_custom_call.1} parent=81 // pred_region
          %1189 = vsyncadd %s1130, 0
          %s1190 = smul.addr %s36, 2
          %s1191 = sadd.s32 %s37, %s1190
          %s1192 = scalar_lea.hbm %s10, %s1191
          %s1194 = sshll.u32 %s1132, 4
          %s1195 = int_to_ptr.vmem [resolvable:$true] %s1194
          %s1196 = sshll.u32 %s1192, 4
          %s1197 = int_to_ptr.hbm [resolvable:$true] %s1196
          %1199 = dma.vmem_to_hbm [thread:$0]  %s1195, 16, %s1197, %s1130
        $region110: #{tpu_custom_call.1} parent=81 // pred_fallthru
          _
      $region82: #{tpu_custom_call.1} parent=5 // pred_fallthru
        _
      %p1200 = scmp.le.s32.totalorder 2, %s26
      // Predicated region
      $region111: #{tpu_custom_call.1} parent=5 // pred_check
        %p1201 = pneg %p1200
      $region112: #{tpu_custom_call.1} parent=5 // pred_check_branch
        %1203 = sbr.rel (%p1201) target = $region114
      $region113: #{tpu_custom_call.1} parent=5 // pred_region
        %s1204 = ssub.s32 %s26, 2
        // Predicated region
        $region115: #{tpu_custom_call.1} parent=113 // pred_check
          %p1205 = pneg %p245
        $region116: #{tpu_custom_call.1} parent=113 // pred_check_branch
          %1207 = sbr.rel (%p1205) target = $region118
        $region117: #{tpu_custom_call.1} parent=113 // pred_region
          %s1208 = sand.u32 %s230, 1
          %s1209 = scalar_lea.sflag [#allocation7], %s1208
          %s1210 = sand.u32 %s230, 1
          %s1211 = smul.addr %s1210, 32
          %s1212 = scalar_lea.vmem [#allocation6], %s1211
          %1214 = dma.done %s1209, 512
        $region118: #{tpu_custom_call.1} parent=113 // pred_fallthru
          _
        // Predicated region
        $region119: #{tpu_custom_call.1} parent=113 // pred_check
          %p1215 = pneg %p273
        $region120: #{tpu_custom_call.1} parent=113 // pred_check_branch
          %1217 = sbr.rel (%p1215) target = $region122
        $region121: #{tpu_custom_call.1} parent=113 // pred_region
          %s1218 = sand.u32 %s32, 1
          %s1219 = scalar_lea.sflag [#allocation9], %s1218
          %s1220 = sand.u32 %s258, 1
          %s1221 = smul.addr %s1220, 32
          %s1222 = scalar_lea.vmem [#allocation8], %s1221
          %1224 = dma.done %s1219, 512
        $region122: #{tpu_custom_call.1} parent=113 // pred_fallthru
          _
        // Predicated region
        $region123: #{tpu_custom_call.1} parent=113 // pred_check
          %p1225 = pneg %p301
        $region124: #{tpu_custom_call.1} parent=113 // pred_check_branch
          %1227 = sbr.rel (%p1225) target = $region126
        $region125: #{tpu_custom_call.1} parent=113 // pred_region
          %s1228 = sand.u32 %s32, 1
          %s1229 = scalar_lea.sflag [#allocation9], %s1228
          %s1230 = sand.u32 %s286, 1
          %s1231 = smul.addr %s1230, 4
          %s1232 = scalar_lea.vmem [#allocation10], %s1231
          %1234 = dma.done %s1229, 64
        $region126: #{tpu_custom_call.1} parent=113 // pred_fallthru
          _
        // Predicated region
        $region127: #{tpu_custom_call.1} parent=113 // pred_check
          %p1235 = pneg %p329
        $region128: #{tpu_custom_call.1} parent=113 // pred_check_branch
          %1237 = sbr.rel (%p1235) target = $region130
        $region129: #{tpu_custom_call.1} parent=113 // pred_region
          %s1238 = sand.u32 %s314, 1
          %s1239 = scalar_lea.sflag [#allocation12], %s1238
          %s1240 = sand.u32 %s314, 1
          %s1241 = scalar_lea.vmem [#allocation11], %s1240
          %1243 = dma.done %s1239, 16
        $region130: #{tpu_custom_call.1} parent=113 // pred_fallthru
          _
      $region114: #{tpu_custom_call.1} parent=5 // pred_fallthru
        _
    $region6: #{tpu_custom_call.1} parent=1 // loop_footer
      %s30 = sadd.s32 1, %s26
    $region7: #{tpu_custom_call.1} parent=1 // loop_footer_branch
      %25 = sbr.rel target = $region3
    $region8: #{tpu_custom_call.1} parent=1 // loop_exit
      _
    %1244 = vsyncpa [#allocation7], 1
    %s1245 = scalar_lea.sflag [#allocation7], 1
    %1246 = vsyncpa %s1245, 1
    %1247 = vsyncpa [#allocation9], 1
    %s1248 = scalar_lea.sflag [#allocation9], 1
    %1249 = vsyncpa %s1248, 1
    %1250 = vsyncpa [#allocation12], 1
    %s1251 = scalar_lea.sflag [#allocation12], 1
    %1252 = vsyncpa %s1251, 1

</llo_original>
